<compile_context>
chip_gen: v7x
topology: tpu7x:2x2x1
jax: 0.10.0
libtpu: 0.0.40
codegen_flags: <defaults>
</compile_context>

<pallas_src>
import functools

import jax
import jax.numpy as jnp
import numpy as np
from jax import lax
from jax.experimental import pallas as pl
from jax.experimental.pallas import tpu as pltpu


# ------------------------------ Pallas kernel ------------------------------- #

def _model_kernel(x_ref, wih1_ref, whh1f_ref, whh1b_ref, b1_ref,
                  wih2_ref, whh2f_ref, whh2b_ref, b2_ref,
                  wfc_ref, bfc_ref,
                  out_ref,
                  xp1_scr, h1_scr, xp2_scr):
    """Entire ActionRecognitionModel forward. Runs once (no grid)."""
    T, Bp, D = x_ref.shape
    H1 = whh1f_ref.shape[0]
    H2 = whh2f_ref.shape[0]
    G1 = 4 * H1
    G2 = 4 * H2

    def gate_math(g, c, H):
        i = jax.nn.sigmoid(g[:, 0:H])
        f = jax.nn.sigmoid(g[:, H:2 * H])
        gg = jnp.tanh(g[:, 2 * H:3 * H])
        o = jax.nn.sigmoid(g[:, 3 * H:4 * H])
        c_new = f * c + i * gg
        h_new = o * jnp.tanh(c_new)
        return h_new, c_new

    def lstm_step(pre, h, c, whh, H):
        g = pre + jnp.dot(h, whh, preferred_element_type=jnp.float32)
        return gate_math(g, c, H)

    # ----------------------------- layer 1 --------------------------------- #
    # Hoisted input projection for BOTH directions: one big MXU matmul.
    x_flat = x_ref[...].reshape(T * Bp, D)
    xp1 = (jnp.dot(x_flat, wih1_ref[...], preferred_element_type=jnp.float32)
           + b1_ref[...])
    xp1_scr[...] = xp1.reshape(T, Bp, 2 * G1)

    z1 = jnp.zeros((Bp, H1), jnp.float32)

    def l1_fwd(t, carry):
        h, c = carry
        h, c = lstm_step(xp1_scr[t, :, 0:G1], h, c, whh1f_ref[...], H1)
        h1_scr[t, :, 0:H1] = h
        return (h, c)

    _ = lax.fori_loop(0, T, l1_fwd, (z1, z1), unroll=True)

    def l1_bwd(s, carry):
        h, c = carry
        t = T - 1 - s
        h, c = lstm_step(xp1_scr[t, :, G1:2 * G1], h, c, whh1b_ref[...], H1)
        h1_scr[t, :, H1:2 * H1] = h
        return (h, c)

    _ = lax.fori_loop(0, T, l1_bwd, (z1, z1), unroll=True)

    # ----------------------------- layer 2 --------------------------------- #
    # Hoisted input projection over the full layer-1 sequence (both directions).
    h1_flat = h1_scr[...].reshape(T * Bp, 2 * H1)
    xp2 = (jnp.dot(h1_flat, wih2_ref[...], preferred_element_type=jnp.float32)
           + b2_ref[...])
    xp2_scr[...] = xp2.reshape(T, Bp, 2 * G2)

    z2 = jnp.zeros((Bp, H2), jnp.float32)

    def l2_fwd(t, carry):
        h, c = carry
        return lstm_step(xp2_scr[t, :, 0:G2], h, c, whh2f_ref[...], H2)

    h2f, _ = lax.fori_loop(0, T, l2_fwd, (z2, z2), unroll=True)

    # Only h2[:, -1, :] is consumed; the backward direction's value at t = T-1
    # is its FIRST step from zero state (h=c=0 -> no h@W_hh term needed).
    h2b, _ = gate_math(xp2_scr[T - 1, :, G2:2 * G2], z2, H2)

    # -------------------------- fused FC head ------------------------------ #
    # concat([h2f, h2b]) @ W_fc  ==  h2f @ W_fc[:H2] + h2b @ W_fc[H2:]
    out_ref[...] = (
        jnp.dot(h2f, wfc_ref[0:H2, :], preferred_element_type=jnp.float32)
        + jnp.dot(h2b, wfc_ref[H2:2 * H2, :], preferred_element_type=jnp.float32)
        + bfc_ref[...]
    )


# -------------------------------- wrapper ----------------------------------- #

@functools.partial(jax.jit, static_argnames=("num_classes",))
def action_recognition_forward(params, x_btd, *, num_classes):
    """x_btd: (B, T, input_size) float32 -> logits (B, num_classes)."""
    B, T, D = x_btd.shape
    Bp = max(8, ((B + 7) // 8) * 8)          # pad batch to f32 sublane count
    H1 = params["whh1_f"].shape[0]
    H2 = params["whh2_f"].shape[0]
    Cp = params["wfc_pad"].shape[1]          # classes padded to 128 lanes

    x = jnp.transpose(x_btd, (1, 0, 2))      # time-major (T, B, D)
    x = jnp.pad(x, ((0, 0), (0, Bp - B), (0, 0)))

    out_p = pl.pallas_call(
        _model_kernel,
        out_shape=jax.ShapeDtypeStruct((Bp, Cp), jnp.float32),
        scratch_shapes=[
            pltpu.VMEM((T, Bp, 8 * H1), jnp.float32),  # layer-1 gate pre-acts (both dirs)
            pltpu.VMEM((T, Bp, 2 * H1), jnp.float32),  # layer-1 bidirectional outputs
            pltpu.VMEM((T, Bp, 8 * H2), jnp.float32),  # layer-2 gate pre-acts (both dirs)
        ],
    )(x,
      params["wih1_cat"], params["whh1_f"], params["whh1_b"], params["b1_cat"],
      params["wih2_cat"], params["whh2_f"], params["whh2_b"], params["b2_cat"],
      params["wfc_pad"], params["bfc_pad"])

    return out_p[:B, :num_classes]


# -------------------------- parameter construction -------------------------- #

def _init_lstm_layer(key, in_dim, hidden):
    """PyTorch-style uniform(-1/sqrt(H), 1/sqrt(H)) init, both directions."""
    bound = 1.0 / np.sqrt(hidden)
    keys = jax.random.split(key, 8)

    def u(k, shape):
        return jax.random.uniform(k, shape, jnp.float32, -bound, bound)

    # PyTorch layout: W_ih (4H, in_dim), W_hh (4H, H).
    wih_f = u(keys[0], (4 * hidden, in_dim))
    whh_f = u(keys[1], (4 * hidden, hidden))
    bih_f = u(keys[2], (4 * hidden,))
    bhh_f = u(keys[3], (4 * hidden,))
    wih_b = u(keys[4], (4 * hidden, in_dim))
    whh_b = u(keys[5], (4 * hidden, hidden))
    bih_b = u(keys[6], (4 * hidden,))
    bhh_b = u(keys[7], (4 * hidden,))

    packed = {
        "wih_cat": jnp.concatenate([wih_f.T, wih_b.T], axis=1),   # (in, 8H)
        "whh_f": whh_f.T,                                         # (H, 4H)
        "whh_b": whh_b.T,                                         # (H, 4H)
        "b_cat": jnp.concatenate([bih_f + bhh_f, bih_b + bhh_b])[None, :],  # (1, 8H)
    }
    raw = (wih_f, whh_f, bih_f, bhh_f, wih_b, whh_b, bih_b, bhh_b)
    return packed, raw


def init_params(key, input_size, hidden_size, num_classes):
    k1, k2, k3, k4 = jax.random.split(key, 4)
    l1, raw1 = _init_lstm_layer(k1, input_size, hidden_size)
    l2, raw2 = _init_lstm_layer(k2, 2 * hidden_size, hidden_size // 2)

    bound = 1.0 / np.sqrt(hidden_size)
    fc_w = jax.random.uniform(k3, (num_classes, hidden_size), jnp.float32, -bound, bound)
    fc_b = jax.random.uniform(k4, (num_classes,), jnp.float32, -bound, bound)

    cp = ((num_classes + 127) // 128) * 128                       # lane-pad classes
    wfc_pad = jnp.zeros((hidden_size, cp), jnp.float32).at[:, :num_classes].set(fc_w.T)
    bfc_pad = jnp.zeros((1, cp), jnp.float32).at[:, :num_classes].set(fc_b)

    return {
        "wih1_cat": l1["wih_cat"], "whh1_f": l1["whh_f"],
        "whh1_b": l1["whh_b"], "b1_cat": l1["b_cat"],
        "wih2_cat": l2["wih_cat"], "whh2_f": l2["whh_f"],
        "whh2_b": l2["whh_b"], "b2_cat": l2["b_cat"],
        "wfc_pad": wfc_pad, "bfc_pad": bfc_pad,
        "raw": {"lstm1": raw1, "lstm2": raw2, "fc_w": fc_w, "fc_b": fc_b},
    }


# ----------------------------- pure-JAX reference ---------------------------- #

def _ref_lstm_dir(x_tbd, wih, whh, bih, bhh, reverse):
    T, B, _ = x_tbd.shape
    H = whh.shape[1]
    xs = x_tbd[::-1] if reverse else x_tbd

    def step(carry, x_t):
        h, c = carry
        gates = (jnp.dot(x_t, wih.T, precision=lax.Precision.HIGHEST)
                 + jnp.dot(h, whh.T, precision=lax.Precision.HIGHEST)
                 + bih + bhh)
        i = jax.nn.sigmoid(gates[:, 0:H])
        f = jax.nn.sigmoid(gates[:, H:2 * H])
        g = jnp.tanh(gates[:, 2 * H:3 * H])
        o = jax.nn.sigmoid(gates[:, 3 * H:4 * H])
        c = f * c + i * g
        h = o * jnp.tanh(c)
        return (h, c), h

    init = (jnp.zeros((B, H), jnp.float32), jnp.zeros((B, H), jnp.float32))
    _, ys = lax.scan(step, init, xs)
    return ys[::-1] if reverse else ys


def _ref_bidir(x_tbd, raw):
    wih_f, whh_f, bih_f, bhh_f, wih_b, whh_b, bih_b, bhh_b = raw
    out_f = _ref_lstm_dir(x_tbd, wih_f, whh_f, bih_f, bhh_f, reverse=False)
    out_b = _ref_lstm_dir(x_tbd, wih_b, whh_b, bih_b, bhh_b, reverse=True)
    return jnp.concatenate([out_f, out_b], axis=-1)


def reference_forward(params, x_btd):
    raw = params["raw"]
    x = jnp.transpose(x_btd, (1, 0, 2))
    h1 = _ref_bidir(x, raw["lstm1"])
    h2 = _ref_bidir(h1, raw["lstm2"])
    last = h2[-1]
    return (jnp.dot(last, raw["fc_w"].T, precision=lax.Precision.HIGHEST)
            + raw["fc_b"])


# ---------------------------------- main ------------------------------------ #

if __name__ == "__main__":
    batch, seq_len = 2, 8
    input_size, hidden_size, num_classes = 16, 64, 4   # hidden_size=64 as in the spec

    key = jax.random.PRNGKey(0)
    k_param, k_x = jax.random.split(key)
    params = init_params(k_param, input_size, hidden_size, num_classes)
    x = jax.random.normal(k_x, (batch, seq_len, input_size), jnp.float32)

    out = action_recognition_forward(params, x, num_classes=num_classes)
    out = jax.block_until_ready(out)

    ref = jax.block_until_ready(reference_forward(params, x))
    assert out.shape == (batch, num_classes)
    np.testing.assert_allclose(np.asarray(out), np.asarray(ref),
                               rtol=2e-3, atol=2e-3)
    print("KERNEL_OK")
</pallas_src>

<mosaic_0001>
module attributes {stable_mosaic.version = 11 : i64} {
  func.func @_model_kernel(%arg0: memref<8x8x16xf32, #tpu.memory_space<vmem>>, %arg1: memref<16x512xf32, #tpu.memory_space<vmem>>, %arg2: memref<64x256xf32, #tpu.memory_space<vmem>>, %arg3: memref<64x256xf32, #tpu.memory_space<vmem>>, %arg4: memref<1x512xf32, #tpu.memory_space<vmem>>, %arg5: memref<128x256xf32, #tpu.memory_space<vmem>>, %arg6: memref<32x128xf32, #tpu.memory_space<vmem>>, %arg7: memref<32x128xf32, #tpu.memory_space<vmem>>, %arg8: memref<1x256xf32, #tpu.memory_space<vmem>>, %arg9: memref<64x128xf32, #tpu.memory_space<vmem>>, %arg10: memref<1x128xf32, #tpu.memory_space<vmem>>, %arg11: memref<8x128xf32, #tpu.memory_space<vmem>>, %arg12: memref<8x8x512xf32, #tpu.memory_space<vmem>>, %arg13: memref<8x8x128xf32, #tpu.memory_space<vmem>>, %arg14: memref<8x8x256xf32, #tpu.memory_space<vmem>>) attributes {dimension_semantics = [], scalar_prefetch = 0 : i64, scratch_operands = 3 : i64, tpu.core_type = #tpu.core_type<tc>} {
    %c0 = arith.constant 0 : index
    %c0_0 = arith.constant 0 : index
    %c0_1 = arith.constant 0 : index
    %0 = vector.load %arg0[%c0, %c0_0, %c0_1] : memref<8x8x16xf32, #tpu.memory_space<vmem>>, vector<8x8x16xf32>
    %1 = vector.shape_cast %0 : vector<8x8x16xf32> to vector<64x16xf32>
    %c0_2 = arith.constant 0 : index
    %c0_3 = arith.constant 0 : index
    %2 = vector.load %arg1[%c0_2, %c0_3] : memref<16x512xf32, #tpu.memory_space<vmem>>, vector<16x512xf32>
    %cst = arith.constant dense<0.000000e+00> : vector<64x512xf32>
    %3 = tpu.matmul %1, %2, %cst {dimension_numbers = #tpu.dot_dimension_numbers<[1], [0], [0], [1], [0, 0, 1, 1], [], []>} : vector<64x16xf32>, vector<16x512xf32>, vector<64x512xf32> -> vector<64x512xf32>
    %c0_4 = arith.constant 0 : index
    %c0_5 = arith.constant 0 : index
    %4 = vector.load %arg4[%c0_4, %c0_5] : memref<1x512xf32, #tpu.memory_space<vmem>>, vector<1x512xf32>
    %5 = vector.broadcast %4 : vector<1x512xf32> to vector<64x512xf32>
    %6 = arith.addf %3, %5 : vector<64x512xf32>
    %7 = vector.shape_cast %6 : vector<64x512xf32> to vector<8x8x512xf32>
    %c0_6 = arith.constant 0 : index
    %c0_7 = arith.constant 0 : index
    %c0_8 = arith.constant 0 : index
    %8 = vector.load %arg12[%c0_6, %c0_7, %c0_8] : memref<8x8x512xf32, #tpu.memory_space<vmem>>, vector<8x8x512xf32>
    tpu.vector_store %arg12[%c0_6, %c0_7, %c0_8], %7 {strides = array<i32>} : memref<8x8x512xf32, #tpu.memory_space<vmem>>, vector<8x8x512xf32>,
    %cst_9 = arith.constant 0.000000e+00 : f32
    %9 = vector.broadcast %cst_9 : f32 to vector<8x64xf32>
    %c0_i32 = arith.constant 0 : i32
    %10 = arith.index_cast %c0_i32 : i32 to index
    %c0_10 = arith.constant 0 : index
    %c0_11 = arith.constant 0 : index
    %11 = vector.load %arg12[%10, %c0_10, %c0_11] : memref<8x8x512xf32, #tpu.memory_space<vmem>>, vector<1x8x256xf32>
    %12 = vector.shape_cast %11 : vector<1x8x256xf32> to vector<8x256xf32>
    %c0_12 = arith.constant 0 : index
    %c0_13 = arith.constant 0 : index
    %13 = vector.load %arg2[%c0_12, %c0_13] : memref<64x256xf32, #tpu.memory_space<vmem>>, vector<64x256xf32>
    %cst_14 = arith.constant dense<0.000000e+00> : vector<8x256xf32>
    %14 = tpu.matmul %9, %13, %cst_14 {dimension_numbers = #tpu.dot_dimension_numbers<[1], [0], [0], [1], [0, 0, 1, 1], [], []>} : vector<8x64xf32>, vector<64x256xf32>, vector<8x256xf32> -> vector<8x256xf32>
    %15 = arith.addf %12, %14 : vector<8x256xf32>
    %16 = vector.extract_strided_slice %15 {offsets = [0, 0], sizes = [8, 64], strides = [1, 1]} : vector<8x256xf32> to vector<8x64xf32>
    %17 = arith.negf %16 : vector<8x64xf32>
    %18 = math.exp %17 : vector<8x64xf32>
    %cst_15 = arith.constant 1.000000e+00 : f32
    %19 = vector.broadcast %cst_15 : f32 to vector<8x64xf32>
    %20 = arith.addf %19, %18 : vector<8x64xf32>
    %21 = arith.divf %19, %20 : vector<8x64xf32>
    %22 = vector.extract_strided_slice %15 {offsets = [0, 64], sizes = [8, 64], strides = [1, 1]} : vector<8x256xf32> to vector<8x64xf32>
    %23 = arith.negf %22 : vector<8x64xf32>
    %24 = math.exp %23 : vector<8x64xf32>
    %cst_16 = arith.constant 1.000000e+00 : f32
    %25 = vector.broadcast %cst_16 : f32 to vector<8x64xf32>
    %26 = arith.addf %25, %24 : vector<8x64xf32>
    %27 = arith.divf %25, %26 : vector<8x64xf32>
    %28 = vector.extract_strided_slice %15 {offsets = [0, 128], sizes = [8, 64], strides = [1, 1]} : vector<8x256xf32> to vector<8x64xf32>
    %29 = math.tanh %28 : vector<8x64xf32>
    %30 = vector.extract_strided_slice %15 {offsets = [0, 192], sizes = [8, 64], strides = [1, 1]} : vector<8x256xf32> to vector<8x64xf32>
    %31 = arith.negf %30 : vector<8x64xf32>
    %32 = math.exp %31 : vector<8x64xf32>
    %cst_17 = arith.constant 1.000000e+00 : f32
    %33 = vector.broadcast %cst_17 : f32 to vector<8x64xf32>
    %34 = arith.addf %33, %32 : vector<8x64xf32>
    %35 = arith.divf %33, %34 : vector<8x64xf32>
    %36 = arith.mulf %27, %9 : vector<8x64xf32>
    %37 = arith.mulf %21, %29 : vector<8x64xf32>
    %38 = arith.addf %36, %37 : vector<8x64xf32>
    %39 = math.tanh %38 : vector<8x64xf32>
    %40 = arith.mulf %35, %39 : vector<8x64xf32>
    %41 = arith.index_cast %c0_i32 : i32 to index
    %c0_18 = arith.constant 0 : index
    %c0_19 = arith.constant 0 : index
    %42 = vector.load %arg13[%41, %c0_18, %c0_19] : memref<8x8x128xf32, #tpu.memory_space<vmem>>, vector<1x8x64xf32>
    %43 = vector.shape_cast %42 : vector<1x8x64xf32> to vector<8x64xf32>
    %44 = vector.shape_cast %40 : vector<8x64xf32> to vector<1x8x64xf32>
    tpu.vector_store %arg13[%41, %c0_18, %c0_19], %44 {strides = array<i32>} : memref<8x8x128xf32, #tpu.memory_space<vmem>>, vector<1x8x64xf32>,
    %c1_i32 = arith.constant 1 : i32
    %45 = arith.index_cast %c1_i32 : i32 to index
    %c0_20 = arith.constant 0 : index
    %c0_21 = arith.constant 0 : index
    %46 = vector.load %arg12[%45, %c0_20, %c0_21] : memref<8x8x512xf32, #tpu.memory_space<vmem>>, vector<1x8x256xf32>
    %47 = vector.shape_cast %46 : vector<1x8x256xf32> to vector<8x256xf32>
    %c0_22 = arith.constant 0 : index
    %c0_23 = arith.constant 0 : index
    %48 = vector.load %arg2[%c0_22, %c0_23] : memref<64x256xf32, #tpu.memory_space<vmem>>, vector<64x256xf32>
    %cst_24 = arith.constant dense<0.000000e+00> : vector<8x256xf32>
    %49 = tpu.matmul %40, %48, %cst_24 {dimension_numbers = #tpu.dot_dimension_numbers<[1], [0], [0], [1], [0, 0, 1, 1], [], []>} : vector<8x64xf32>, vector<64x256xf32>, vector<8x256xf32> -> vector<8x256xf32>
    %50 = arith.addf %47, %49 : vector<8x256xf32>
    %51 = vector.extract_strided_slice %50 {offsets = [0, 0], sizes = [8, 64], strides = [1, 1]} : vector<8x256xf32> to vector<8x64xf32>
    %52 = arith.negf %51 : vector<8x64xf32>
    %53 = math.exp %52 : vector<8x64xf32>
    %cst_25 = arith.constant 1.000000e+00 : f32
    %54 = vector.broadcast %cst_25 : f32 to vector<8x64xf32>
    %55 = arith.addf %54, %53 : vector<8x64xf32>
    %56 = arith.divf %54, %55 : vector<8x64xf32>
    %57 = vector.extract_strided_slice %50 {offsets = [0, 64], sizes = [8, 64], strides = [1, 1]} : vector<8x256xf32> to vector<8x64xf32>
    %58 = arith.negf %57 : vector<8x64xf32>
    %59 = math.exp %58 : vector<8x64xf32>
    %cst_26 = arith.constant 1.000000e+00 : f32
    %60 = vector.broadcast %cst_26 : f32 to vector<8x64xf32>
    %61 = arith.addf %60, %59 : vector<8x64xf32>
    %62 = arith.divf %60, %61 : vector<8x64xf32>
    %63 = vector.extract_strided_slice %50 {offsets = [0, 128], sizes = [8, 64], strides = [1, 1]} : vector<8x256xf32> to vector<8x64xf32>
    %64 = math.tanh %63 : vector<8x64xf32>
    %65 = vector.extract_strided_slice %50 {offsets = [0, 192], sizes = [8, 64], strides = [1, 1]} : vector<8x256xf32> to vector<8x64xf32>
    %66 = arith.negf %65 : vector<8x64xf32>
    %67 = math.exp %66 : vector<8x64xf32>
    %cst_27 = arith.constant 1.000000e+00 : f32
    %68 = vector.broadcast %cst_27 : f32 to vector<8x64xf32>
    %69 = arith.addf %68, %67 : vector<8x64xf32>
    %70 = arith.divf %68, %69 : vector<8x64xf32>
    %71 = arith.mulf %62, %38 : vector<8x64xf32>
    %72 = arith.mulf %56, %64 : vector<8x64xf32>
    %73 = arith.addf %71, %72 : vector<8x64xf32>
    %74 = math.tanh %73 : vector<8x64xf32>
    %75 = arith.mulf %70, %74 : vector<8x64xf32>
    %76 = arith.index_cast %c1_i32 : i32 to index
    %c0_28 = arith.constant 0 : index
    %c0_29 = arith.constant 0 : index
    %77 = vector.load %arg13[%76, %c0_28, %c0_29] : memref<8x8x128xf32, #tpu.memory_space<vmem>>, vector<1x8x64xf32>
    %78 = vector.shape_cast %77 : vector<1x8x64xf32> to vector<8x64xf32>
    %79 = vector.shape_cast %75 : vector<8x64xf32> to vector<1x8x64xf32>
    tpu.vector_store %arg13[%76, %c0_28, %c0_29], %79 {strides = array<i32>} : memref<8x8x128xf32, #tpu.memory_space<vmem>>, vector<1x8x64xf32>,
    %c2_i32 = arith.constant 2 : i32
    %80 = arith.index_cast %c2_i32 : i32 to index
    %c0_30 = arith.constant 0 : index
    %c0_31 = arith.constant 0 : index
    %81 = vector.load %arg12[%80, %c0_30, %c0_31] : memref<8x8x512xf32, #tpu.memory_space<vmem>>, vector<1x8x256xf32>
    %82 = vector.shape_cast %81 : vector<1x8x256xf32> to vector<8x256xf32>
    %c0_32 = arith.constant 0 : index
    %c0_33 = arith.constant 0 : index
    %83 = vector.load %arg2[%c0_32, %c0_33] : memref<64x256xf32, #tpu.memory_space<vmem>>, vector<64x256xf32>
    %cst_34 = arith.constant dense<0.000000e+00> : vector<8x256xf32>
    %84 = tpu.matmul %75, %83, %cst_34 {dimension_numbers = #tpu.dot_dimension_numbers<[1], [0], [0], [1], [0, 0, 1, 1], [], []>} : vector<8x64xf32>, vector<64x256xf32>, vector<8x256xf32> -> vector<8x256xf32>
    %85 = arith.addf %82, %84 : vector<8x256xf32>
    %86 = vector.extract_strided_slice %85 {offsets = [0, 0], sizes = [8, 64], strides = [1, 1]} : vector<8x256xf32> to vector<8x64xf32>
    %87 = arith.negf %86 : vector<8x64xf32>
    %88 = math.exp %87 : vector<8x64xf32>
    %cst_35 = arith.constant 1.000000e+00 : f32
    %89 = vector.broadcast %cst_35 : f32 to vector<8x64xf32>
    %90 = arith.addf %89, %88 : vector<8x64xf32>
    %91 = arith.divf %89, %90 : vector<8x64xf32>
    %92 = vector.extract_strided_slice %85 {offsets = [0, 64], sizes = [8, 64], strides = [1, 1]} : vector<8x256xf32> to vector<8x64xf32>
    %93 = arith.negf %92 : vector<8x64xf32>
    %94 = math.exp %93 : vector<8x64xf32>
    %cst_36 = arith.constant 1.000000e+00 : f32
    %95 = vector.broadcast %cst_36 : f32 to vector<8x64xf32>
    %96 = arith.addf %95, %94 : vector<8x64xf32>
    %97 = arith.divf %95, %96 : vector<8x64xf32>
    %98 = vector.extract_strided_slice %85 {offsets = [0, 128], sizes = [8, 64], strides = [1, 1]} : vector<8x256xf32> to vector<8x64xf32>
    %99 = math.tanh %98 : vector<8x64xf32>
    %100 = vector.extract_strided_slice %85 {offsets = [0, 192], sizes = [8, 64], strides = [1, 1]} : vector<8x256xf32> to vector<8x64xf32>
    %101 = arith.negf %100 : vector<8x64xf32>
    %102 = math.exp %101 : vector<8x64xf32>
    %cst_37 = arith.constant 1.000000e+00 : f32
    %103 = vector.broadcast %cst_37 : f32 to vector<8x64xf32>
    %104 = arith.addf %103, %102 : vector<8x64xf32>
    %105 = arith.divf %103, %104 : vector<8x64xf32>
    %106 = arith.mulf %97, %73 : vector<8x64xf32>
    %107 = arith.mulf %91, %99 : vector<8x64xf32>
    %108 = arith.addf %106, %107 : vector<8x64xf32>
    %109 = math.tanh %108 : vector<8x64xf32>
    %110 = arith.mulf %105, %109 : vector<8x64xf32>
    %111 = arith.index_cast %c2_i32 : i32 to index
    %c0_38 = arith.constant 0 : index
    %c0_39 = arith.constant 0 : index
    %112 = vector.load %arg13[%111, %c0_38, %c0_39] : memref<8x8x128xf32, #tpu.memory_space<vmem>>, vector<1x8x64xf32>
    %113 = vector.shape_cast %112 : vector<1x8x64xf32> to vector<8x64xf32>
    %114 = vector.shape_cast %110 : vector<8x64xf32> to vector<1x8x64xf32>
    tpu.vector_store %arg13[%111, %c0_38, %c0_39], %114 {strides = array<i32>} : memref<8x8x128xf32, #tpu.memory_space<vmem>>, vector<1x8x64xf32>,
    %c3_i32 = arith.constant 3 : i32
    %115 = arith.index_cast %c3_i32 : i32 to index
    %c0_40 = arith.constant 0 : index
    %c0_41 = arith.constant 0 : index
    %116 = vector.load %arg12[%115, %c0_40, %c0_41] : memref<8x8x512xf32, #tpu.memory_space<vmem>>, vector<1x8x256xf32>
    %117 = vector.shape_cast %116 : vector<1x8x256xf32> to vector<8x256xf32>
    %c0_42 = arith.constant 0 : index
    %c0_43 = arith.constant 0 : index
    %118 = vector.load %arg2[%c0_42, %c0_43] : memref<64x256xf32, #tpu.memory_space<vmem>>, vector<64x256xf32>
    %cst_44 = arith.constant dense<0.000000e+00> : vector<8x256xf32>
    %119 = tpu.matmul %110, %118, %cst_44 {dimension_numbers = #tpu.dot_dimension_numbers<[1], [0], [0], [1], [0, 0, 1, 1], [], []>} : vector<8x64xf32>, vector<64x256xf32>, vector<8x256xf32> -> vector<8x256xf32>
    %120 = arith.addf %117, %119 : vector<8x256xf32>
    %121 = vector.extract_strided_slice %120 {offsets = [0, 0], sizes = [8, 64], strides = [1, 1]} : vector<8x256xf32> to vector<8x64xf32>
    %122 = arith.negf %121 : vector<8x64xf32>
    %123 = math.exp %122 : vector<8x64xf32>
    %cst_45 = arith.constant 1.000000e+00 : f32
    %124 = vector.broadcast %cst_45 : f32 to vector<8x64xf32>
    %125 = arith.addf %124, %123 : vector<8x64xf32>
    %126 = arith.divf %124, %125 : vector<8x64xf32>
    %127 = vector.extract_strided_slice %120 {offsets = [0, 64], sizes = [8, 64], strides = [1, 1]} : vector<8x256xf32> to vector<8x64xf32>
    %128 = arith.negf %127 : vector<8x64xf32>
    %129 = math.exp %128 : vector<8x64xf32>
    %cst_46 = arith.constant 1.000000e+00 : f32
    %130 = vector.broadcast %cst_46 : f32 to vector<8x64xf32>
    %131 = arith.addf %130, %129 : vector<8x64xf32>
    %132 = arith.divf %130, %131 : vector<8x64xf32>
    %133 = vector.extract_strided_slice %120 {offsets = [0, 128], sizes = [8, 64], strides = [1, 1]} : vector<8x256xf32> to vector<8x64xf32>
    %134 = math.tanh %133 : vector<8x64xf32>
    %135 = vector.extract_strided_slice %120 {offsets = [0, 192], sizes = [8, 64], strides = [1, 1]} : vector<8x256xf32> to vector<8x64xf32>
    %136 = arith.negf %135 : vector<8x64xf32>
    %137 = math.exp %136 : vector<8x64xf32>
    %cst_47 = arith.constant 1.000000e+00 : f32
    %138 = vector.broadcast %cst_47 : f32 to vector<8x64xf32>
    %139 = arith.addf %138, %137 : vector<8x64xf32>
    %140 = arith.divf %138, %139 : vector<8x64xf32>
    %141 = arith.mulf %132, %108 : vector<8x64xf32>
    %142 = arith.mulf %126, %134 : vector<8x64xf32>
    %143 = arith.addf %141, %142 : vector<8x64xf32>
    %144 = math.tanh %143 : vector<8x64xf32>
    %145 = arith.mulf %140, %144 : vector<8x64xf32>
    %146 = arith.index_cast %c3_i32 : i32 to index
    %c0_48 = arith.constant 0 : index
    %c0_49 = arith.constant 0 : index
    %147 = vector.load %arg13[%146, %c0_48, %c0_49] : memref<8x8x128xf32, #tpu.memory_space<vmem>>, vector<1x8x64xf32>
    %148 = vector.shape_cast %147 : vector<1x8x64xf32> to vector<8x64xf32>
    %149 = vector.shape_cast %145 : vector<8x64xf32> to vector<1x8x64xf32>
    tpu.vector_store %arg13[%146, %c0_48, %c0_49], %149 {strides = array<i32>} : memref<8x8x128xf32, #tpu.memory_space<vmem>>, vector<1x8x64xf32>,
    %c4_i32 = arith.constant 4 : i32
    %150 = arith.index_cast %c4_i32 : i32 to index
    %c0_50 = arith.constant 0 : index
    %c0_51 = arith.constant 0 : index
    %151 = vector.load %arg12[%150, %c0_50, %c0_51] : memref<8x8x512xf32, #tpu.memory_space<vmem>>, vector<1x8x256xf32>
    %152 = vector.shape_cast %151 : vector<1x8x256xf32> to vector<8x256xf32>
    %c0_52 = arith.constant 0 : index
    %c0_53 = arith.constant 0 : index
    %153 = vector.load %arg2[%c0_52, %c0_53] : memref<64x256xf32, #tpu.memory_space<vmem>>, vector<64x256xf32>
    %cst_54 = arith.constant dense<0.000000e+00> : vector<8x256xf32>
    %154 = tpu.matmul %145, %153, %cst_54 {dimension_numbers = #tpu.dot_dimension_numbers<[1], [0], [0], [1], [0, 0, 1, 1], [], []>} : vector<8x64xf32>, vector<64x256xf32>, vector<8x256xf32> -> vector<8x256xf32>
    %155 = arith.addf %152, %154 : vector<8x256xf32>
    %156 = vector.extract_strided_slice %155 {offsets = [0, 0], sizes = [8, 64], strides = [1, 1]} : vector<8x256xf32> to vector<8x64xf32>
    %157 = arith.negf %156 : vector<8x64xf32>
    %158 = math.exp %157 : vector<8x64xf32>
    %cst_55 = arith.constant 1.000000e+00 : f32
    %159 = vector.broadcast %cst_55 : f32 to vector<8x64xf32>
    %160 = arith.addf %159, %158 : vector<8x64xf32>
    %161 = arith.divf %159, %160 : vector<8x64xf32>
    %162 = vector.extract_strided_slice %155 {offsets = [0, 64], sizes = [8, 64], strides = [1, 1]} : vector<8x256xf32> to vector<8x64xf32>
    %163 = arith.negf %162 : vector<8x64xf32>
    %164 = math.exp %163 : vector<8x64xf32>
    %cst_56 = arith.constant 1.000000e+00 : f32
    %165 = vector.broadcast %cst_56 : f32 to vector<8x64xf32>
    %166 = arith.addf %165, %164 : vector<8x64xf32>
    %167 = arith.divf %165, %166 : vector<8x64xf32>
    %168 = vector.extract_strided_slice %155 {offsets = [0, 128], sizes = [8, 64], strides = [1, 1]} : vector<8x256xf32> to vector<8x64xf32>
    %169 = math.tanh %168 : vector<8x64xf32>
    %170 = vector.extract_strided_slice %155 {offsets = [0, 192], sizes = [8, 64], strides = [1, 1]} : vector<8x256xf32> to vector<8x64xf32>
    %171 = arith.negf %170 : vector<8x64xf32>
    %172 = math.exp %171 : vector<8x64xf32>
    %cst_57 = arith.constant 1.000000e+00 : f32
    %173 = vector.broadcast %cst_57 : f32 to vector<8x64xf32>
    %174 = arith.addf %173, %172 : vector<8x64xf32>
    %175 = arith.divf %173, %174 : vector<8x64xf32>
    %176 = arith.mulf %167, %143 : vector<8x64xf32>
    %177 = arith.mulf %161, %169 : vector<8x64xf32>
    %178 = arith.addf %176, %177 : vector<8x64xf32>
    %179 = math.tanh %178 : vector<8x64xf32>
    %180 = arith.mulf %175, %179 : vector<8x64xf32>
    %181 = arith.index_cast %c4_i32 : i32 to index
    %c0_58 = arith.constant 0 : index
    %c0_59 = arith.constant 0 : index
    %182 = vector.load %arg13[%181, %c0_58, %c0_59] : memref<8x8x128xf32, #tpu.memory_space<vmem>>, vector<1x8x64xf32>
    %183 = vector.shape_cast %182 : vector<1x8x64xf32> to vector<8x64xf32>
    %184 = vector.shape_cast %180 : vector<8x64xf32> to vector<1x8x64xf32>
    tpu.vector_store %arg13[%181, %c0_58, %c0_59], %184 {strides = array<i32>} : memref<8x8x128xf32, #tpu.memory_space<vmem>>, vector<1x8x64xf32>,
    %c5_i32 = arith.constant 5 : i32
    %185 = arith.index_cast %c5_i32 : i32 to index
    %c0_60 = arith.constant 0 : index
    %c0_61 = arith.constant 0 : index
    %186 = vector.load %arg12[%185, %c0_60, %c0_61] : memref<8x8x512xf32, #tpu.memory_space<vmem>>, vector<1x8x256xf32>
    %187 = vector.shape_cast %186 : vector<1x8x256xf32> to vector<8x256xf32>
    %c0_62 = arith.constant 0 : index
    %c0_63 = arith.constant 0 : index
    %188 = vector.load %arg2[%c0_62, %c0_63] : memref<64x256xf32, #tpu.memory_space<vmem>>, vector<64x256xf32>
    %cst_64 = arith.constant dense<0.000000e+00> : vector<8x256xf32>
    %189 = tpu.matmul %180, %188, %cst_64 {dimension_numbers = #tpu.dot_dimension_numbers<[1], [0], [0], [1], [0, 0, 1, 1], [], []>} : vector<8x64xf32>, vector<64x256xf32>, vector<8x256xf32> -> vector<8x256xf32>
    %190 = arith.addf %187, %189 : vector<8x256xf32>
    %191 = vector.extract_strided_slice %190 {offsets = [0, 0], sizes = [8, 64], strides = [1, 1]} : vector<8x256xf32> to vector<8x64xf32>
    %192 = arith.negf %191 : vector<8x64xf32>
    %193 = math.exp %192 : vector<8x64xf32>
    %cst_65 = arith.constant 1.000000e+00 : f32
    %194 = vector.broadcast %cst_65 : f32 to vector<8x64xf32>
    %195 = arith.addf %194, %193 : vector<8x64xf32>
    %196 = arith.divf %194, %195 : vector<8x64xf32>
    %197 = vector.extract_strided_slice %190 {offsets = [0, 64], sizes = [8, 64], strides = [1, 1]} : vector<8x256xf32> to vector<8x64xf32>
    %198 = arith.negf %197 : vector<8x64xf32>
    %199 = math.exp %198 : vector<8x64xf32>
    %cst_66 = arith.constant 1.000000e+00 : f32
    %200 = vector.broadcast %cst_66 : f32 to vector<8x64xf32>
    %201 = arith.addf %200, %199 : vector<8x64xf32>
    %202 = arith.divf %200, %201 : vector<8x64xf32>
    %203 = vector.extract_strided_slice %190 {offsets = [0, 128], sizes = [8, 64], strides = [1, 1]} : vector<8x256xf32> to vector<8x64xf32>
    %204 = math.tanh %203 : vector<8x64xf32>
    %205 = vector.extract_strided_slice %190 {offsets = [0, 192], sizes = [8, 64], strides = [1, 1]} : vector<8x256xf32> to vector<8x64xf32>
    %206 = arith.negf %205 : vector<8x64xf32>
    %207 = math.exp %206 : vector<8x64xf32>
    %cst_67 = arith.constant 1.000000e+00 : f32
    %208 = vector.broadcast %cst_67 : f32 to vector<8x64xf32>
    %209 = arith.addf %208, %207 : vector<8x64xf32>
    %210 = arith.divf %208, %209 : vector<8x64xf32>
    %211 = arith.mulf %202, %178 : vector<8x64xf32>
    %212 = arith.mulf %196, %204 : vector<8x64xf32>
    %213 = arith.addf %211, %212 : vector<8x64xf32>
    %214 = math.tanh %213 : vector<8x64xf32>
    %215 = arith.mulf %210, %214 : vector<8x64xf32>
    %216 = arith.index_cast %c5_i32 : i32 to index
    %c0_68 = arith.constant 0 : index
    %c0_69 = arith.constant 0 : index
    %217 = vector.load %arg13[%216, %c0_68, %c0_69] : memref<8x8x128xf32, #tpu.memory_space<vmem>>, vector<1x8x64xf32>
    %218 = vector.shape_cast %217 : vector<1x8x64xf32> to vector<8x64xf32>
    %219 = vector.shape_cast %215 : vector<8x64xf32> to vector<1x8x64xf32>
    tpu.vector_store %arg13[%216, %c0_68, %c0_69], %219 {strides = array<i32>} : memref<8x8x128xf32, #tpu.memory_space<vmem>>, vector<1x8x64xf32>,
    %c6_i32 = arith.constant 6 : i32
    %220 = arith.index_cast %c6_i32 : i32 to index
    %c0_70 = arith.constant 0 : index
    %c0_71 = arith.constant 0 : index
    %221 = vector.load %arg12[%220, %c0_70, %c0_71] : memref<8x8x512xf32, #tpu.memory_space<vmem>>, vector<1x8x256xf32>
    %222 = vector.shape_cast %221 : vector<1x8x256xf32> to vector<8x256xf32>
    %c0_72 = arith.constant 0 : index
    %c0_73 = arith.constant 0 : index
    %223 = vector.load %arg2[%c0_72, %c0_73] : memref<64x256xf32, #tpu.memory_space<vmem>>, vector<64x256xf32>
    %cst_74 = arith.constant dense<0.000000e+00> : vector<8x256xf32>
    %224 = tpu.matmul %215, %223, %cst_74 {dimension_numbers = #tpu.dot_dimension_numbers<[1], [0], [0], [1], [0, 0, 1, 1], [], []>} : vector<8x64xf32>, vector<64x256xf32>, vector<8x256xf32> -> vector<8x256xf32>
    %225 = arith.addf %222, %224 : vector<8x256xf32>
    %226 = vector.extract_strided_slice %225 {offsets = [0, 0], sizes = [8, 64], strides = [1, 1]} : vector<8x256xf32> to vector<8x64xf32>
    %227 = arith.negf %226 : vector<8x64xf32>
    %228 = math.exp %227 : vector<8x64xf32>
    %cst_75 = arith.constant 1.000000e+00 : f32
    %229 = vector.broadcast %cst_75 : f32 to vector<8x64xf32>
    %230 = arith.addf %229, %228 : vector<8x64xf32>
    %231 = arith.divf %229, %230 : vector<8x64xf32>
    %232 = vector.extract_strided_slice %225 {offsets = [0, 64], sizes = [8, 64], strides = [1, 1]} : vector<8x256xf32> to vector<8x64xf32>
    %233 = arith.negf %232 : vector<8x64xf32>
    %234 = math.exp %233 : vector<8x64xf32>
    %cst_76 = arith.constant 1.000000e+00 : f32
    %235 = vector.broadcast %cst_76 : f32 to vector<8x64xf32>
    %236 = arith.addf %235, %234 : vector<8x64xf32>
    %237 = arith.divf %235, %236 : vector<8x64xf32>
    %238 = vector.extract_strided_slice %225 {offsets = [0, 128], sizes = [8, 64], strides = [1, 1]} : vector<8x256xf32> to vector<8x64xf32>
    %239 = math.tanh %238 : vector<8x64xf32>
    %240 = vector.extract_strided_slice %225 {offsets = [0, 192], sizes = [8, 64], strides = [1, 1]} : vector<8x256xf32> to vector<8x64xf32>
    %241 = arith.negf %240 : vector<8x64xf32>
    %242 = math.exp %241 : vector<8x64xf32>
    %cst_77 = arith.constant 1.000000e+00 : f32
    %243 = vector.broadcast %cst_77 : f32 to vector<8x64xf32>
    %244 = arith.addf %243, %242 : vector<8x64xf32>
    %245 = arith.divf %243, %244 : vector<8x64xf32>
    %246 = arith.mulf %237, %213 : vector<8x64xf32>
    %247 = arith.mulf %231, %239 : vector<8x64xf32>
    %248 = arith.addf %246, %247 : vector<8x64xf32>
    %249 = math.tanh %248 : vector<8x64xf32>
    %250 = arith.mulf %245, %249 : vector<8x64xf32>
    %251 = arith.index_cast %c6_i32 : i32 to index
    %c0_78 = arith.constant 0 : index
    %c0_79 = arith.constant 0 : index
    %252 = vector.load %arg13[%251, %c0_78, %c0_79] : memref<8x8x128xf32, #tpu.memory_space<vmem>>, vector<1x8x64xf32>
    %253 = vector.shape_cast %252 : vector<1x8x64xf32> to vector<8x64xf32>
    %254 = vector.shape_cast %250 : vector<8x64xf32> to vector<1x8x64xf32>
    tpu.vector_store %arg13[%251, %c0_78, %c0_79], %254 {strides = array<i32>} : memref<8x8x128xf32, #tpu.memory_space<vmem>>, vector<1x8x64xf32>,
    %c7_i32 = arith.constant 7 : i32
    %255 = arith.index_cast %c7_i32 : i32 to index
    %c0_80 = arith.constant 0 : index
    %c0_81 = arith.constant 0 : index
    %256 = vector.load %arg12[%255, %c0_80, %c0_81] : memref<8x8x512xf32, #tpu.memory_space<vmem>>, vector<1x8x256xf32>
    %257 = vector.shape_cast %256 : vector<1x8x256xf32> to vector<8x256xf32>
    %c0_82 = arith.constant 0 : index
    %c0_83 = arith.constant 0 : index
    %258 = vector.load %arg2[%c0_82, %c0_83] : memref<64x256xf32, #tpu.memory_space<vmem>>, vector<64x256xf32>
    %cst_84 = arith.constant dense<0.000000e+00> : vector<8x256xf32>
    %259 = tpu.matmul %250, %258, %cst_84 {dimension_numbers = #tpu.dot_dimension_numbers<[1], [0], [0], [1], [0, 0, 1, 1], [], []>} : vector<8x64xf32>, vector<64x256xf32>, vector<8x256xf32> -> vector<8x256xf32>
    %260 = arith.addf %257, %259 : vector<8x256xf32>
    %261 = vector.extract_strided_slice %260 {offsets = [0, 0], sizes = [8, 64], strides = [1, 1]} : vector<8x256xf32> to vector<8x64xf32>
    %262 = arith.negf %261 : vector<8x64xf32>
    %263 = math.exp %262 : vector<8x64xf32>
    %cst_85 = arith.constant 1.000000e+00 : f32
    %264 = vector.broadcast %cst_85 : f32 to vector<8x64xf32>
    %265 = arith.addf %264, %263 : vector<8x64xf32>
    %266 = arith.divf %264, %265 : vector<8x64xf32>
    %267 = vector.extract_strided_slice %260 {offsets = [0, 64], sizes = [8, 64], strides = [1, 1]} : vector<8x256xf32> to vector<8x64xf32>
    %268 = arith.negf %267 : vector<8x64xf32>
    %269 = math.exp %268 : vector<8x64xf32>
    %cst_86 = arith.constant 1.000000e+00 : f32
    %270 = vector.broadcast %cst_86 : f32 to vector<8x64xf32>
    %271 = arith.addf %270, %269 : vector<8x64xf32>
    %272 = arith.divf %270, %271 : vector<8x64xf32>
    %273 = vector.extract_strided_slice %260 {offsets = [0, 128], sizes = [8, 64], strides = [1, 1]} : vector<8x256xf32> to vector<8x64xf32>
    %274 = math.tanh %273 : vector<8x64xf32>
    %275 = vector.extract_strided_slice %260 {offsets = [0, 192], sizes = [8, 64], strides = [1, 1]} : vector<8x256xf32> to vector<8x64xf32>
    %276 = arith.negf %275 : vector<8x64xf32>
    %277 = math.exp %276 : vector<8x64xf32>
    %cst_87 = arith.constant 1.000000e+00 : f32
    %278 = vector.broadcast %cst_87 : f32 to vector<8x64xf32>
    %279 = arith.addf %278, %277 : vector<8x64xf32>
    %280 = arith.divf %278, %279 : vector<8x64xf32>
    %281 = arith.mulf %272, %248 : vector<8x64xf32>
    %282 = arith.mulf %266, %274 : vector<8x64xf32>
    %283 = arith.addf %281, %282 : vector<8x64xf32>
    %284 = math.tanh %283 : vector<8x64xf32>
    %285 = arith.mulf %280, %284 : vector<8x64xf32>
    %286 = arith.index_cast %c7_i32 : i32 to index
    %c0_88 = arith.constant 0 : index
    %c0_89 = arith.constant 0 : index
    %287 = vector.load %arg13[%286, %c0_88, %c0_89] : memref<8x8x128xf32, #tpu.memory_space<vmem>>, vector<1x8x64xf32>
    %288 = vector.shape_cast %287 : vector<1x8x64xf32> to vector<8x64xf32>
    %289 = vector.shape_cast %285 : vector<8x64xf32> to vector<1x8x64xf32>
    tpu.vector_store %arg13[%286, %c0_88, %c0_89], %289 {strides = array<i32>} : memref<8x8x128xf32, #tpu.memory_space<vmem>>, vector<1x8x64xf32>,
    %c8_i32 = arith.constant 8 : i32
    %c0_i32_90 = arith.constant 0 : i32
    %c7_i32_91 = arith.constant 7 : i32
    %290 = arith.subi %c7_i32_91, %c0_i32_90 : i32
    %291 = arith.index_cast %290 : i32 to index
    %c0_92 = arith.constant 0 : index
    %c256 = arith.constant 256 : index
    %292 = vector.load %arg12[%291, %c0_92, %c256] : memref<8x8x512xf32, #tpu.memory_space<vmem>>, vector<1x8x256xf32>
    %293 = vector.shape_cast %292 : vector<1x8x256xf32> to vector<8x256xf32>
    %c0_93 = arith.constant 0 : index
    %c0_94 = arith.constant 0 : index
    %294 = vector.load %arg3[%c0_93, %c0_94] : memref<64x256xf32, #tpu.memory_space<vmem>>, vector<64x256xf32>
    %cst_95 = arith.constant dense<0.000000e+00> : vector<8x256xf32>
    %295 = tpu.matmul %9, %294, %cst_95 {dimension_numbers = #tpu.dot_dimension_numbers<[1], [0], [0], [1], [0, 0, 1, 1], [], []>} : vector<8x64xf32>, vector<64x256xf32>, vector<8x256xf32> -> vector<8x256xf32>
    %296 = arith.addf %293, %295 : vector<8x256xf32>
    %297 = vector.extract_strided_slice %296 {offsets = [0, 0], sizes = [8, 64], strides = [1, 1]} : vector<8x256xf32> to vector<8x64xf32>
    %298 = arith.negf %297 : vector<8x64xf32>
    %299 = math.exp %298 : vector<8x64xf32>
    %cst_96 = arith.constant 1.000000e+00 : f32
    %300 = vector.broadcast %cst_96 : f32 to vector<8x64xf32>
    %301 = arith.addf %300, %299 : vector<8x64xf32>
    %302 = arith.divf %300, %301 : vector<8x64xf32>
    %303 = vector.extract_strided_slice %296 {offsets = [0, 64], sizes = [8, 64], strides = [1, 1]} : vector<8x256xf32> to vector<8x64xf32>
    %304 = arith.negf %303 : vector<8x64xf32>
    %305 = math.exp %304 : vector<8x64xf32>
    %cst_97 = arith.constant 1.000000e+00 : f32
    %306 = vector.broadcast %cst_97 : f32 to vector<8x64xf32>
    %307 = arith.addf %306, %305 : vector<8x64xf32>
    %308 = arith.divf %306, %307 : vector<8x64xf32>
    %309 = vector.extract_strided_slice %296 {offsets = [0, 128], sizes = [8, 64], strides = [1, 1]} : vector<8x256xf32> to vector<8x64xf32>
    %310 = math.tanh %309 : vector<8x64xf32>
    %311 = vector.extract_strided_slice %296 {offsets = [0, 192], sizes = [8, 64], strides = [1, 1]} : vector<8x256xf32> to vector<8x64xf32>
    %312 = arith.negf %311 : vector<8x64xf32>
    %313 = math.exp %312 : vector<8x64xf32>
    %cst_98 = arith.constant 1.000000e+00 : f32
    %314 = vector.broadcast %cst_98 : f32 to vector<8x64xf32>
    %315 = arith.addf %314, %313 : vector<8x64xf32>
    %316 = arith.divf %314, %315 : vector<8x64xf32>
    %317 = arith.mulf %308, %9 : vector<8x64xf32>
    %318 = arith.mulf %302, %310 : vector<8x64xf32>
    %319 = arith.addf %317, %318 : vector<8x64xf32>
    %320 = math.tanh %319 : vector<8x64xf32>
    %321 = arith.mulf %316, %320 : vector<8x64xf32>
    %322 = arith.index_cast %290 : i32 to index
    %c0_99 = arith.constant 0 : index
    %c64 = arith.constant 64 : index
    %323 = vector.load %arg13[%322, %c0_99, %c64] : memref<8x8x128xf32, #tpu.memory_space<vmem>>, vector<1x8x64xf32>
    %324 = vector.shape_cast %323 : vector<1x8x64xf32> to vector<8x64xf32>
    %325 = vector.shape_cast %321 : vector<8x64xf32> to vector<1x8x64xf32>
    tpu.vector_store %arg13[%322, %c0_99, %c64], %325 {strides = array<i32>} : memref<8x8x128xf32, #tpu.memory_space<vmem>>, vector<1x8x64xf32>,
    %c1_i32_100 = arith.constant 1 : i32
    %c7_i32_101 = arith.constant 7 : i32
    %326 = arith.subi %c7_i32_101, %c1_i32_100 : i32
    %327 = arith.index_cast %326 : i32 to index
    %c0_102 = arith.constant 0 : index
    %c256_103 = arith.constant 256 : index
    %328 = vector.load %arg12[%327, %c0_102, %c256_103] : memref<8x8x512xf32, #tpu.memory_space<vmem>>, vector<1x8x256xf32>
    %329 = vector.shape_cast %328 : vector<1x8x256xf32> to vector<8x256xf32>
    %c0_104 = arith.constant 0 : index
    %c0_105 = arith.constant 0 : index
    %330 = vector.load %arg3[%c0_104, %c0_105] : memref<64x256xf32, #tpu.memory_space<vmem>>, vector<64x256xf32>
    %cst_106 = arith.constant dense<0.000000e+00> : vector<8x256xf32>
    %331 = tpu.matmul %321, %330, %cst_106 {dimension_numbers = #tpu.dot_dimension_numbers<[1], [0], [0], [1], [0, 0, 1, 1], [], []>} : vector<8x64xf32>, vector<64x256xf32>, vector<8x256xf32> -> vector<8x256xf32>
    %332 = arith.addf %329, %331 : vector<8x256xf32>
    %333 = vector.extract_strided_slice %332 {offsets = [0, 0], sizes = [8, 64], strides = [1, 1]} : vector<8x256xf32> to vector<8x64xf32>
    %334 = arith.negf %333 : vector<8x64xf32>
    %335 = math.exp %334 : vector<8x64xf32>
    %cst_107 = arith.constant 1.000000e+00 : f32
    %336 = vector.broadcast %cst_107 : f32 to vector<8x64xf32>
    %337 = arith.addf %336, %335 : vector<8x64xf32>
    %338 = arith.divf %336, %337 : vector<8x64xf32>
    %339 = vector.extract_strided_slice %332 {offsets = [0, 64], sizes = [8, 64], strides = [1, 1]} : vector<8x256xf32> to vector<8x64xf32>
    %340 = arith.negf %339 : vector<8x64xf32>
    %341 = math.exp %340 : vector<8x64xf32>
    %cst_108 = arith.constant 1.000000e+00 : f32
    %342 = vector.broadcast %cst_108 : f32 to vector<8x64xf32>
    %343 = arith.addf %342, %341 : vector<8x64xf32>
    %344 = arith.divf %342, %343 : vector<8x64xf32>
    %345 = vector.extract_strided_slice %332 {offsets = [0, 128], sizes = [8, 64], strides = [1, 1]} : vector<8x256xf32> to vector<8x64xf32>
    %346 = math.tanh %345 : vector<8x64xf32>
    %347 = vector.extract_strided_slice %332 {offsets = [0, 192], sizes = [8, 64], strides = [1, 1]} : vector<8x256xf32> to vector<8x64xf32>
    %348 = arith.negf %347 : vector<8x64xf32>
    %349 = math.exp %348 : vector<8x64xf32>
    %cst_109 = arith.constant 1.000000e+00 : f32
    %350 = vector.broadcast %cst_109 : f32 to vector<8x64xf32>
    %351 = arith.addf %350, %349 : vector<8x64xf32>
    %352 = arith.divf %350, %351 : vector<8x64xf32>
    %353 = arith.mulf %344, %319 : vector<8x64xf32>
    %354 = arith.mulf %338, %346 : vector<8x64xf32>
    %355 = arith.addf %353, %354 : vector<8x64xf32>
    %356 = math.tanh %355 : vector<8x64xf32>
    %357 = arith.mulf %352, %356 : vector<8x64xf32>
    %358 = arith.index_cast %326 : i32 to index
    %c0_110 = arith.constant 0 : index
    %c64_111 = arith.constant 64 : index
    %359 = vector.load %arg13[%358, %c0_110, %c64_111] : memref<8x8x128xf32, #tpu.memory_space<vmem>>, vector<1x8x64xf32>
    %360 = vector.shape_cast %359 : vector<1x8x64xf32> to vector<8x64xf32>
    %361 = vector.shape_cast %357 : vector<8x64xf32> to vector<1x8x64xf32>
    tpu.vector_store %arg13[%358, %c0_110, %c64_111], %361 {strides = array<i32>} : memref<8x8x128xf32, #tpu.memory_space<vmem>>, vector<1x8x64xf32>,
    %c2_i32_112 = arith.constant 2 : i32
    %c7_i32_113 = arith.constant 7 : i32
    %362 = arith.subi %c7_i32_113, %c2_i32_112 : i32
    %363 = arith.index_cast %362 : i32 to index
    %c0_114 = arith.constant 0 : index
    %c256_115 = arith.constant 256 : index
    %364 = vector.load %arg12[%363, %c0_114, %c256_115] : memref<8x8x512xf32, #tpu.memory_space<vmem>>, vector<1x8x256xf32>
    %365 = vector.shape_cast %364 : vector<1x8x256xf32> to vector<8x256xf32>
    %c0_116 = arith.constant 0 : index
    %c0_117 = arith.constant 0 : index
    %366 = vector.load %arg3[%c0_116, %c0_117] : memref<64x256xf32, #tpu.memory_space<vmem>>, vector<64x256xf32>
    %cst_118 = arith.constant dense<0.000000e+00> : vector<8x256xf32>
    %367 = tpu.matmul %357, %366, %cst_118 {dimension_numbers = #tpu.dot_dimension_numbers<[1], [0], [0], [1], [0, 0, 1, 1], [], []>} : vector<8x64xf32>, vector<64x256xf32>, vector<8x256xf32> -> vector<8x256xf32>
    %368 = arith.addf %365, %367 : vector<8x256xf32>
    %369 = vector.extract_strided_slice %368 {offsets = [0, 0], sizes = [8, 64], strides = [1, 1]} : vector<8x256xf32> to vector<8x64xf32>
    %370 = arith.negf %369 : vector<8x64xf32>
    %371 = math.exp %370 : vector<8x64xf32>
    %cst_119 = arith.constant 1.000000e+00 : f32
    %372 = vector.broadcast %cst_119 : f32 to vector<8x64xf32>
    %373 = arith.addf %372, %371 : vector<8x64xf32>
    %374 = arith.divf %372, %373 : vector<8x64xf32>
    %375 = vector.extract_strided_slice %368 {offsets = [0, 64], sizes = [8, 64], strides = [1, 1]} : vector<8x256xf32> to vector<8x64xf32>
    %376 = arith.negf %375 : vector<8x64xf32>
    %377 = math.exp %376 : vector<8x64xf32>
    %cst_120 = arith.constant 1.000000e+00 : f32
    %378 = vector.broadcast %cst_120 : f32 to vector<8x64xf32>
    %379 = arith.addf %378, %377 : vector<8x64xf32>
    %380 = arith.divf %378, %379 : vector<8x64xf32>
    %381 = vector.extract_strided_slice %368 {offsets = [0, 128], sizes = [8, 64], strides = [1, 1]} : vector<8x256xf32> to vector<8x64xf32>
    %382 = math.tanh %381 : vector<8x64xf32>
    %383 = vector.extract_strided_slice %368 {offsets = [0, 192], sizes = [8, 64], strides = [1, 1]} : vector<8x256xf32> to vector<8x64xf32>
    %384 = arith.negf %383 : vector<8x64xf32>
    %385 = math.exp %384 : vector<8x64xf32>
    %cst_121 = arith.constant 1.000000e+00 : f32
    %386 = vector.broadcast %cst_121 : f32 to vector<8x64xf32>
    %387 = arith.addf %386, %385 : vector<8x64xf32>
    %388 = arith.divf %386, %387 : vector<8x64xf32>
    %389 = arith.mulf %380, %355 : vector<8x64xf32>
    %390 = arith.mulf %374, %382 : vector<8x64xf32>
    %391 = arith.addf %389, %390 : vector<8x64xf32>
    %392 = math.tanh %391 : vector<8x64xf32>
    %393 = arith.mulf %388, %392 : vector<8x64xf32>
    %394 = arith.index_cast %362 : i32 to index
    %c0_122 = arith.constant 0 : index
    %c64_123 = arith.constant 64 : index
    %395 = vector.load %arg13[%394, %c0_122, %c64_123] : memref<8x8x128xf32, #tpu.memory_space<vmem>>, vector<1x8x64xf32>
    %396 = vector.shape_cast %395 : vector<1x8x64xf32> to vector<8x64xf32>
    %397 = vector.shape_cast %393 : vector<8x64xf32> to vector<1x8x64xf32>
    tpu.vector_store %arg13[%394, %c0_122, %c64_123], %397 {strides = array<i32>} : memref<8x8x128xf32, #tpu.memory_space<vmem>>, vector<1x8x64xf32>,
    %c3_i32_124 = arith.constant 3 : i32
    %c7_i32_125 = arith.constant 7 : i32
    %398 = arith.subi %c7_i32_125, %c3_i32_124 : i32
    %399 = arith.index_cast %398 : i32 to index
    %c0_126 = arith.constant 0 : index
    %c256_127 = arith.constant 256 : index
    %400 = vector.load %arg12[%399, %c0_126, %c256_127] : memref<8x8x512xf32, #tpu.memory_space<vmem>>, vector<1x8x256xf32>
    %401 = vector.shape_cast %400 : vector<1x8x256xf32> to vector<8x256xf32>
    %c0_128 = arith.constant 0 : index
    %c0_129 = arith.constant 0 : index
    %402 = vector.load %arg3[%c0_128, %c0_129] : memref<64x256xf32, #tpu.memory_space<vmem>>, vector<64x256xf32>
    %cst_130 = arith.constant dense<0.000000e+00> : vector<8x256xf32>
    %403 = tpu.matmul %393, %402, %cst_130 {dimension_numbers = #tpu.dot_dimension_numbers<[1], [0], [0], [1], [0, 0, 1, 1], [], []>} : vector<8x64xf32>, vector<64x256xf32>, vector<8x256xf32> -> vector<8x256xf32>
    %404 = arith.addf %401, %403 : vector<8x256xf32>
    %405 = vector.extract_strided_slice %404 {offsets = [0, 0], sizes = [8, 64], strides = [1, 1]} : vector<8x256xf32> to vector<8x64xf32>
    %406 = arith.negf %405 : vector<8x64xf32>
    %407 = math.exp %406 : vector<8x64xf32>
    %cst_131 = arith.constant 1.000000e+00 : f32
    %408 = vector.broadcast %cst_131 : f32 to vector<8x64xf32>
    %409 = arith.addf %408, %407 : vector<8x64xf32>
    %410 = arith.divf %408, %409 : vector<8x64xf32>
    %411 = vector.extract_strided_slice %404 {offsets = [0, 64], sizes = [8, 64], strides = [1, 1]} : vector<8x256xf32> to vector<8x64xf32>
    %412 = arith.negf %411 : vector<8x64xf32>
    %413 = math.exp %412 : vector<8x64xf32>
    %cst_132 = arith.constant 1.000000e+00 : f32
    %414 = vector.broadcast %cst_132 : f32 to vector<8x64xf32>
    %415 = arith.addf %414, %413 : vector<8x64xf32>
    %416 = arith.divf %414, %415 : vector<8x64xf32>
    %417 = vector.extract_strided_slice %404 {offsets = [0, 128], sizes = [8, 64], strides = [1, 1]} : vector<8x256xf32> to vector<8x64xf32>
    %418 = math.tanh %417 : vector<8x64xf32>
    %419 = vector.extract_strided_slice %404 {offsets = [0, 192], sizes = [8, 64], strides = [1, 1]} : vector<8x256xf32> to vector<8x64xf32>
    %420 = arith.negf %419 : vector<8x64xf32>
    %421 = math.exp %420 : vector<8x64xf32>
    %cst_133 = arith.constant 1.000000e+00 : f32
    %422 = vector.broadcast %cst_133 : f32 to vector<8x64xf32>
    %423 = arith.addf %422, %421 : vector<8x64xf32>
    %424 = arith.divf %422, %423 : vector<8x64xf32>
    %425 = arith.mulf %416, %391 : vector<8x64xf32>
    %426 = arith.mulf %410, %418 : vector<8x64xf32>
    %427 = arith.addf %425, %426 : vector<8x64xf32>
    %428 = math.tanh %427 : vector<8x64xf32>
    %429 = arith.mulf %424, %428 : vector<8x64xf32>
    %430 = arith.index_cast %398 : i32 to index
    %c0_134 = arith.constant 0 : index
    %c64_135 = arith.constant 64 : index
    %431 = vector.load %arg13[%430, %c0_134, %c64_135] : memref<8x8x128xf32, #tpu.memory_space<vmem>>, vector<1x8x64xf32>
    %432 = vector.shape_cast %431 : vector<1x8x64xf32> to vector<8x64xf32>
    %433 = vector.shape_cast %429 : vector<8x64xf32> to vector<1x8x64xf32>
    tpu.vector_store %arg13[%430, %c0_134, %c64_135], %433 {strides = array<i32>} : memref<8x8x128xf32, #tpu.memory_space<vmem>>, vector<1x8x64xf32>,
    %c4_i32_136 = arith.constant 4 : i32
    %c7_i32_137 = arith.constant 7 : i32
    %434 = arith.subi %c7_i32_137, %c4_i32_136 : i32
    %435 = arith.index_cast %434 : i32 to index
    %c0_138 = arith.constant 0 : index
    %c256_139 = arith.constant 256 : index
    %436 = vector.load %arg12[%435, %c0_138, %c256_139] : memref<8x8x512xf32, #tpu.memory_space<vmem>>, vector<1x8x256xf32>
    %437 = vector.shape_cast %436 : vector<1x8x256xf32> to vector<8x256xf32>
    %c0_140 = arith.constant 0 : index
    %c0_141 = arith.constant 0 : index
    %438 = vector.load %arg3[%c0_140, %c0_141] : memref<64x256xf32, #tpu.memory_space<vmem>>, vector<64x256xf32>
    %cst_142 = arith.constant dense<0.000000e+00> : vector<8x256xf32>
    %439 = tpu.matmul %429, %438, %cst_142 {dimension_numbers = #tpu.dot_dimension_numbers<[1], [0], [0], [1], [0, 0, 1, 1], [], []>} : vector<8x64xf32>, vector<64x256xf32>, vector<8x256xf32> -> vector<8x256xf32>
    %440 = arith.addf %437, %439 : vector<8x256xf32>
    %441 = vector.extract_strided_slice %440 {offsets = [0, 0], sizes = [8, 64], strides = [1, 1]} : vector<8x256xf32> to vector<8x64xf32>
    %442 = arith.negf %441 : vector<8x64xf32>
    %443 = math.exp %442 : vector<8x64xf32>
    %cst_143 = arith.constant 1.000000e+00 : f32
    %444 = vector.broadcast %cst_143 : f32 to vector<8x64xf32>
    %445 = arith.addf %444, %443 : vector<8x64xf32>
    %446 = arith.divf %444, %445 : vector<8x64xf32>
    %447 = vector.extract_strided_slice %440 {offsets = [0, 64], sizes = [8, 64], strides = [1, 1]} : vector<8x256xf32> to vector<8x64xf32>
    %448 = arith.negf %447 : vector<8x64xf32>
    %449 = math.exp %448 : vector<8x64xf32>
    %cst_144 = arith.constant 1.000000e+00 : f32
    %450 = vector.broadcast %cst_144 : f32 to vector<8x64xf32>
    %451 = arith.addf %450, %449 : vector<8x64xf32>
    %452 = arith.divf %450, %451 : vector<8x64xf32>
    %453 = vector.extract_strided_slice %440 {offsets = [0, 128], sizes = [8, 64], strides = [1, 1]} : vector<8x256xf32> to vector<8x64xf32>
    %454 = math.tanh %453 : vector<8x64xf32>
    %455 = vector.extract_strided_slice %440 {offsets = [0, 192], sizes = [8, 64], strides = [1, 1]} : vector<8x256xf32> to vector<8x64xf32>
    %456 = arith.negf %455 : vector<8x64xf32>
    %457 = math.exp %456 : vector<8x64xf32>
    %cst_145 = arith.constant 1.000000e+00 : f32
    %458 = vector.broadcast %cst_145 : f32 to vector<8x64xf32>
    %459 = arith.addf %458, %457 : vector<8x64xf32>
    %460 = arith.divf %458, %459 : vector<8x64xf32>
    %461 = arith.mulf %452, %427 : vector<8x64xf32>
    %462 = arith.mulf %446, %454 : vector<8x64xf32>
    %463 = arith.addf %461, %462 : vector<8x64xf32>
    %464 = math.tanh %463 : vector<8x64xf32>
    %465 = arith.mulf %460, %464 : vector<8x64xf32>
    %466 = arith.index_cast %434 : i32 to index
    %c0_146 = arith.constant 0 : index
    %c64_147 = arith.constant 64 : index
    %467 = vector.load %arg13[%466, %c0_146, %c64_147] : memref<8x8x128xf32, #tpu.memory_space<vmem>>, vector<1x8x64xf32>
    %468 = vector.shape_cast %467 : vector<1x8x64xf32> to vector<8x64xf32>
    %469 = vector.shape_cast %465 : vector<8x64xf32> to vector<1x8x64xf32>
    tpu.vector_store %arg13[%466, %c0_146, %c64_147], %469 {strides = array<i32>} : memref<8x8x128xf32, #tpu.memory_space<vmem>>, vector<1x8x64xf32>,
    %c5_i32_148 = arith.constant 5 : i32
    %c7_i32_149 = arith.constant 7 : i32
    %470 = arith.subi %c7_i32_149, %c5_i32_148 : i32
    %471 = arith.index_cast %470 : i32 to index
    %c0_150 = arith.constant 0 : index
    %c256_151 = arith.constant 256 : index
    %472 = vector.load %arg12[%471, %c0_150, %c256_151] : memref<8x8x512xf32, #tpu.memory_space<vmem>>, vector<1x8x256xf32>
    %473 = vector.shape_cast %472 : vector<1x8x256xf32> to vector<8x256xf32>
    %c0_152 = arith.constant 0 : index
    %c0_153 = arith.constant 0 : index
    %474 = vector.load %arg3[%c0_152, %c0_153] : memref<64x256xf32, #tpu.memory_space<vmem>>, vector<64x256xf32>
    %cst_154 = arith.constant dense<0.000000e+00> : vector<8x256xf32>
    %475 = tpu.matmul %465, %474, %cst_154 {dimension_numbers = #tpu.dot_dimension_numbers<[1], [0], [0], [1], [0, 0, 1, 1], [], []>} : vector<8x64xf32>, vector<64x256xf32>, vector<8x256xf32> -> vector<8x256xf32>
    %476 = arith.addf %473, %475 : vector<8x256xf32>
    %477 = vector.extract_strided_slice %476 {offsets = [0, 0], sizes = [8, 64], strides = [1, 1]} : vector<8x256xf32> to vector<8x64xf32>
    %478 = arith.negf %477 : vector<8x64xf32>
    %479 = math.exp %478 : vector<8x64xf32>
    %cst_155 = arith.constant 1.000000e+00 : f32
    %480 = vector.broadcast %cst_155 : f32 to vector<8x64xf32>
    %481 = arith.addf %480, %479 : vector<8x64xf32>
    %482 = arith.divf %480, %481 : vector<8x64xf32>
    %483 = vector.extract_strided_slice %476 {offsets = [0, 64], sizes = [8, 64], strides = [1, 1]} : vector<8x256xf32> to vector<8x64xf32>
    %484 = arith.negf %483 : vector<8x64xf32>
    %485 = math.exp %484 : vector<8x64xf32>
    %cst_156 = arith.constant 1.000000e+00 : f32
    %486 = vector.broadcast %cst_156 : f32 to vector<8x64xf32>
    %487 = arith.addf %486, %485 : vector<8x64xf32>
    %488 = arith.divf %486, %487 : vector<8x64xf32>
    %489 = vector.extract_strided_slice %476 {offsets = [0, 128], sizes = [8, 64], strides = [1, 1]} : vector<8x256xf32> to vector<8x64xf32>
    %490 = math.tanh %489 : vector<8x64xf32>
    %491 = vector.extract_strided_slice %476 {offsets = [0, 192], sizes = [8, 64], strides = [1, 1]} : vector<8x256xf32> to vector<8x64xf32>
    %492 = arith.negf %491 : vector<8x64xf32>
    %493 = math.exp %492 : vector<8x64xf32>
    %cst_157 = arith.constant 1.000000e+00 : f32
    %494 = vector.broadcast %cst_157 : f32 to vector<8x64xf32>
    %495 = arith.addf %494, %493 : vector<8x64xf32>
    %496 = arith.divf %494, %495 : vector<8x64xf32>
    %497 = arith.mulf %488, %463 : vector<8x64xf32>
    %498 = arith.mulf %482, %490 : vector<8x64xf32>
    %499 = arith.addf %497, %498 : vector<8x64xf32>
    %500 = math.tanh %499 : vector<8x64xf32>
    %501 = arith.mulf %496, %500 : vector<8x64xf32>
    %502 = arith.index_cast %470 : i32 to index
    %c0_158 = arith.constant 0 : index
    %c64_159 = arith.constant 64 : index
    %503 = vector.load %arg13[%502, %c0_158, %c64_159] : memref<8x8x128xf32, #tpu.memory_space<vmem>>, vector<1x8x64xf32>
    %504 = vector.shape_cast %503 : vector<1x8x64xf32> to vector<8x64xf32>
    %505 = vector.shape_cast %501 : vector<8x64xf32> to vector<1x8x64xf32>
    tpu.vector_store %arg13[%502, %c0_158, %c64_159], %505 {strides = array<i32>} : memref<8x8x128xf32, #tpu.memory_space<vmem>>, vector<1x8x64xf32>,
    %c6_i32_160 = arith.constant 6 : i32
    %c7_i32_161 = arith.constant 7 : i32
    %506 = arith.subi %c7_i32_161, %c6_i32_160 : i32
    %507 = arith.index_cast %506 : i32 to index
    %c0_162 = arith.constant 0 : index
    %c256_163 = arith.constant 256 : index
    %508 = vector.load %arg12[%507, %c0_162, %c256_163] : memref<8x8x512xf32, #tpu.memory_space<vmem>>, vector<1x8x256xf32>
    %509 = vector.shape_cast %508 : vector<1x8x256xf32> to vector<8x256xf32>
    %c0_164 = arith.constant 0 : index
    %c0_165 = arith.constant 0 : index
    %510 = vector.load %arg3[%c0_164, %c0_165] : memref<64x256xf32, #tpu.memory_space<vmem>>, vector<64x256xf32>
    %cst_166 = arith.constant dense<0.000000e+00> : vector<8x256xf32>
    %511 = tpu.matmul %501, %510, %cst_166 {dimension_numbers = #tpu.dot_dimension_numbers<[1], [0], [0], [1], [0, 0, 1, 1], [], []>} : vector<8x64xf32>, vector<64x256xf32>, vector<8x256xf32> -> vector<8x256xf32>
    %512 = arith.addf %509, %511 : vector<8x256xf32>
    %513 = vector.extract_strided_slice %512 {offsets = [0, 0], sizes = [8, 64], strides = [1, 1]} : vector<8x256xf32> to vector<8x64xf32>
    %514 = arith.negf %513 : vector<8x64xf32>
    %515 = math.exp %514 : vector<8x64xf32>
    %cst_167 = arith.constant 1.000000e+00 : f32
    %516 = vector.broadcast %cst_167 : f32 to vector<8x64xf32>
    %517 = arith.addf %516, %515 : vector<8x64xf32>
    %518 = arith.divf %516, %517 : vector<8x64xf32>
    %519 = vector.extract_strided_slice %512 {offsets = [0, 64], sizes = [8, 64], strides = [1, 1]} : vector<8x256xf32> to vector<8x64xf32>
    %520 = arith.negf %519 : vector<8x64xf32>
    %521 = math.exp %520 : vector<8x64xf32>
    %cst_168 = arith.constant 1.000000e+00 : f32
    %522 = vector.broadcast %cst_168 : f32 to vector<8x64xf32>
    %523 = arith.addf %522, %521 : vector<8x64xf32>
    %524 = arith.divf %522, %523 : vector<8x64xf32>
    %525 = vector.extract_strided_slice %512 {offsets = [0, 128], sizes = [8, 64], strides = [1, 1]} : vector<8x256xf32> to vector<8x64xf32>
    %526 = math.tanh %525 : vector<8x64xf32>
    %527 = vector.extract_strided_slice %512 {offsets = [0, 192], sizes = [8, 64], strides = [1, 1]} : vector<8x256xf32> to vector<8x64xf32>
    %528 = arith.negf %527 : vector<8x64xf32>
    %529 = math.exp %528 : vector<8x64xf32>
    %cst_169 = arith.constant 1.000000e+00 : f32
    %530 = vector.broadcast %cst_169 : f32 to vector<8x64xf32>
    %531 = arith.addf %530, %529 : vector<8x64xf32>
    %532 = arith.divf %530, %531 : vector<8x64xf32>
    %533 = arith.mulf %524, %499 : vector<8x64xf32>
    %534 = arith.mulf %518, %526 : vector<8x64xf32>
    %535 = arith.addf %533, %534 : vector<8x64xf32>
    %536 = math.tanh %535 : vector<8x64xf32>
    %537 = arith.mulf %532, %536 : vector<8x64xf32>
    %538 = arith.index_cast %506 : i32 to index
    %c0_170 = arith.constant 0 : index
    %c64_171 = arith.constant 64 : index
    %539 = vector.load %arg13[%538, %c0_170, %c64_171] : memref<8x8x128xf32, #tpu.memory_space<vmem>>, vector<1x8x64xf32>
    %540 = vector.shape_cast %539 : vector<1x8x64xf32> to vector<8x64xf32>
    %541 = vector.shape_cast %537 : vector<8x64xf32> to vector<1x8x64xf32>
    tpu.vector_store %arg13[%538, %c0_170, %c64_171], %541 {strides = array<i32>} : memref<8x8x128xf32, #tpu.memory_space<vmem>>, vector<1x8x64xf32>,
    %c7_i32_172 = arith.constant 7 : i32
    %c7_i32_173 = arith.constant 7 : i32
    %542 = arith.subi %c7_i32_173, %c7_i32_172 : i32
    %543 = arith.index_cast %542 : i32 to index
    %c0_174 = arith.constant 0 : index
    %c256_175 = arith.constant 256 : index
    %544 = vector.load %arg12[%543, %c0_174, %c256_175] : memref<8x8x512xf32, #tpu.memory_space<vmem>>, vector<1x8x256xf32>
    %545 = vector.shape_cast %544 : vector<1x8x256xf32> to vector<8x256xf32>
    %c0_176 = arith.constant 0 : index
    %c0_177 = arith.constant 0 : index
    %546 = vector.load %arg3[%c0_176, %c0_177] : memref<64x256xf32, #tpu.memory_space<vmem>>, vector<64x256xf32>
    %cst_178 = arith.constant dense<0.000000e+00> : vector<8x256xf32>
    %547 = tpu.matmul %537, %546, %cst_178 {dimension_numbers = #tpu.dot_dimension_numbers<[1], [0], [0], [1], [0, 0, 1, 1], [], []>} : vector<8x64xf32>, vector<64x256xf32>, vector<8x256xf32> -> vector<8x256xf32>
    %548 = arith.addf %545, %547 : vector<8x256xf32>
    %549 = vector.extract_strided_slice %548 {offsets = [0, 0], sizes = [8, 64], strides = [1, 1]} : vector<8x256xf32> to vector<8x64xf32>
    %550 = arith.negf %549 : vector<8x64xf32>
    %551 = math.exp %550 : vector<8x64xf32>
    %cst_179 = arith.constant 1.000000e+00 : f32
    %552 = vector.broadcast %cst_179 : f32 to vector<8x64xf32>
    %553 = arith.addf %552, %551 : vector<8x64xf32>
    %554 = arith.divf %552, %553 : vector<8x64xf32>
    %555 = vector.extract_strided_slice %548 {offsets = [0, 64], sizes = [8, 64], strides = [1, 1]} : vector<8x256xf32> to vector<8x64xf32>
    %556 = arith.negf %555 : vector<8x64xf32>
    %557 = math.exp %556 : vector<8x64xf32>
    %cst_180 = arith.constant 1.000000e+00 : f32
    %558 = vector.broadcast %cst_180 : f32 to vector<8x64xf32>
    %559 = arith.addf %558, %557 : vector<8x64xf32>
    %560 = arith.divf %558, %559 : vector<8x64xf32>
    %561 = vector.extract_strided_slice %548 {offsets = [0, 128], sizes = [8, 64], strides = [1, 1]} : vector<8x256xf32> to vector<8x64xf32>
    %562 = math.tanh %561 : vector<8x64xf32>
    %563 = vector.extract_strided_slice %548 {offsets = [0, 192], sizes = [8, 64], strides = [1, 1]} : vector<8x256xf32> to vector<8x64xf32>
    %564 = arith.negf %563 : vector<8x64xf32>
    %565 = math.exp %564 : vector<8x64xf32>
    %cst_181 = arith.constant 1.000000e+00 : f32
    %566 = vector.broadcast %cst_181 : f32 to vector<8x64xf32>
    %567 = arith.addf %566, %565 : vector<8x64xf32>
    %568 = arith.divf %566, %567 : vector<8x64xf32>
    %569 = arith.mulf %560, %535 : vector<8x64xf32>
    %570 = arith.mulf %554, %562 : vector<8x64xf32>
    %571 = arith.addf %569, %570 : vector<8x64xf32>
    %572 = math.tanh %571 : vector<8x64xf32>
    %573 = arith.mulf %568, %572 : vector<8x64xf32>
    %574 = arith.index_cast %542 : i32 to index
    %c0_182 = arith.constant 0 : index
    %c64_183 = arith.constant 64 : index
    %575 = vector.load %arg13[%574, %c0_182, %c64_183] : memref<8x8x128xf32, #tpu.memory_space<vmem>>, vector<1x8x64xf32>
    %576 = vector.shape_cast %575 : vector<1x8x64xf32> to vector<8x64xf32>
    %577 = vector.shape_cast %573 : vector<8x64xf32> to vector<1x8x64xf32>
    tpu.vector_store %arg13[%574, %c0_182, %c64_183], %577 {strides = array<i32>} : memref<8x8x128xf32, #tpu.memory_space<vmem>>, vector<1x8x64xf32>,
    %c8_i32_184 = arith.constant 8 : i32
    %c0_185 = arith.constant 0 : index
    %c0_186 = arith.constant 0 : index
    %c0_187 = arith.constant 0 : index
    %578 = vector.load %arg13[%c0_185, %c0_186, %c0_187] : memref<8x8x128xf32, #tpu.memory_space<vmem>>, vector<8x8x128xf32>
    %579 = vector.shape_cast %578 : vector<8x8x128xf32> to vector<64x128xf32>
    %c0_188 = arith.constant 0 : index
    %c0_189 = arith.constant 0 : index
    %580 = vector.load %arg5[%c0_188, %c0_189] : memref<128x256xf32, #tpu.memory_space<vmem>>, vector<128x256xf32>
    %cst_190 = arith.constant dense<0.000000e+00> : vector<64x256xf32>
    %581 = tpu.matmul %579, %580, %cst_190 {dimension_numbers = #tpu.dot_dimension_numbers<[1], [0], [0], [1], [0, 0, 1, 1], [], []>} : vector<64x128xf32>, vector<128x256xf32>, vector<64x256xf32> -> vector<64x256xf32>
    %c0_191 = arith.constant 0 : index
    %c0_192 = arith.constant 0 : index
    %582 = vector.load %arg8[%c0_191, %c0_192] : memref<1x256xf32, #tpu.memory_space<vmem>>, vector<1x256xf32>
    %583 = vector.broadcast %582 : vector<1x256xf32> to vector<64x256xf32>
    %584 = arith.addf %581, %583 : vector<64x256xf32>
    %585 = vector.shape_cast %584 : vector<64x256xf32> to vector<8x8x256xf32>
    %c0_193 = arith.constant 0 : index
    %c0_194 = arith.constant 0 : index
    %c0_195 = arith.constant 0 : index
    %586 = vector.load %arg14[%c0_193, %c0_194, %c0_195] : memref<8x8x256xf32, #tpu.memory_space<vmem>>, vector<8x8x256xf32>
    tpu.vector_store %arg14[%c0_193, %c0_194, %c0_195], %585 {strides = array<i32>} : memref<8x8x256xf32, #tpu.memory_space<vmem>>, vector<8x8x256xf32>,
    %cst_196 = arith.constant 0.000000e+00 : f32
    %587 = vector.broadcast %cst_196 : f32 to vector<8x32xf32>
    %c0_i32_197 = arith.constant 0 : i32
    %588 = arith.index_cast %c0_i32_197 : i32 to index
    %c0_198 = arith.constant 0 : index
    %c0_199 = arith.constant 0 : index
    %589 = vector.load %arg14[%588, %c0_198, %c0_199] : memref<8x8x256xf32, #tpu.memory_space<vmem>>, vector<1x8x128xf32>
    %590 = vector.shape_cast %589 : vector<1x8x128xf32> to vector<8x128xf32>
    %c0_200 = arith.constant 0 : index
    %c0_201 = arith.constant 0 : index
    %591 = vector.load %arg6[%c0_200, %c0_201] : memref<32x128xf32, #tpu.memory_space<vmem>>, vector<32x128xf32>
    %cst_202 = arith.constant dense<0.000000e+00> : vector<8x128xf32>
    %592 = tpu.matmul %587, %591, %cst_202 {dimension_numbers = #tpu.dot_dimension_numbers<[1], [0], [0], [1], [0, 0, 1, 1], [], []>} : vector<8x32xf32>, vector<32x128xf32>, vector<8x128xf32> -> vector<8x128xf32>
    %593 = arith.addf %590, %592 : vector<8x128xf32>
    %594 = vector.extract_strided_slice %593 {offsets = [0, 0], sizes = [8, 32], strides = [1, 1]} : vector<8x128xf32> to vector<8x32xf32>
    %595 = arith.negf %594 : vector<8x32xf32>
    %596 = math.exp %595 : vector<8x32xf32>
    %cst_203 = arith.constant 1.000000e+00 : f32
    %597 = vector.broadcast %cst_203 : f32 to vector<8x32xf32>
    %598 = arith.addf %597, %596 : vector<8x32xf32>
    %599 = arith.divf %597, %598 : vector<8x32xf32>
    %600 = vector.extract_strided_slice %593 {offsets = [0, 32], sizes = [8, 32], strides = [1, 1]} : vector<8x128xf32> to vector<8x32xf32>
    %601 = arith.negf %600 : vector<8x32xf32>
    %602 = math.exp %601 : vector<8x32xf32>
    %cst_204 = arith.constant 1.000000e+00 : f32
    %603 = vector.broadcast %cst_204 : f32 to vector<8x32xf32>
    %604 = arith.addf %603, %602 : vector<8x32xf32>
    %605 = arith.divf %603, %604 : vector<8x32xf32>
    %606 = vector.extract_strided_slice %593 {offsets = [0, 64], sizes = [8, 32], strides = [1, 1]} : vector<8x128xf32> to vector<8x32xf32>
    %607 = math.tanh %606 : vector<8x32xf32>
    %608 = vector.extract_strided_slice %593 {offsets = [0, 96], sizes = [8, 32], strides = [1, 1]} : vector<8x128xf32> to vector<8x32xf32>
    %609 = arith.negf %608 : vector<8x32xf32>
    %610 = math.exp %609 : vector<8x32xf32>
    %cst_205 = arith.constant 1.000000e+00 : f32
    %611 = vector.broadcast %cst_205 : f32 to vector<8x32xf32>
    %612 = arith.addf %611, %610 : vector<8x32xf32>
    %613 = arith.divf %611, %612 : vector<8x32xf32>
    %614 = arith.mulf %605, %587 : vector<8x32xf32>
    %615 = arith.mulf %599, %607 : vector<8x32xf32>
    %616 = arith.addf %614, %615 : vector<8x32xf32>
    %617 = math.tanh %616 : vector<8x32xf32>
    %618 = arith.mulf %613, %617 : vector<8x32xf32>
    %c1_i32_206 = arith.constant 1 : i32
    %619 = arith.index_cast %c1_i32_206 : i32 to index
    %c0_207 = arith.constant 0 : index
    %c0_208 = arith.constant 0 : index
    %620 = vector.load %arg14[%619, %c0_207, %c0_208] : memref<8x8x256xf32, #tpu.memory_space<vmem>>, vector<1x8x128xf32>
    %621 = vector.shape_cast %620 : vector<1x8x128xf32> to vector<8x128xf32>
    %c0_209 = arith.constant 0 : index
    %c0_210 = arith.constant 0 : index
    %622 = vector.load %arg6[%c0_209, %c0_210] : memref<32x128xf32, #tpu.memory_space<vmem>>, vector<32x128xf32>
    %cst_211 = arith.constant dense<0.000000e+00> : vector<8x128xf32>
    %623 = tpu.matmul %618, %622, %cst_211 {dimension_numbers = #tpu.dot_dimension_numbers<[1], [0], [0], [1], [0, 0, 1, 1], [], []>} : vector<8x32xf32>, vector<32x128xf32>, vector<8x128xf32> -> vector<8x128xf32>
    %624 = arith.addf %621, %623 : vector<8x128xf32>
    %625 = vector.extract_strided_slice %624 {offsets = [0, 0], sizes = [8, 32], strides = [1, 1]} : vector<8x128xf32> to vector<8x32xf32>
    %626 = arith.negf %625 : vector<8x32xf32>
    %627 = math.exp %626 : vector<8x32xf32>
    %cst_212 = arith.constant 1.000000e+00 : f32
    %628 = vector.broadcast %cst_212 : f32 to vector<8x32xf32>
    %629 = arith.addf %628, %627 : vector<8x32xf32>
    %630 = arith.divf %628, %629 : vector<8x32xf32>
    %631 = vector.extract_strided_slice %624 {offsets = [0, 32], sizes = [8, 32], strides = [1, 1]} : vector<8x128xf32> to vector<8x32xf32>
    %632 = arith.negf %631 : vector<8x32xf32>
    %633 = math.exp %632 : vector<8x32xf32>
    %cst_213 = arith.constant 1.000000e+00 : f32
    %634 = vector.broadcast %cst_213 : f32 to vector<8x32xf32>
    %635 = arith.addf %634, %633 : vector<8x32xf32>
    %636 = arith.divf %634, %635 : vector<8x32xf32>
    %637 = vector.extract_strided_slice %624 {offsets = [0, 64], sizes = [8, 32], strides = [1, 1]} : vector<8x128xf32> to vector<8x32xf32>
    %638 = math.tanh %637 : vector<8x32xf32>
    %639 = vector.extract_strided_slice %624 {offsets = [0, 96], sizes = [8, 32], strides = [1, 1]} : vector<8x128xf32> to vector<8x32xf32>
    %640 = arith.negf %639 : vector<8x32xf32>
    %641 = math.exp %640 : vector<8x32xf32>
    %cst_214 = arith.constant 1.000000e+00 : f32
    %642 = vector.broadcast %cst_214 : f32 to vector<8x32xf32>
    %643 = arith.addf %642, %641 : vector<8x32xf32>
    %644 = arith.divf %642, %643 : vector<8x32xf32>
    %645 = arith.mulf %636, %616 : vector<8x32xf32>
    %646 = arith.mulf %630, %638 : vector<8x32xf32>
    %647 = arith.addf %645, %646 : vector<8x32xf32>
    %648 = math.tanh %647 : vector<8x32xf32>
    %649 = arith.mulf %644, %648 : vector<8x32xf32>
    %c2_i32_215 = arith.constant 2 : i32
    %650 = arith.index_cast %c2_i32_215 : i32 to index
    %c0_216 = arith.constant 0 : index
    %c0_217 = arith.constant 0 : index
    %651 = vector.load %arg14[%650, %c0_216, %c0_217] : memref<8x8x256xf32, #tpu.memory_space<vmem>>, vector<1x8x128xf32>
    %652 = vector.shape_cast %651 : vector<1x8x128xf32> to vector<8x128xf32>
    %c0_218 = arith.constant 0 : index
    %c0_219 = arith.constant 0 : index
    %653 = vector.load %arg6[%c0_218, %c0_219] : memref<32x128xf32, #tpu.memory_space<vmem>>, vector<32x128xf32>
    %cst_220 = arith.constant dense<0.000000e+00> : vector<8x128xf32>
    %654 = tpu.matmul %649, %653, %cst_220 {dimension_numbers = #tpu.dot_dimension_numbers<[1], [0], [0], [1], [0, 0, 1, 1], [], []>} : vector<8x32xf32>, vector<32x128xf32>, vector<8x128xf32> -> vector<8x128xf32>
    %655 = arith.addf %652, %654 : vector<8x128xf32>
    %656 = vector.extract_strided_slice %655 {offsets = [0, 0], sizes = [8, 32], strides = [1, 1]} : vector<8x128xf32> to vector<8x32xf32>
    %657 = arith.negf %656 : vector<8x32xf32>
    %658 = math.exp %657 : vector<8x32xf32>
    %cst_221 = arith.constant 1.000000e+00 : f32
    %659 = vector.broadcast %cst_221 : f32 to vector<8x32xf32>
    %660 = arith.addf %659, %658 : vector<8x32xf32>
    %661 = arith.divf %659, %660 : vector<8x32xf32>
    %662 = vector.extract_strided_slice %655 {offsets = [0, 32], sizes = [8, 32], strides = [1, 1]} : vector<8x128xf32> to vector<8x32xf32>
    %663 = arith.negf %662 : vector<8x32xf32>
    %664 = math.exp %663 : vector<8x32xf32>
    %cst_222 = arith.constant 1.000000e+00 : f32
    %665 = vector.broadcast %cst_222 : f32 to vector<8x32xf32>
    %666 = arith.addf %665, %664 : vector<8x32xf32>
    %667 = arith.divf %665, %666 : vector<8x32xf32>
    %668 = vector.extract_strided_slice %655 {offsets = [0, 64], sizes = [8, 32], strides = [1, 1]} : vector<8x128xf32> to vector<8x32xf32>
    %669 = math.tanh %668 : vector<8x32xf32>
    %670 = vector.extract_strided_slice %655 {offsets = [0, 96], sizes = [8, 32], strides = [1, 1]} : vector<8x128xf32> to vector<8x32xf32>
    %671 = arith.negf %670 : vector<8x32xf32>
    %672 = math.exp %671 : vector<8x32xf32>
    %cst_223 = arith.constant 1.000000e+00 : f32
    %673 = vector.broadcast %cst_223 : f32 to vector<8x32xf32>
    %674 = arith.addf %673, %672 : vector<8x32xf32>
    %675 = arith.divf %673, %674 : vector<8x32xf32>
    %676 = arith.mulf %667, %647 : vector<8x32xf32>
    %677 = arith.mulf %661, %669 : vector<8x32xf32>
    %678 = arith.addf %676, %677 : vector<8x32xf32>
    %679 = math.tanh %678 : vector<8x32xf32>
    %680 = arith.mulf %675, %679 : vector<8x32xf32>
    %c3_i32_224 = arith.constant 3 : i32
    %681 = arith.index_cast %c3_i32_224 : i32 to index
    %c0_225 = arith.constant 0 : index
    %c0_226 = arith.constant 0 : index
    %682 = vector.load %arg14[%681, %c0_225, %c0_226] : memref<8x8x256xf32, #tpu.memory_space<vmem>>, vector<1x8x128xf32>
    %683 = vector.shape_cast %682 : vector<1x8x128xf32> to vector<8x128xf32>
    %c0_227 = arith.constant 0 : index
    %c0_228 = arith.constant 0 : index
    %684 = vector.load %arg6[%c0_227, %c0_228] : memref<32x128xf32, #tpu.memory_space<vmem>>, vector<32x128xf32>
    %cst_229 = arith.constant dense<0.000000e+00> : vector<8x128xf32>
    %685 = tpu.matmul %680, %684, %cst_229 {dimension_numbers = #tpu.dot_dimension_numbers<[1], [0], [0], [1], [0, 0, 1, 1], [], []>} : vector<8x32xf32>, vector<32x128xf32>, vector<8x128xf32> -> vector<8x128xf32>
    %686 = arith.addf %683, %685 : vector<8x128xf32>
    %687 = vector.extract_strided_slice %686 {offsets = [0, 0], sizes = [8, 32], strides = [1, 1]} : vector<8x128xf32> to vector<8x32xf32>
    %688 = arith.negf %687 : vector<8x32xf32>
    %689 = math.exp %688 : vector<8x32xf32>
    %cst_230 = arith.constant 1.000000e+00 : f32
    %690 = vector.broadcast %cst_230 : f32 to vector<8x32xf32>
    %691 = arith.addf %690, %689 : vector<8x32xf32>
    %692 = arith.divf %690, %691 : vector<8x32xf32>
    %693 = vector.extract_strided_slice %686 {offsets = [0, 32], sizes = [8, 32], strides = [1, 1]} : vector<8x128xf32> to vector<8x32xf32>
    %694 = arith.negf %693 : vector<8x32xf32>
    %695 = math.exp %694 : vector<8x32xf32>
    %cst_231 = arith.constant 1.000000e+00 : f32
    %696 = vector.broadcast %cst_231 : f32 to vector<8x32xf32>
    %697 = arith.addf %696, %695 : vector<8x32xf32>
    %698 = arith.divf %696, %697 : vector<8x32xf32>
    %699 = vector.extract_strided_slice %686 {offsets = [0, 64], sizes = [8, 32], strides = [1, 1]} : vector<8x128xf32> to vector<8x32xf32>
    %700 = math.tanh %699 : vector<8x32xf32>
    %701 = vector.extract_strided_slice %686 {offsets = [0, 96], sizes = [8, 32], strides = [1, 1]} : vector<8x128xf32> to vector<8x32xf32>
    %702 = arith.negf %701 : vector<8x32xf32>
    %703 = math.exp %702 : vector<8x32xf32>
    %cst_232 = arith.constant 1.000000e+00 : f32
    %704 = vector.broadcast %cst_232 : f32 to vector<8x32xf32>
    %705 = arith.addf %704, %703 : vector<8x32xf32>
    %706 = arith.divf %704, %705 : vector<8x32xf32>
    %707 = arith.mulf %698, %678 : vector<8x32xf32>
    %708 = arith.mulf %692, %700 : vector<8x32xf32>
    %709 = arith.addf %707, %708 : vector<8x32xf32>
    %710 = math.tanh %709 : vector<8x32xf32>
    %711 = arith.mulf %706, %710 : vector<8x32xf32>
    %c4_i32_233 = arith.constant 4 : i32
    %712 = arith.index_cast %c4_i32_233 : i32 to index
    %c0_234 = arith.constant 0 : index
    %c0_235 = arith.constant 0 : index
    %713 = vector.load %arg14[%712, %c0_234, %c0_235] : memref<8x8x256xf32, #tpu.memory_space<vmem>>, vector<1x8x128xf32>
    %714 = vector.shape_cast %713 : vector<1x8x128xf32> to vector<8x128xf32>
    %c0_236 = arith.constant 0 : index
    %c0_237 = arith.constant 0 : index
    %715 = vector.load %arg6[%c0_236, %c0_237] : memref<32x128xf32, #tpu.memory_space<vmem>>, vector<32x128xf32>
    %cst_238 = arith.constant dense<0.000000e+00> : vector<8x128xf32>
    %716 = tpu.matmul %711, %715, %cst_238 {dimension_numbers = #tpu.dot_dimension_numbers<[1], [0], [0], [1], [0, 0, 1, 1], [], []>} : vector<8x32xf32>, vector<32x128xf32>, vector<8x128xf32> -> vector<8x128xf32>
    %717 = arith.addf %714, %716 : vector<8x128xf32>
    %718 = vector.extract_strided_slice %717 {offsets = [0, 0], sizes = [8, 32], strides = [1, 1]} : vector<8x128xf32> to vector<8x32xf32>
    %719 = arith.negf %718 : vector<8x32xf32>
    %720 = math.exp %719 : vector<8x32xf32>
    %cst_239 = arith.constant 1.000000e+00 : f32
    %721 = vector.broadcast %cst_239 : f32 to vector<8x32xf32>
    %722 = arith.addf %721, %720 : vector<8x32xf32>
    %723 = arith.divf %721, %722 : vector<8x32xf32>
    %724 = vector.extract_strided_slice %717 {offsets = [0, 32], sizes = [8, 32], strides = [1, 1]} : vector<8x128xf32> to vector<8x32xf32>
    %725 = arith.negf %724 : vector<8x32xf32>
    %726 = math.exp %725 : vector<8x32xf32>
    %cst_240 = arith.constant 1.000000e+00 : f32
    %727 = vector.broadcast %cst_240 : f32 to vector<8x32xf32>
    %728 = arith.addf %727, %726 : vector<8x32xf32>
    %729 = arith.divf %727, %728 : vector<8x32xf32>
    %730 = vector.extract_strided_slice %717 {offsets = [0, 64], sizes = [8, 32], strides = [1, 1]} : vector<8x128xf32> to vector<8x32xf32>
    %731 = math.tanh %730 : vector<8x32xf32>
    %732 = vector.extract_strided_slice %717 {offsets = [0, 96], sizes = [8, 32], strides = [1, 1]} : vector<8x128xf32> to vector<8x32xf32>
    %733 = arith.negf %732 : vector<8x32xf32>
    %734 = math.exp %733 : vector<8x32xf32>
    %cst_241 = arith.constant 1.000000e+00 : f32
    %735 = vector.broadcast %cst_241 : f32 to vector<8x32xf32>
    %736 = arith.addf %735, %734 : vector<8x32xf32>
    %737 = arith.divf %735, %736 : vector<8x32xf32>
    %738 = arith.mulf %729, %709 : vector<8x32xf32>
    %739 = arith.mulf %723, %731 : vector<8x32xf32>
    %740 = arith.addf %738, %739 : vector<8x32xf32>
    %741 = math.tanh %740 : vector<8x32xf32>
    %742 = arith.mulf %737, %741 : vector<8x32xf32>
    %c5_i32_242 = arith.constant 5 : i32
    %743 = arith.index_cast %c5_i32_242 : i32 to index
    %c0_243 = arith.constant 0 : index
    %c0_244 = arith.constant 0 : index
    %744 = vector.load %arg14[%743, %c0_243, %c0_244] : memref<8x8x256xf32, #tpu.memory_space<vmem>>, vector<1x8x128xf32>
    %745 = vector.shape_cast %744 : vector<1x8x128xf32> to vector<8x128xf32>
    %c0_245 = arith.constant 0 : index
    %c0_246 = arith.constant 0 : index
    %746 = vector.load %arg6[%c0_245, %c0_246] : memref<32x128xf32, #tpu.memory_space<vmem>>, vector<32x128xf32>
    %cst_247 = arith.constant dense<0.000000e+00> : vector<8x128xf32>
    %747 = tpu.matmul %742, %746, %cst_247 {dimension_numbers = #tpu.dot_dimension_numbers<[1], [0], [0], [1], [0, 0, 1, 1], [], []>} : vector<8x32xf32>, vector<32x128xf32>, vector<8x128xf32> -> vector<8x128xf32>
    %748 = arith.addf %745, %747 : vector<8x128xf32>
    %749 = vector.extract_strided_slice %748 {offsets = [0, 0], sizes = [8, 32], strides = [1, 1]} : vector<8x128xf32> to vector<8x32xf32>
    %750 = arith.negf %749 : vector<8x32xf32>
    %751 = math.exp %750 : vector<8x32xf32>
    %cst_248 = arith.constant 1.000000e+00 : f32
    %752 = vector.broadcast %cst_248 : f32 to vector<8x32xf32>
    %753 = arith.addf %752, %751 : vector<8x32xf32>
    %754 = arith.divf %752, %753 : vector<8x32xf32>
    %755 = vector.extract_strided_slice %748 {offsets = [0, 32], sizes = [8, 32], strides = [1, 1]} : vector<8x128xf32> to vector<8x32xf32>
    %756 = arith.negf %755 : vector<8x32xf32>
    %757 = math.exp %756 : vector<8x32xf32>
    %cst_249 = arith.constant 1.000000e+00 : f32
    %758 = vector.broadcast %cst_249 : f32 to vector<8x32xf32>
    %759 = arith.addf %758, %757 : vector<8x32xf32>
    %760 = arith.divf %758, %759 : vector<8x32xf32>
    %761 = vector.extract_strided_slice %748 {offsets = [0, 64], sizes = [8, 32], strides = [1, 1]} : vector<8x128xf32> to vector<8x32xf32>
    %762 = math.tanh %761 : vector<8x32xf32>
    %763 = vector.extract_strided_slice %748 {offsets = [0, 96], sizes = [8, 32], strides = [1, 1]} : vector<8x128xf32> to vector<8x32xf32>
    %764 = arith.negf %763 : vector<8x32xf32>
    %765 = math.exp %764 : vector<8x32xf32>
    %cst_250 = arith.constant 1.000000e+00 : f32
    %766 = vector.broadcast %cst_250 : f32 to vector<8x32xf32>
    %767 = arith.addf %766, %765 : vector<8x32xf32>
    %768 = arith.divf %766, %767 : vector<8x32xf32>
    %769 = arith.mulf %760, %740 : vector<8x32xf32>
    %770 = arith.mulf %754, %762 : vector<8x32xf32>
    %771 = arith.addf %769, %770 : vector<8x32xf32>
    %772 = math.tanh %771 : vector<8x32xf32>
    %773 = arith.mulf %768, %772 : vector<8x32xf32>
    %c6_i32_251 = arith.constant 6 : i32
    %774 = arith.index_cast %c6_i32_251 : i32 to index
    %c0_252 = arith.constant 0 : index
    %c0_253 = arith.constant 0 : index
    %775 = vector.load %arg14[%774, %c0_252, %c0_253] : memref<8x8x256xf32, #tpu.memory_space<vmem>>, vector<1x8x128xf32>
    %776 = vector.shape_cast %775 : vector<1x8x128xf32> to vector<8x128xf32>
    %c0_254 = arith.constant 0 : index
    %c0_255 = arith.constant 0 : index
    %777 = vector.load %arg6[%c0_254, %c0_255] : memref<32x128xf32, #tpu.memory_space<vmem>>, vector<32x128xf32>
    %cst_256 = arith.constant dense<0.000000e+00> : vector<8x128xf32>
    %778 = tpu.matmul %773, %777, %cst_256 {dimension_numbers = #tpu.dot_dimension_numbers<[1], [0], [0], [1], [0, 0, 1, 1], [], []>} : vector<8x32xf32>, vector<32x128xf32>, vector<8x128xf32> -> vector<8x128xf32>
    %779 = arith.addf %776, %778 : vector<8x128xf32>
    %780 = vector.extract_strided_slice %779 {offsets = [0, 0], sizes = [8, 32], strides = [1, 1]} : vector<8x128xf32> to vector<8x32xf32>
    %781 = arith.negf %780 : vector<8x32xf32>
    %782 = math.exp %781 : vector<8x32xf32>
    %cst_257 = arith.constant 1.000000e+00 : f32
    %783 = vector.broadcast %cst_257 : f32 to vector<8x32xf32>
    %784 = arith.addf %783, %782 : vector<8x32xf32>
    %785 = arith.divf %783, %784 : vector<8x32xf32>
    %786 = vector.extract_strided_slice %779 {offsets = [0, 32], sizes = [8, 32], strides = [1, 1]} : vector<8x128xf32> to vector<8x32xf32>
    %787 = arith.negf %786 : vector<8x32xf32>
    %788 = math.exp %787 : vector<8x32xf32>
    %cst_258 = arith.constant 1.000000e+00 : f32
    %789 = vector.broadcast %cst_258 : f32 to vector<8x32xf32>
    %790 = arith.addf %789, %788 : vector<8x32xf32>
    %791 = arith.divf %789, %790 : vector<8x32xf32>
    %792 = vector.extract_strided_slice %779 {offsets = [0, 64], sizes = [8, 32], strides = [1, 1]} : vector<8x128xf32> to vector<8x32xf32>
    %793 = math.tanh %792 : vector<8x32xf32>
    %794 = vector.extract_strided_slice %779 {offsets = [0, 96], sizes = [8, 32], strides = [1, 1]} : vector<8x128xf32> to vector<8x32xf32>
    %795 = arith.negf %794 : vector<8x32xf32>
    %796 = math.exp %795 : vector<8x32xf32>
    %cst_259 = arith.constant 1.000000e+00 : f32
    %797 = vector.broadcast %cst_259 : f32 to vector<8x32xf32>
    %798 = arith.addf %797, %796 : vector<8x32xf32>
    %799 = arith.divf %797, %798 : vector<8x32xf32>
    %800 = arith.mulf %791, %771 : vector<8x32xf32>
    %801 = arith.mulf %785, %793 : vector<8x32xf32>
    %802 = arith.addf %800, %801 : vector<8x32xf32>
    %803 = math.tanh %802 : vector<8x32xf32>
    %804 = arith.mulf %799, %803 : vector<8x32xf32>
    %c7_i32_260 = arith.constant 7 : i32
    %805 = arith.index_cast %c7_i32_260 : i32 to index
    %c0_261 = arith.constant 0 : index
    %c0_262 = arith.constant 0 : index
    %806 = vector.load %arg14[%805, %c0_261, %c0_262] : memref<8x8x256xf32, #tpu.memory_space<vmem>>, vector<1x8x128xf32>
    %807 = vector.shape_cast %806 : vector<1x8x128xf32> to vector<8x128xf32>
    %c0_263 = arith.constant 0 : index
    %c0_264 = arith.constant 0 : index
    %808 = vector.load %arg6[%c0_263, %c0_264] : memref<32x128xf32, #tpu.memory_space<vmem>>, vector<32x128xf32>
    %cst_265 = arith.constant dense<0.000000e+00> : vector<8x128xf32>
    %809 = tpu.matmul %804, %808, %cst_265 {dimension_numbers = #tpu.dot_dimension_numbers<[1], [0], [0], [1], [0, 0, 1, 1], [], []>} : vector<8x32xf32>, vector<32x128xf32>, vector<8x128xf32> -> vector<8x128xf32>
    %810 = arith.addf %807, %809 : vector<8x128xf32>
    %811 = vector.extract_strided_slice %810 {offsets = [0, 0], sizes = [8, 32], strides = [1, 1]} : vector<8x128xf32> to vector<8x32xf32>
    %812 = arith.negf %811 : vector<8x32xf32>
    %813 = math.exp %812 : vector<8x32xf32>
    %cst_266 = arith.constant 1.000000e+00 : f32
    %814 = vector.broadcast %cst_266 : f32 to vector<8x32xf32>
    %815 = arith.addf %814, %813 : vector<8x32xf32>
    %816 = arith.divf %814, %815 : vector<8x32xf32>
    %817 = vector.extract_strided_slice %810 {offsets = [0, 32], sizes = [8, 32], strides = [1, 1]} : vector<8x128xf32> to vector<8x32xf32>
    %818 = arith.negf %817 : vector<8x32xf32>
    %819 = math.exp %818 : vector<8x32xf32>
    %cst_267 = arith.constant 1.000000e+00 : f32
    %820 = vector.broadcast %cst_267 : f32 to vector<8x32xf32>
    %821 = arith.addf %820, %819 : vector<8x32xf32>
    %822 = arith.divf %820, %821 : vector<8x32xf32>
    %823 = vector.extract_strided_slice %810 {offsets = [0, 64], sizes = [8, 32], strides = [1, 1]} : vector<8x128xf32> to vector<8x32xf32>
    %824 = math.tanh %823 : vector<8x32xf32>
    %825 = vector.extract_strided_slice %810 {offsets = [0, 96], sizes = [8, 32], strides = [1, 1]} : vector<8x128xf32> to vector<8x32xf32>
    %826 = arith.negf %825 : vector<8x32xf32>
    %827 = math.exp %826 : vector<8x32xf32>
    %cst_268 = arith.constant 1.000000e+00 : f32
    %828 = vector.broadcast %cst_268 : f32 to vector<8x32xf32>
    %829 = arith.addf %828, %827 : vector<8x32xf32>
    %830 = arith.divf %828, %829 : vector<8x32xf32>
    %831 = arith.mulf %822, %802 : vector<8x32xf32>
    %832 = arith.mulf %816, %824 : vector<8x32xf32>
    %833 = arith.addf %831, %832 : vector<8x32xf32>
    %834 = math.tanh %833 : vector<8x32xf32>
    %835 = arith.mulf %830, %834 : vector<8x32xf32>
    %c8_i32_269 = arith.constant 8 : i32
    %c7 = arith.constant 7 : index
    %c0_270 = arith.constant 0 : index
    %c128 = arith.constant 128 : index
    %836 = vector.load %arg14[%c7, %c0_270, %c128] : memref<8x8x256xf32, #tpu.memory_space<vmem>>, vector<1x8x128xf32>
    %837 = vector.shape_cast %836 : vector<1x8x128xf32> to vector<8x128xf32>
    %838 = vector.extract_strided_slice %837 {offsets = [0, 0], sizes = [8, 32], strides = [1, 1]} : vector<8x128xf32> to vector<8x32xf32>
    %839 = arith.negf %838 : vector<8x32xf32>
    %840 = math.exp %839 : vector<8x32xf32>
    %cst_271 = arith.constant 1.000000e+00 : f32
    %841 = vector.broadcast %cst_271 : f32 to vector<8x32xf32>
    %842 = arith.addf %841, %840 : vector<8x32xf32>
    %843 = arith.divf %841, %842 : vector<8x32xf32>
    %844 = vector.extract_strided_slice %837 {offsets = [0, 32], sizes = [8, 32], strides = [1, 1]} : vector<8x128xf32> to vector<8x32xf32>
    %845 = arith.negf %844 : vector<8x32xf32>
    %846 = math.exp %845 : vector<8x32xf32>
    %cst_272 = arith.constant 1.000000e+00 : f32
    %847 = vector.broadcast %cst_272 : f32 to vector<8x32xf32>
    %848 = arith.addf %847, %846 : vector<8x32xf32>
    %849 = arith.divf %847, %848 : vector<8x32xf32>
    %850 = vector.extract_strided_slice %837 {offsets = [0, 64], sizes = [8, 32], strides = [1, 1]} : vector<8x128xf32> to vector<8x32xf32>
    %851 = math.tanh %850 : vector<8x32xf32>
    %852 = vector.extract_strided_slice %837 {offsets = [0, 96], sizes = [8, 32], strides = [1, 1]} : vector<8x128xf32> to vector<8x32xf32>
    %853 = arith.negf %852 : vector<8x32xf32>
    %854 = math.exp %853 : vector<8x32xf32>
    %cst_273 = arith.constant 1.000000e+00 : f32
    %855 = vector.broadcast %cst_273 : f32 to vector<8x32xf32>
    %856 = arith.addf %855, %854 : vector<8x32xf32>
    %857 = arith.divf %855, %856 : vector<8x32xf32>
    %858 = arith.mulf %849, %587 : vector<8x32xf32>
    %859 = arith.mulf %843, %851 : vector<8x32xf32>
    %860 = arith.addf %858, %859 : vector<8x32xf32>
    %861 = math.tanh %860 : vector<8x32xf32>
    %862 = arith.mulf %857, %861 : vector<8x32xf32>
    %c0_274 = arith.constant 0 : index
    %c0_275 = arith.constant 0 : index
    %863 = vector.load %arg9[%c0_274, %c0_275] : memref<64x128xf32, #tpu.memory_space<vmem>>, vector<32x128xf32>
    %cst_276 = arith.constant dense<0.000000e+00> : vector<8x128xf32>
    %864 = tpu.matmul %835, %863, %cst_276 {dimension_numbers = #tpu.dot_dimension_numbers<[1], [0], [0], [1], [0, 0, 1, 1], [], []>} : vector<8x32xf32>, vector<32x128xf32>, vector<8x128xf32> -> vector<8x128xf32>
    %c32 = arith.constant 32 : index
    %c0_277 = arith.constant 0 : index
    %865 = vector.load %arg9[%c32, %c0_277] : memref<64x128xf32, #tpu.memory_space<vmem>>, vector<32x128xf32>
    %cst_278 = arith.constant dense<0.000000e+00> : vector<8x128xf32>
    %866 = tpu.matmul %862, %865, %cst_278 {dimension_numbers = #tpu.dot_dimension_numbers<[1], [0], [0], [1], [0, 0, 1, 1], [], []>} : vector<8x32xf32>, vector<32x128xf32>, vector<8x128xf32> -> vector<8x128xf32>
    %867 = arith.addf %864, %866 : vector<8x128xf32>
    %c0_279 = arith.constant 0 : index
    %c0_280 = arith.constant 0 : index
    %868 = vector.load %arg10[%c0_279, %c0_280] : memref<1x128xf32, #tpu.memory_space<vmem>>, vector<1x128xf32>
    %869 = vector.broadcast %868 : vector<1x128xf32> to vector<8x128xf32>
    %870 = arith.addf %867, %869 : vector<8x128xf32>
    %c0_281 = arith.constant 0 : index
    %c0_282 = arith.constant 0 : index
    %871 = vector.load %arg11[%c0_281, %c0_282] : memref<8x128xf32, #tpu.memory_space<vmem>>, vector<8x128xf32>
    tpu.vector_store %arg11[%c0_281, %c0_282], %870 {strides = array<i32>} : memref<8x128xf32, #tpu.memory_space<vmem>>, vector<8x128xf32>,
    return
  }
}

</mosaic_0001>

<llo_original>
// kernel: action_recognition_forward.1
$region0: #{action_recognition_forward.1}
  #allocation0 [shape = 'u32[]', space=smem, size = 0x4, offset = 0x4, fixed_abs, tag = 'smem constant byte address 0x4 - core index']
  #allocation1 [shape = 'u32[144,128]{1,0:T(1,128)}', space=vmem, size = 0x12000, scoped, tag = 'internal scratch']
  #allocation2 [shape = 'f32[8,8,512]{2,1,0:T(8,128)}', space=vmem, size = 0x20000, scoped, tag = 'scratch operand']
  #allocation3 [shape = 'f32[8,8,128]{2,1,0:T(8,128)}', space=vmem, size = 0x8000, scoped, tag = 'scratch operand']
  #allocation4 [shape = 'f32[8,8,256]{2,1,0:T(8,128)}', space=vmem, size = 0x10000, scoped, tag = 'scratch operand']
  %s0 = inlined_call_operand.vmem [shape: f32[8,8,16], index: 0, kind: input, shape index: {}]
  %s1 = inlined_call_operand.hbm [shape: f32[16,512], index: 1, kind: input, shape index: {}]
  %s2 = inlined_call_operand.vmem [shape: f32[64,256], index: 2, kind: input, shape index: {}]
  %s3 = inlined_call_operand.hbm [shape: f32[64,256], index: 3, kind: input, shape index: {}]
  %s4 = inlined_call_operand.hbm [shape: f32[1,512], index: 4, kind: input, shape index: {}]
  %s5 = inlined_call_operand.hbm [shape: f32[128,256], index: 5, kind: input, shape index: {}]
  %s6 = inlined_call_operand.hbm [shape: f32[32,128], index: 6, kind: input, shape index: {}]
  %s7 = inlined_call_operand.hbm [shape: f32[32,128], index: 7, kind: input, shape index: {}]
  %s8 = inlined_call_operand.vmem [shape: f32[1,256], index: 8, kind: input, shape index: {}]
  %s9 = inlined_call_operand.hbm [shape: f32[64,128], index: 9, kind: input, shape index: {}]
  %s10 = inlined_call_operand.vmem [shape: f32[1,128], index: 10, kind: input, shape index: {}]
  %s11 = inlined_call_operand.vmem [shape: f32[8,128], index: 11, kind: output, shape index: {}]
  %s12 = sld [smem:[#allocation0]]
  $region82: #{action_recognition_forward.1} parent=0
    _
  %s14 = ssub.s32 1, %s12
  %s15 = scalar_select 0, %s14, %s12
  $region1: #{action_recognition_forward.1} parent=0
    #allocation5 [shape = 'u8[32768]{0}', space=vmem, size = 0x8000, scoped, tag = 'input window, operand 1, single buffered']
    #allocation6 [shape = 's32[1]{0}', space=sflag, size = 0x4, scoped, tag = 'scoped memory for action_recognition_forward.1']
    #allocation7 [shape = 'u8[65536]{0}', space=vmem, size = 0x10000, scoped, tag = 'input window, operand 3, single buffered']
    #allocation8 [shape = 's32[1]{0}', space=sflag, size = 0x4, scoped, tag = 'scoped memory for action_recognition_forward.1']
    #allocation9 [shape = 'u8[2048]{0}', space=vmem, size = 0x800, scoped, tag = 'input window, operand 4, single buffered']
    #allocation10 [shape = 'u8[131072]{0}', space=vmem, size = 0x20000, scoped, tag = 'input window, operand 5, single buffered']
    #allocation11 [shape = 's32[1]{0}', space=sflag, size = 0x4, scoped, tag = 'scoped memory for action_recognition_forward.1']
    #allocation12 [shape = 'u8[16384]{0}', space=vmem, size = 0x4000, scoped, tag = 'input window, operand 6, single buffered']
    #allocation13 [shape = 'u8[16384]{0}', space=vmem, size = 0x4000, scoped, tag = 'input window, operand 7, single buffered']
    #allocation14 [shape = 's32[1]{0}', space=sflag, size = 0x4, scoped, tag = 'scoped memory for action_recognition_forward.1']
    #allocation15 [shape = 'u8[32768]{0}', space=vmem, size = 0x8000, scoped, tag = 'input window, operand 9, single buffered']
    %16 = vsyncpa [#allocation6], 0
    %17 = vsyncpa [#allocation8], 0
    %18 = vsyncpa [#allocation11], 0
    %19 = vsyncpa [#allocation14], 0
    // Predicated region
    $region2: #{action_recognition_forward.1} parent=1 // pred_check
      _
    $region3: #{action_recognition_forward.1} parent=1 // pred_check_branch
      %21 = sbr.rel (0) target = $region5
    $region4: #{action_recognition_forward.1} parent=1 // pred_region
      _
    $region5: #{action_recognition_forward.1} parent=1 // pred_fallthru
      _
    // Predicated region
    $region6: #{action_recognition_forward.1} parent=1 // pred_check
      _
    $region7: #{action_recognition_forward.1} parent=1 // pred_check_branch
      %23 = sbr.rel (0) target = $region9
    $region8: #{action_recognition_forward.1} parent=1 // pred_region
      %s25 = ssub.s32 1024, 1024
      %26 = vsyncadd [#allocation6], %s25
      %s27 = sshll.u32 [#allocation5], 4
      %s28 = int_to_ptr.vmem [resolvable:$true] %s27
      %33 = dma.hbm_to_vmem [thread:$0]  %s1, 1024, %s28, [#allocation6], 512, 512, 32
    $region9: #{action_recognition_forward.1} parent=1 // pred_fallthru
      _
    // Predicated region
    $region10: #{action_recognition_forward.1} parent=1 // pred_check
      _
    $region11: #{action_recognition_forward.1} parent=1 // pred_check_branch
      %35 = sbr.rel (0) target = $region13
    $region12: #{action_recognition_forward.1} parent=1 // pred_region
      _
    $region13: #{action_recognition_forward.1} parent=1 // pred_fallthru
      _
    // Predicated region
    $region14: #{action_recognition_forward.1} parent=1 // pred_check
      _
    $region15: #{action_recognition_forward.1} parent=1 // pred_check_branch
      %37 = sbr.rel (0) target = $region17
    $region16: #{action_recognition_forward.1} parent=1 // pred_region
      %s39 = ssub.s32 2048, 2048
      %40 = vsyncadd [#allocation8], %s39
      %s41 = sshll.u32 [#allocation7], 4
      %s42 = int_to_ptr.vmem [resolvable:$true] %s41
      %47 = dma.hbm_to_vmem [thread:$0]  %s3, 2048, %s42, [#allocation8], 256, 256, 16
    $region17: #{action_recognition_forward.1} parent=1 // pred_fallthru
      _
    // Predicated region
    $region18: #{action_recognition_forward.1} parent=1 // pred_check
      _
    $region19: #{action_recognition_forward.1} parent=1 // pred_check_branch
      %49 = sbr.rel (0) target = $region21
    $region20: #{action_recognition_forward.1} parent=1 // pred_region
      %s51 = ssub.s32 64, 64
      %52 = vsyncadd [#allocation8], %s51
      %s54 = sshll.u32 [#allocation9], 4
      %s55 = int_to_ptr.vmem [resolvable:$true] %s54
      %57 = dma.hbm_to_vmem [thread:$0]  %s4, 64, %s55, [#allocation8]
    $region21: #{action_recognition_forward.1} parent=1 // pred_fallthru
      _
    // Predicated region
    $region22: #{action_recognition_forward.1} parent=1 // pred_check
      _
    $region23: #{action_recognition_forward.1} parent=1 // pred_check_branch
      %59 = sbr.rel (0) target = $region25
    $region24: #{action_recognition_forward.1} parent=1 // pred_region
      %s61 = ssub.s32 4096, 4096
      %62 = vsyncadd [#allocation11], %s61
      %s63 = sshll.u32 [#allocation10], 4
      %s64 = int_to_ptr.vmem [resolvable:$true] %s63
      %69 = dma.hbm_to_vmem [thread:$0]  %s5, 4096, %s64, [#allocation11], 256, 256, 16
    $region25: #{action_recognition_forward.1} parent=1 // pred_fallthru
      _
    // Predicated region
    $region26: #{action_recognition_forward.1} parent=1 // pred_check
      _
    $region27: #{action_recognition_forward.1} parent=1 // pred_check_branch
      %71 = sbr.rel (0) target = $region29
    $region28: #{action_recognition_forward.1} parent=1 // pred_region
      %s73 = ssub.s32 512, 512
      %74 = vsyncadd [#allocation11], %s73
      %s75 = sshll.u32 [#allocation12], 4
      %s76 = int_to_ptr.vmem [resolvable:$true] %s75
      %81 = dma.hbm_to_vmem [thread:$0]  %s6, 512, %s76, [#allocation11], 128, 128, 8
    $region29: #{action_recognition_forward.1} parent=1 // pred_fallthru
      _
    // Predicated region
    $region30: #{action_recognition_forward.1} parent=1 // pred_check
      _
    $region31: #{action_recognition_forward.1} parent=1 // pred_check_branch
      %83 = sbr.rel (0) target = $region33
    $region32: #{action_recognition_forward.1} parent=1 // pred_region
      %s85 = ssub.s32 512, 512
      %86 = vsyncadd [#allocation14], %s85
      %s87 = sshll.u32 [#allocation13], 4
      %s88 = int_to_ptr.vmem [resolvable:$true] %s87
      %93 = dma.hbm_to_vmem [thread:$0]  %s7, 512, %s88, [#allocation14], 128, 128, 8
    $region33: #{action_recognition_forward.1} parent=1 // pred_fallthru
      _
    // Predicated region
    $region34: #{action_recognition_forward.1} parent=1 // pred_check
      _
    $region35: #{action_recognition_forward.1} parent=1 // pred_check_branch
      %95 = sbr.rel (0) target = $region37
    $region36: #{action_recognition_forward.1} parent=1 // pred_region
      _
    $region37: #{action_recognition_forward.1} parent=1 // pred_fallthru
      _
    // Predicated region
    $region38: #{action_recognition_forward.1} parent=1 // pred_check
      _
    $region39: #{action_recognition_forward.1} parent=1 // pred_check_branch
      %97 = sbr.rel (0) target = $region41
    $region40: #{action_recognition_forward.1} parent=1 // pred_region
      %s99 = ssub.s32 1024, 1024
      %100 = vsyncadd [#allocation14], %s99
      %s101 = sshll.u32 [#allocation15], 4
      %s102 = int_to_ptr.vmem [resolvable:$true] %s101
      %107 = dma.hbm_to_vmem [thread:$0]  %s9, 1024, %s102, [#allocation14], 128, 128, 8
    $region41: #{action_recognition_forward.1} parent=1 // pred_fallthru
      _
    // Predicated region
    $region42: #{action_recognition_forward.1} parent=1 // pred_check
      _
    $region43: #{action_recognition_forward.1} parent=1 // pred_check_branch
      %109 = sbr.rel (0) target = $region45
    $region44: #{action_recognition_forward.1} parent=1 // pred_region
      _
    $region45: #{action_recognition_forward.1} parent=1 // pred_fallthru
      _
    // Predicated region
    $region46: #{action_recognition_forward.1} parent=1 // pred_check
      _
    $region47: #{action_recognition_forward.1} parent=1 // pred_check_branch
      %111 = sbr.rel (0) target = $region49
    $region48: #{action_recognition_forward.1} parent=1 // pred_region
      %112 = dma.done [#allocation6], 1024
    $region49: #{action_recognition_forward.1} parent=1 // pred_fallthru
      _
    // Predicated region
    $region50: #{action_recognition_forward.1} parent=1 // pred_check
      _
    $region51: #{action_recognition_forward.1} parent=1 // pred_check_branch
      %114 = sbr.rel (0) target = $region53
    $region52: #{action_recognition_forward.1} parent=1 // pred_region
      %115 = dma.done [#allocation8], 2048
    $region53: #{action_recognition_forward.1} parent=1 // pred_fallthru
      _
    // Predicated region
    $region54: #{action_recognition_forward.1} parent=1 // pred_check
      _
    $region55: #{action_recognition_forward.1} parent=1 // pred_check_branch
      %117 = sbr.rel (0) target = $region57
    $region56: #{action_recognition_forward.1} parent=1 // pred_region
      %118 = dma.done [#allocation8], 64
    $region57: #{action_recognition_forward.1} parent=1 // pred_fallthru
      _
    // Predicated region
    $region58: #{action_recognition_forward.1} parent=1 // pred_check
      _
    $region59: #{action_recognition_forward.1} parent=1 // pred_check_branch
      %120 = sbr.rel (0) target = $region61
    $region60: #{action_recognition_forward.1} parent=1 // pred_region
      %121 = dma.done [#allocation11], 4096
    $region61: #{action_recognition_forward.1} parent=1 // pred_fallthru
      _
    // Predicated region
    $region62: #{action_recognition_forward.1} parent=1 // pred_check
      _
    $region63: #{action_recognition_forward.1} parent=1 // pred_check_branch
      %123 = sbr.rel (0) target = $region65
    $region64: #{action_recognition_forward.1} parent=1 // pred_region
      %124 = dma.done [#allocation11], 512
    $region65: #{action_recognition_forward.1} parent=1 // pred_fallthru
      _
    // Predicated region
    $region66: #{action_recognition_forward.1} parent=1 // pred_check
      _
    $region67: #{action_recognition_forward.1} parent=1 // pred_check_branch
      %126 = sbr.rel (0) target = $region69
    $region68: #{action_recognition_forward.1} parent=1 // pred_region
      %127 = dma.done [#allocation14], 512
    $region69: #{action_recognition_forward.1} parent=1 // pred_fallthru
      _
    // Predicated region
    $region70: #{action_recognition_forward.1} parent=1 // pred_check
      _
    $region71: #{action_recognition_forward.1} parent=1 // pred_check_branch
      %129 = sbr.rel (0) target = $region73
    $region72: #{action_recognition_forward.1} parent=1 // pred_region
      %130 = dma.done [#allocation14], 1024
    $region73: #{action_recognition_forward.1} parent=1 // pred_fallthru
      _
    %v131 = vld [vmem:[%s0] sm:$0xff]
    %v132 = vld [vmem:[%s0 + $0x8] sm:$0xff]
    %v133 = vld [vmem:[%s0 + $0x10] sm:$0xff]
    %v134 = vld [vmem:[%s0 + $0x18] sm:$0xff]
    %v135 = vld [vmem:[%s0 + $0x20] sm:$0xff]
    %v136 = vld [vmem:[%s0 + $0x28] sm:$0xff]
    %v137 = vld [vmem:[%s0 + $0x30] sm:$0xff]
    %v138 = vld [vmem:[%s0 + $0x38] sm:$0xff]
    %v139 = vld [vmem:[#allocation5] sm:$0xff]
    %v140 = vld [vmem:[#allocation5 + $0x8] sm:$0xff]
    %v141 = vld [vmem:[#allocation5 + $0x10] sm:$0xff]
    %v142 = vld [vmem:[#allocation5 + $0x18] sm:$0xff]
    %v143 = vld [vmem:[#allocation5 + $0x20] sm:$0xff]
    %v144 = vld [vmem:[#allocation5 + $0x28] sm:$0xff]
    %v145 = vld [vmem:[#allocation5 + $0x30] sm:$0xff]
    %v146 = vld [vmem:[#allocation5 + $0x38] sm:$0xff]
    %v147 = vld [vmem:[#allocation9] sm:$0xf]
    %v149 = vlaneseq
    %v150 = vshrl.u32 %v149, 7
    %v151 = vsub.s32 0, %v150
    %v152 = vrot.slane %v147, %v151
    %v153 = vlaneseq
    %v154 = vshrl.u32 %v153, 7
    %v155 = vsub.s32 1, %v154
    %v156 = vrot.slane %v147, %v155
    %v157 = vlaneseq
    %v158 = vshrl.u32 %v157, 7
    %v159 = vsub.s32 2, %v158
    %v160 = vrot.slane %v147, %v159
    %v161 = vlaneseq
    %v162 = vshrl.u32 %v161, 7
    %v163 = vsub.s32 3, %v162
    %v164 = vrot.slane %v147, %v163
    %vm169 = vcmask 130048
    %v171 = vsel %vm169, %v131, 0
    %v174 = vsel %vm169, %v132, 0
    %v177 = vsel %vm169, %v133, 0
    %v180 = vsel %vm169, %v134, 0
    %v183 = vsel %vm169, %v135, 0
    %v186 = vsel %vm169, %v136, 0
    %v189 = vsel %vm169, %v137, 0
    %v192 = vsel %vm169, %v138, 0
    %194 = vmatprep.subr.mxu0 %v140
    %195 = vmatpush1.msra.mxu0 %v139
    %196 = vmatprep.subr.mxu0 %v144
    %197 = vmatpush1.msra.mxu0 %v143
    %198 = vmatprep.subr.mxu0 0.0
    %199 = vmatpush1.msra.mxu0 0.0
    %200 = vmatprep.subr.mxu0 0.0
    %201 = vmatpush1.msra.mxu0 0.0
    %202 = vmatprep.subr.mxu0 0.0
    %203 = vmatpush1.msra.mxu0 0.0
    %204 = vmatprep.subr.mxu0 0.0
    %205 = vmatpush1.msra.mxu0 0.0
    %206 = vmatprep.subr.mxu0 0.0
    %207 = vmatpush1.msra.mxu0 0.0
    %208 = vmatprep.subr.mxu0 0.0
    %209 = vmatpush1.msra.mxu0 0.0
    %210 = vmatprep.subr.mxu0 0.0
    %211 = vmatpush1.msra.mxu0 0.0
    %212 = vmatprep.subr.mxu0 0.0
    %213 = vmatpush1.msra.mxu0 0.0
    %214 = vmatprep.subr.mxu0 0.0
    %215 = vmatpush1.msra.mxu0 0.0
    %216 = vmatprep.subr.mxu0 0.0
    %217 = vmatpush1.msra.mxu0 0.0
    %218 = vmatprep.subr.mxu0 0.0
    %219 = vmatpush1.msra.mxu0 0.0
    %220 = vmatprep.subr.mxu0 0.0
    %221 = vmatpush1.msra.mxu0 0.0
    %222 = vmatprep.subr.mxu0 0.0
    %223 = vmatpush1.msra.mxu0 0.0
    %224 = vmatprep.subr.mxu0 0.0
    %225 = vmatpush1.msra.mxu0 0.0
    %226 = vmatprep.subr.mxu0 0.0
    %227 = vmatpush1.msra.mxu0 0.0
    %228 = vmatprep.subr.mxu0 0.0
    %229 = vmatpush1.msra.mxu0 0.0
    %230 = vmatprep.subr.mxu0 0.0
    %231 = vmatpush1.msra.mxu0 0.0
    %232 = vmatprep.subr.mxu0 0.0
    %233 = vmatpush1.msra.mxu0 0.0
    %234 = vmatprep.subr.mxu0 0.0
    %235 = vmatpush1.msra.mxu0 0.0
    %236 = vmatprep.subr.mxu0 0.0
    %237 = vmatpush1.msra.mxu0 0.0
    %238 = vmatprep.subr.mxu0 0.0
    %239 = vmatpush1.msra.mxu0 0.0
    %240 = vmatprep.subr.mxu0 0.0
    %241 = vmatpush1.msra.mxu0 0.0
    %242 = vmatprep.subr.mxu0 0.0
    %243 = vmatpush1.msra.mxu0 0.0
    %244 = vmatprep.subr.mxu0 0.0
    %245 = vmatpush1.msra.mxu0 0.0
    %246 = vmatprep.subr.mxu0 0.0
    %247 = vmatpush1.msra.mxu0 0.0
    %248 = vmatprep.subr.mxu0 0.0
    %249 = vmatpush1.msra.mxu0 0.0
    %250 = vmatprep.subr.mxu0 0.0
    %251 = vmatpush1.msra.mxu0 0.0
    %252 = vmatprep.subr.mxu0 0.0
    %253 = vmatpush1.msra.mxu0 0.0
    %254 = vmatprep.subr.mxu0 0.0
    %255 = vmatpush1.msra.mxu0 0.0
    %256 = vmatprep.subr.mxu0 0.0
    %257 = vmatpush1.msra.mxu0 0.0
    %258 = vmatprep.mubr.f32.mxu0 0.0
    %259 = vmatmul.mubr.f32.gmra.mrb[0].mxu0 %v171
    %v260 = vpop.f32.mrb[0].mxu0
    %v261 = vadd.f32 %v152, %v260
    %v262 = vpop.f32.mrb[0].mxu0
    %v263 = vadd.f32 %v156, %v262
    %264 = vmatprep.mubr.f32.mxu0 0.0
    %265 = vmatmul.mubr.f32.gmra.mrb[0].mxu0 %v174
    %v266 = vpop.f32.mrb[0].mxu0
    %v267 = vadd.f32 %v152, %v266
    %v268 = vpop.f32.mrb[0].mxu0
    %v269 = vadd.f32 %v156, %v268
    %270 = vmatprep.mubr.f32.mxu0 0.0
    %271 = vmatmul.mubr.f32.gmra.mrb[0].mxu0 %v177
    %v272 = vpop.f32.mrb[0].mxu0
    %v273 = vadd.f32 %v152, %v272
    %v274 = vpop.f32.mrb[0].mxu0
    %v275 = vadd.f32 %v156, %v274
    %276 = vmatprep.mubr.f32.mxu0 0.0
    %277 = vmatmul.mubr.f32.gmra.mrb[0].mxu0 %v180
    %v278 = vpop.f32.mrb[0].mxu0
    %v279 = vadd.f32 %v152, %v278
    %v280 = vpop.f32.mrb[0].mxu0
    %v281 = vadd.f32 %v156, %v280
    %282 = vmatprep.mubr.f32.mxu0 0.0
    %283 = vmatmul.mubr.f32.gmra.mrb[0].mxu0 %v183
    %v284 = vpop.f32.mrb[0].mxu0
    %v285 = vadd.f32 %v152, %v284
    %v286 = vpop.f32.mrb[0].mxu0
    %v287 = vadd.f32 %v156, %v286
    %288 = vmatprep.mubr.f32.mxu0 0.0
    %289 = vmatmul.mubr.f32.gmra.mrb[0].mxu0 %v186
    %v290 = vpop.f32.mrb[0].mxu0
    %v291 = vadd.f32 %v152, %v290
    %v292 = vpop.f32.mrb[0].mxu0
    %v293 = vadd.f32 %v156, %v292
    %294 = vmatprep.mubr.f32.mxu0 0.0
    %295 = vmatmul.mubr.f32.gmra.mrb[0].mxu0 %v189
    %v296 = vpop.f32.mrb[0].mxu0
    %v297 = vadd.f32 %v152, %v296
    %v298 = vpop.f32.mrb[0].mxu0
    %v299 = vadd.f32 %v156, %v298
    %300 = vmatprep.mubr.f32.mxu0 0.0
    %301 = vmatmul.mubr.f32.gmra.mrb[0].mxu0 %v192
    %v302 = vpop.f32.mrb[0].mxu0
    %v303 = vadd.f32 %v152, %v302
    %v304 = vpop.f32.mrb[0].mxu0
    %v305 = vadd.f32 %v156, %v304
    %306 = vdwg.mxu0
    %307 = vmatprep.subr.mxu0 %v142
    %308 = vmatpush1.msra.mxu0 %v141
    %309 = vmatprep.subr.mxu0 %v146
    %310 = vmatpush1.msra.mxu0 %v145
    %311 = vmatprep.subr.mxu0 0.0
    %312 = vmatpush1.msra.mxu0 0.0
    %313 = vmatprep.subr.mxu0 0.0
    %314 = vmatpush1.msra.mxu0 0.0
    %315 = vmatprep.subr.mxu0 0.0
    %316 = vmatpush1.msra.mxu0 0.0
    %317 = vmatprep.subr.mxu0 0.0
    %318 = vmatpush1.msra.mxu0 0.0
    %319 = vmatprep.subr.mxu0 0.0
    %320 = vmatpush1.msra.mxu0 0.0
    %321 = vmatprep.subr.mxu0 0.0
    %322 = vmatpush1.msra.mxu0 0.0
    %323 = vmatprep.subr.mxu0 0.0
    %324 = vmatpush1.msra.mxu0 0.0
    %325 = vmatprep.subr.mxu0 0.0
    %326 = vmatpush1.msra.mxu0 0.0
    %327 = vmatprep.subr.mxu0 0.0
    %328 = vmatpush1.msra.mxu0 0.0
    %329 = vmatprep.subr.mxu0 0.0
    %330 = vmatpush1.msra.mxu0 0.0
    %331 = vmatprep.subr.mxu0 0.0
    %332 = vmatpush1.msra.mxu0 0.0
    %333 = vmatprep.subr.mxu0 0.0
    %334 = vmatpush1.msra.mxu0 0.0
    %335 = vmatprep.subr.mxu0 0.0
    %336 = vmatpush1.msra.mxu0 0.0
    %337 = vmatprep.subr.mxu0 0.0
    %338 = vmatpush1.msra.mxu0 0.0
    %339 = vmatprep.subr.mxu0 0.0
    %340 = vmatpush1.msra.mxu0 0.0
    %341 = vmatprep.subr.mxu0 0.0
    %342 = vmatpush1.msra.mxu0 0.0
    %343 = vmatprep.subr.mxu0 0.0
    %344 = vmatpush1.msra.mxu0 0.0
    %345 = vmatprep.subr.mxu0 0.0
    %346 = vmatpush1.msra.mxu0 0.0
    %347 = vmatprep.subr.mxu0 0.0
    %348 = vmatpush1.msra.mxu0 0.0
    %349 = vmatprep.subr.mxu0 0.0
    %350 = vmatpush1.msra.mxu0 0.0
    %351 = vmatprep.subr.mxu0 0.0
    %352 = vmatpush1.msra.mxu0 0.0
    %353 = vmatprep.subr.mxu0 0.0
    %354 = vmatpush1.msra.mxu0 0.0
    %355 = vmatprep.subr.mxu0 0.0
    %356 = vmatpush1.msra.mxu0 0.0
    %357 = vmatprep.subr.mxu0 0.0
    %358 = vmatpush1.msra.mxu0 0.0
    %359 = vmatprep.subr.mxu0 0.0
    %360 = vmatpush1.msra.mxu0 0.0
    %361 = vmatprep.subr.mxu0 0.0
    %362 = vmatpush1.msra.mxu0 0.0
    %363 = vmatprep.subr.mxu0 0.0
    %364 = vmatpush1.msra.mxu0 0.0
    %365 = vmatprep.subr.mxu0 0.0
    %366 = vmatpush1.msra.mxu0 0.0
    %367 = vmatprep.subr.mxu0 0.0
    %368 = vmatpush1.msra.mxu0 0.0
    %369 = vmatprep.subr.mxu0 0.0
    %370 = vmatpush1.msra.mxu0 0.0
    %371 = vmatprep.mubr.f32.mxu0 0.0
    %372 = vmatmul.mubr.f32.gmra.mrb[0].mxu0 %v171
    %v373 = vpop.f32.mrb[0].mxu0
    %v374 = vadd.f32 %v160, %v373
    %v375 = vpop.f32.mrb[0].mxu0
    %v376 = vadd.f32 %v164, %v375
    %377 = vmatprep.mubr.f32.mxu0 0.0
    %378 = vmatmul.mubr.f32.gmra.mrb[0].mxu0 %v174
    %v379 = vpop.f32.mrb[0].mxu0
    %v380 = vadd.f32 %v160, %v379
    %v381 = vpop.f32.mrb[0].mxu0
    %v382 = vadd.f32 %v164, %v381
    %383 = vmatprep.mubr.f32.mxu0 0.0
    %384 = vmatmul.mubr.f32.gmra.mrb[0].mxu0 %v177
    %v385 = vpop.f32.mrb[0].mxu0
    %v386 = vadd.f32 %v160, %v385
    %v387 = vpop.f32.mrb[0].mxu0
    %v388 = vadd.f32 %v164, %v387
    %389 = vmatprep.mubr.f32.mxu0 0.0
    %390 = vmatmul.mubr.f32.gmra.mrb[0].mxu0 %v180
    %v391 = vpop.f32.mrb[0].mxu0
    %v392 = vadd.f32 %v160, %v391
    %v393 = vpop.f32.mrb[0].mxu0
    %v394 = vadd.f32 %v164, %v393
    %395 = vmatprep.mubr.f32.mxu0 0.0
    %396 = vmatmul.mubr.f32.gmra.mrb[0].mxu0 %v183
    %v397 = vpop.f32.mrb[0].mxu0
    %v398 = vadd.f32 %v160, %v397
    %v399 = vpop.f32.mrb[0].mxu0
    %v400 = vadd.f32 %v164, %v399
    %401 = vmatprep.mubr.f32.mxu0 0.0
    %402 = vmatmul.mubr.f32.gmra.mrb[0].mxu0 %v186
    %v403 = vpop.f32.mrb[0].mxu0
    %v404 = vadd.f32 %v160, %v403
    %v405 = vpop.f32.mrb[0].mxu0
    %v406 = vadd.f32 %v164, %v405
    %407 = vmatprep.mubr.f32.mxu0 0.0
    %408 = vmatmul.mubr.f32.gmra.mrb[0].mxu0 %v189
    %v409 = vpop.f32.mrb[0].mxu0
    %v410 = vadd.f32 %v160, %v409
    %v411 = vpop.f32.mrb[0].mxu0
    %v412 = vadd.f32 %v164, %v411
    %413 = vmatprep.mubr.f32.mxu0 0.0
    %414 = vmatmul.mubr.f32.gmra.mrb[0].mxu0 %v192
    %v415 = vpop.f32.mrb[0].mxu0
    %v416 = vadd.f32 %v160, %v415
    %v417 = vpop.f32.mrb[0].mxu0
    %v418 = vadd.f32 %v164, %v417
    %419 = vdwg.mxu0
    %420 = vst [vmem:[#allocation2] sm:$0xff] %v261
    %421 = vst [vmem:[#allocation2 + $0x8] sm:$0xff] %v263
    %422 = vst [vmem:[#allocation2 + $0x10] sm:$0xff] %v374
    %423 = vst [vmem:[#allocation2 + $0x18] sm:$0xff] %v376
    %424 = vst [vmem:[#allocation2 + $0x20] sm:$0xff] %v267
    %425 = vst [vmem:[#allocation2 + $0x28] sm:$0xff] %v269
    %426 = vst [vmem:[#allocation2 + $0x30] sm:$0xff] %v380
    %427 = vst [vmem:[#allocation2 + $0x38] sm:$0xff] %v382
    %428 = vst [vmem:[#allocation2 + $0x40] sm:$0xff] %v273
    %429 = vst [vmem:[#allocation2 + $0x48] sm:$0xff] %v275
    %430 = vst [vmem:[#allocation2 + $0x50] sm:$0xff] %v386
    %431 = vst [vmem:[#allocation2 + $0x58] sm:$0xff] %v388
    %432 = vst [vmem:[#allocation2 + $0x60] sm:$0xff] %v279
    %433 = vst [vmem:[#allocation2 + $0x68] sm:$0xff] %v281
    %434 = vst [vmem:[#allocation2 + $0x70] sm:$0xff] %v392
    %435 = vst [vmem:[#allocation2 + $0x78] sm:$0xff] %v394
    %436 = vst [vmem:[#allocation2 + $0x80] sm:$0xff] %v285
    %437 = vst [vmem:[#allocation2 + $0x88] sm:$0xff] %v287
    %438 = vst [vmem:[#allocation2 + $0x90] sm:$0xff] %v398
    %439 = vst [vmem:[#allocation2 + $0x98] sm:$0xff] %v400
    %440 = vst [vmem:[#allocation2 + $0xa0] sm:$0xff] %v291
    %441 = vst [vmem:[#allocation2 + $0xa8] sm:$0xff] %v293
    %442 = vst [vmem:[#allocation2 + $0xb0] sm:$0xff] %v404
    %443 = vst [vmem:[#allocation2 + $0xb8] sm:$0xff] %v406
    %444 = vst [vmem:[#allocation2 + $0xc0] sm:$0xff] %v297
    %445 = vst [vmem:[#allocation2 + $0xc8] sm:$0xff] %v299
    %446 = vst [vmem:[#allocation2 + $0xd0] sm:$0xff] %v410
    %447 = vst [vmem:[#allocation2 + $0xd8] sm:$0xff] %v412
    %448 = vst [vmem:[#allocation2 + $0xe0] sm:$0xff] %v303
    %449 = vst [vmem:[#allocation2 + $0xe8] sm:$0xff] %v305
    %450 = vst [vmem:[#allocation2 + $0xf0] sm:$0xff] %v416
    %451 = vst [vmem:[#allocation2 + $0xf8] sm:$0xff] %v418
    %v452 = vld [vmem:[#allocation2] sm:$0xff]
    %v453 = vld [vmem:[#allocation2 + $0x8] sm:$0xff]
    %v454 = vld [vmem:[%s2] sm:$0xff]
    %v455 = vld [vmem:[%s2 + $0x8] sm:$0xff]
    %v456 = vld [vmem:[%s2 + $0x10] sm:$0xff]
    %v457 = vld [vmem:[%s2 + $0x18] sm:$0xff]
    %v458 = vld [vmem:[%s2 + $0x20] sm:$0xff]
    %v459 = vld [vmem:[%s2 + $0x28] sm:$0xff]
    %v460 = vld [vmem:[%s2 + $0x30] sm:$0xff]
    %v461 = vld [vmem:[%s2 + $0x38] sm:$0xff]
    %v462 = vld [vmem:[%s2 + $0x40] sm:$0xff]
    %v463 = vld [vmem:[%s2 + $0x48] sm:$0xff]
    %v464 = vld [vmem:[%s2 + $0x50] sm:$0xff]
    %v465 = vld [vmem:[%s2 + $0x58] sm:$0xff]
    %v466 = vld [vmem:[%s2 + $0x60] sm:$0xff]
    %v467 = vld [vmem:[%s2 + $0x68] sm:$0xff]
    %v468 = vld [vmem:[%s2 + $0x70] sm:$0xff]
    %v469 = vld [vmem:[%s2 + $0x78] sm:$0xff]
    %vm470 = vcmask 523264
    %v472 = vsel %vm470, 0.0, 0
    %474 = vmatprep.subr.mxu0 %v455
    %475 = vmatpush1.msra.mxu0 %v454
    %476 = vmatprep.subr.mxu0 %v457
    %477 = vmatpush1.msra.mxu0 %v456
    %478 = vmatprep.subr.mxu0 %v459
    %479 = vmatpush1.msra.mxu0 %v458
    %480 = vmatprep.subr.mxu0 %v461
    %481 = vmatpush1.msra.mxu0 %v460
    %482 = vmatprep.subr.mxu0 %v463
    %483 = vmatpush1.msra.mxu0 %v462
    %484 = vmatprep.subr.mxu0 %v465
    %485 = vmatpush1.msra.mxu0 %v464
    %486 = vmatprep.subr.mxu0 %v467
    %487 = vmatpush1.msra.mxu0 %v466
    %488 = vmatprep.subr.mxu0 %v469
    %489 = vmatpush1.msra.mxu0 %v468
    %490 = vmatprep.subr.mxu0 0.0
    %491 = vmatpush1.msra.mxu0 0.0
    %492 = vmatprep.subr.mxu0 0.0
    %493 = vmatpush1.msra.mxu0 0.0
    %494 = vmatprep.subr.mxu0 0.0
    %495 = vmatpush1.msra.mxu0 0.0
    %496 = vmatprep.subr.mxu0 0.0
    %497 = vmatpush1.msra.mxu0 0.0
    %498 = vmatprep.subr.mxu0 0.0
    %499 = vmatpush1.msra.mxu0 0.0
    %500 = vmatprep.subr.mxu0 0.0
    %501 = vmatpush1.msra.mxu0 0.0
    %502 = vmatprep.subr.mxu0 0.0
    %503 = vmatpush1.msra.mxu0 0.0
    %504 = vmatprep.subr.mxu0 0.0
    %505 = vmatpush1.msra.mxu0 0.0
    %506 = vmatprep.subr.mxu0 0.0
    %507 = vmatpush1.msra.mxu0 0.0
    %508 = vmatprep.subr.mxu0 0.0
    %509 = vmatpush1.msra.mxu0 0.0
    %510 = vmatprep.subr.mxu0 0.0
    %511 = vmatpush1.msra.mxu0 0.0
    %512 = vmatprep.subr.mxu0 0.0
    %513 = vmatpush1.msra.mxu0 0.0
    %514 = vmatprep.subr.mxu0 0.0
    %515 = vmatpush1.msra.mxu0 0.0
    %516 = vmatprep.subr.mxu0 0.0
    %517 = vmatpush1.msra.mxu0 0.0
    %518 = vmatprep.subr.mxu0 0.0
    %519 = vmatpush1.msra.mxu0 0.0
    %520 = vmatprep.subr.mxu0 0.0
    %521 = vmatpush1.msra.mxu0 0.0
    %522 = vmatprep.subr.mxu0 0.0
    %523 = vmatpush1.msra.mxu0 0.0
    %524 = vmatprep.subr.mxu0 0.0
    %525 = vmatpush1.msra.mxu0 0.0
    %526 = vmatprep.subr.mxu0 0.0
    %527 = vmatpush1.msra.mxu0 0.0
    %528 = vmatprep.subr.mxu0 0.0
    %529 = vmatpush1.msra.mxu0 0.0
    %530 = vmatprep.subr.mxu0 0.0
    %531 = vmatpush1.msra.mxu0 0.0
    %532 = vmatprep.subr.mxu0 0.0
    %533 = vmatpush1.msra.mxu0 0.0
    %534 = vmatprep.subr.mxu0 0.0
    %535 = vmatpush1.msra.mxu0 0.0
    %536 = vmatprep.subr.mxu0 0.0
    %537 = vmatpush1.msra.mxu0 0.0
    %538 = vmatprep.mubr.f32.mxu0 0.0
    %539 = vmatmul.mubr.f32.gmra.mrb[0].mxu0 %v472
    %v540 = vpop.f32.mrb[0].mxu0
    %v541 = vadd.f32 0.0, %v540
    %v542 = vpop.f32.mrb[0].mxu0
    %v543 = vadd.f32 0.0, %v542
    %544 = vdwg.mxu0
    %v545 = vadd.f32 %v452, %v541
    %v546 = vadd.f32 %v453, %v543
    %v547 = vxor.u32 %v545, 2147483648
    %v548 = vmul.f32 %v547, 1.442695
    %v549 = vpow.pop %v548
    %v550 = vadd.f32 %v549, 1.0
    %v551 = vrcp.pop %v550
    %v552 = vmul.f32 1.0, %v551
    %v553 = vtanh.pop %v546
    %v554 = vxor.u32 %v546, 2147483648
    %v555 = vmul.f32 %v554, 1.442695
    %v556 = vpow.pop %v555
    %v557 = vadd.f32 %v556, 1.0
    %v558 = vrcp.pop %v557
    %v559 = vmul.f32 1.0, %v558
    %v560 = vmul.f32 %v552, 0.0
    %v561 = vmul.f32 %v552, %v553
    %563 = vrot.lane.b32.xlu0 %v561, 64
    %v564 = vpop.permute.xlu0 %563
    %v566 = vadd.f32 %v560, %v564
    %v567 = vtanh.pop %v566
    %v568 = vmul.f32 %v559, %v567
    %570 = vrot.lane.b32.xlu0 %v568, 64
    %v571 = vpop.permute.xlu0 %570
    %573 = vst.msk [vmem:[#allocation3] sm:$0xff] %vm470, %v571
    %s574 = scalar_lea.vmem [#allocation2], 32
    %v575 = vld [vmem:[%s574] sm:$0xff]
    %v576 = vld [vmem:[%s574 + $0x8] sm:$0xff]
    %v577 = vld [vmem:[%s2] sm:$0xff]
    %v578 = vld [vmem:[%s2 + $0x8] sm:$0xff]
    %v579 = vld [vmem:[%s2 + $0x10] sm:$0xff]
    %v580 = vld [vmem:[%s2 + $0x18] sm:$0xff]
    %v581 = vld [vmem:[%s2 + $0x20] sm:$0xff]
    %v582 = vld [vmem:[%s2 + $0x28] sm:$0xff]
    %v583 = vld [vmem:[%s2 + $0x30] sm:$0xff]
    %v584 = vld [vmem:[%s2 + $0x38] sm:$0xff]
    %v585 = vld [vmem:[%s2 + $0x40] sm:$0xff]
    %v586 = vld [vmem:[%s2 + $0x48] sm:$0xff]
    %v587 = vld [vmem:[%s2 + $0x50] sm:$0xff]
    %v588 = vld [vmem:[%s2 + $0x58] sm:$0xff]
    %v589 = vld [vmem:[%s2 + $0x60] sm:$0xff]
    %v590 = vld [vmem:[%s2 + $0x68] sm:$0xff]
    %v591 = vld [vmem:[%s2 + $0x70] sm:$0xff]
    %v592 = vld [vmem:[%s2 + $0x78] sm:$0xff]
    %v593 = vsel %vm470, %v571, 0
    %595 = vmatprep.subr.mxu0 %v578
    %596 = vmatpush1.msra.mxu0 %v577
    %597 = vmatprep.subr.mxu0 %v580
    %598 = vmatpush1.msra.mxu0 %v579
    %599 = vmatprep.subr.mxu0 %v582
    %600 = vmatpush1.msra.mxu0 %v581
    %601 = vmatprep.subr.mxu0 %v584
    %602 = vmatpush1.msra.mxu0 %v583
    %603 = vmatprep.subr.mxu0 %v586
    %604 = vmatpush1.msra.mxu0 %v585
    %605 = vmatprep.subr.mxu0 %v588
    %606 = vmatpush1.msra.mxu0 %v587
    %607 = vmatprep.subr.mxu0 %v590
    %608 = vmatpush1.msra.mxu0 %v589
    %609 = vmatprep.subr.mxu0 %v592
    %610 = vmatpush1.msra.mxu0 %v591
    %611 = vmatprep.subr.mxu0 0.0
    %612 = vmatpush1.msra.mxu0 0.0
    %613 = vmatprep.subr.mxu0 0.0
    %614 = vmatpush1.msra.mxu0 0.0
    %615 = vmatprep.subr.mxu0 0.0
    %616 = vmatpush1.msra.mxu0 0.0
    %617 = vmatprep.subr.mxu0 0.0
    %618 = vmatpush1.msra.mxu0 0.0
    %619 = vmatprep.subr.mxu0 0.0
    %620 = vmatpush1.msra.mxu0 0.0
    %621 = vmatprep.subr.mxu0 0.0
    %622 = vmatpush1.msra.mxu0 0.0
    %623 = vmatprep.subr.mxu0 0.0
    %624 = vmatpush1.msra.mxu0 0.0
    %625 = vmatprep.subr.mxu0 0.0
    %626 = vmatpush1.msra.mxu0 0.0
    %627 = vmatprep.subr.mxu0 0.0
    %628 = vmatpush1.msra.mxu0 0.0
    %629 = vmatprep.subr.mxu0 0.0
    %630 = vmatpush1.msra.mxu0 0.0
    %631 = vmatprep.subr.mxu0 0.0
    %632 = vmatpush1.msra.mxu0 0.0
    %633 = vmatprep.subr.mxu0 0.0
    %634 = vmatpush1.msra.mxu0 0.0
    %635 = vmatprep.subr.mxu0 0.0
    %636 = vmatpush1.msra.mxu0 0.0
    %637 = vmatprep.subr.mxu0 0.0
    %638 = vmatpush1.msra.mxu0 0.0
    %639 = vmatprep.subr.mxu0 0.0
    %640 = vmatpush1.msra.mxu0 0.0
    %641 = vmatprep.subr.mxu0 0.0
    %642 = vmatpush1.msra.mxu0 0.0
    %643 = vmatprep.subr.mxu0 0.0
    %644 = vmatpush1.msra.mxu0 0.0
    %645 = vmatprep.subr.mxu0 0.0
    %646 = vmatpush1.msra.mxu0 0.0
    %647 = vmatprep.subr.mxu0 0.0
    %648 = vmatpush1.msra.mxu0 0.0
    %649 = vmatprep.subr.mxu0 0.0
    %650 = vmatpush1.msra.mxu0 0.0
    %651 = vmatprep.subr.mxu0 0.0
    %652 = vmatpush1.msra.mxu0 0.0
    %653 = vmatprep.subr.mxu0 0.0
    %654 = vmatpush1.msra.mxu0 0.0
    %655 = vmatprep.subr.mxu0 0.0
    %656 = vmatpush1.msra.mxu0 0.0
    %657 = vmatprep.subr.mxu0 0.0
    %658 = vmatpush1.msra.mxu0 0.0
    %659 = vmatprep.mubr.f32.mxu0 0.0
    %660 = vmatmul.mubr.f32.gmra.mrb[0].mxu0 %v593
    %v661 = vpop.f32.mrb[0].mxu0
    %v662 = vadd.f32 0.0, %v661
    %v663 = vpop.f32.mrb[0].mxu0
    %v664 = vadd.f32 0.0, %v663
    %665 = vdwg.mxu0
    %v666 = vadd.f32 %v575, %v662
    %v667 = vadd.f32 %v576, %v664
    %v668 = vxor.u32 %v666, 2147483648
    %v669 = vmul.f32 %v668, 1.442695
    %v670 = vpow.pop %v669
    %v671 = vadd.f32 %v670, 1.0
    %v672 = vrcp.pop %v671
    %v673 = vmul.f32 1.0, %v672
    %v674 = vtanh.pop %v667
    %v675 = vxor.u32 %v667, 2147483648
    %v676 = vmul.f32 %v675, 1.442695
    %v677 = vpow.pop %v676
    %v678 = vadd.f32 %v677, 1.0
    %v679 = vrcp.pop %v678
    %v680 = vmul.f32 1.0, %v679
    %v681 = vmul.f32 %v673, %v566
    %v682 = vmul.f32 %v673, %v674
    %684 = vrot.lane.b32.xlu0 %v682, 64
    %v685 = vpop.permute.xlu0 %684
    %v687 = vadd.f32 %v681, %v685
    %v688 = vtanh.pop %v687
    %v689 = vmul.f32 %v680, %v688
    %691 = vrot.lane.b32.xlu0 %v689, 64
    %v692 = vpop.permute.xlu0 %691
    %s694 = scalar_lea.vmem [#allocation3], 8
    %695 = vst.msk [vmem:[%s694] sm:$0xff] %vm470, %v692
    %s696 = scalar_lea.vmem [#allocation2], 64
    %v697 = vld [vmem:[%s696] sm:$0xff]
    %v698 = vld [vmem:[%s696 + $0x8] sm:$0xff]
    %v699 = vld [vmem:[%s2] sm:$0xff]
    %v700 = vld [vmem:[%s2 + $0x8] sm:$0xff]
    %v701 = vld [vmem:[%s2 + $0x10] sm:$0xff]
    %v702 = vld [vmem:[%s2 + $0x18] sm:$0xff]
    %v703 = vld [vmem:[%s2 + $0x20] sm:$0xff]
    %v704 = vld [vmem:[%s2 + $0x28] sm:$0xff]
    %v705 = vld [vmem:[%s2 + $0x30] sm:$0xff]
    %v706 = vld [vmem:[%s2 + $0x38] sm:$0xff]
    %v707 = vld [vmem:[%s2 + $0x40] sm:$0xff]
    %v708 = vld [vmem:[%s2 + $0x48] sm:$0xff]
    %v709 = vld [vmem:[%s2 + $0x50] sm:$0xff]
    %v710 = vld [vmem:[%s2 + $0x58] sm:$0xff]
    %v711 = vld [vmem:[%s2 + $0x60] sm:$0xff]
    %v712 = vld [vmem:[%s2 + $0x68] sm:$0xff]
    %v713 = vld [vmem:[%s2 + $0x70] sm:$0xff]
    %v714 = vld [vmem:[%s2 + $0x78] sm:$0xff]
    %v715 = vsel %vm470, %v692, 0
    %717 = vmatprep.subr.mxu0 %v700
    %718 = vmatpush1.msra.mxu0 %v699
    %719 = vmatprep.subr.mxu0 %v702
    %720 = vmatpush1.msra.mxu0 %v701
    %721 = vmatprep.subr.mxu0 %v704
    %722 = vmatpush1.msra.mxu0 %v703
    %723 = vmatprep.subr.mxu0 %v706
    %724 = vmatpush1.msra.mxu0 %v705
    %725 = vmatprep.subr.mxu0 %v708
    %726 = vmatpush1.msra.mxu0 %v707
    %727 = vmatprep.subr.mxu0 %v710
    %728 = vmatpush1.msra.mxu0 %v709
    %729 = vmatprep.subr.mxu0 %v712
    %730 = vmatpush1.msra.mxu0 %v711
    %731 = vmatprep.subr.mxu0 %v714
    %732 = vmatpush1.msra.mxu0 %v713
    %733 = vmatprep.subr.mxu0 0.0
    %734 = vmatpush1.msra.mxu0 0.0
    %735 = vmatprep.subr.mxu0 0.0
    %736 = vmatpush1.msra.mxu0 0.0
    %737 = vmatprep.subr.mxu0 0.0
    %738 = vmatpush1.msra.mxu0 0.0
    %739 = vmatprep.subr.mxu0 0.0
    %740 = vmatpush1.msra.mxu0 0.0
    %741 = vmatprep.subr.mxu0 0.0
    %742 = vmatpush1.msra.mxu0 0.0
    %743 = vmatprep.subr.mxu0 0.0
    %744 = vmatpush1.msra.mxu0 0.0
    %745 = vmatprep.subr.mxu0 0.0
    %746 = vmatpush1.msra.mxu0 0.0
    %747 = vmatprep.subr.mxu0 0.0
    %748 = vmatpush1.msra.mxu0 0.0
    %749 = vmatprep.subr.mxu0 0.0
    %750 = vmatpush1.msra.mxu0 0.0
    %751 = vmatprep.subr.mxu0 0.0
    %752 = vmatpush1.msra.mxu0 0.0
    %753 = vmatprep.subr.mxu0 0.0
    %754 = vmatpush1.msra.mxu0 0.0
    %755 = vmatprep.subr.mxu0 0.0
    %756 = vmatpush1.msra.mxu0 0.0
    %757 = vmatprep.subr.mxu0 0.0
    %758 = vmatpush1.msra.mxu0 0.0
    %759 = vmatprep.subr.mxu0 0.0
    %760 = vmatpush1.msra.mxu0 0.0
    %761 = vmatprep.subr.mxu0 0.0
    %762 = vmatpush1.msra.mxu0 0.0
    %763 = vmatprep.subr.mxu0 0.0
    %764 = vmatpush1.msra.mxu0 0.0
    %765 = vmatprep.subr.mxu0 0.0
    %766 = vmatpush1.msra.mxu0 0.0
    %767 = vmatprep.subr.mxu0 0.0
    %768 = vmatpush1.msra.mxu0 0.0
    %769 = vmatprep.subr.mxu0 0.0
    %770 = vmatpush1.msra.mxu0 0.0
    %771 = vmatprep.subr.mxu0 0.0
    %772 = vmatpush1.msra.mxu0 0.0
    %773 = vmatprep.subr.mxu0 0.0
    %774 = vmatpush1.msra.mxu0 0.0
    %775 = vmatprep.subr.mxu0 0.0
    %776 = vmatpush1.msra.mxu0 0.0
    %777 = vmatprep.subr.mxu0 0.0
    %778 = vmatpush1.msra.mxu0 0.0
    %779 = vmatprep.subr.mxu0 0.0
    %780 = vmatpush1.msra.mxu0 0.0
    %781 = vmatprep.mubr.f32.mxu0 0.0
    %782 = vmatmul.mubr.f32.gmra.mrb[0].mxu0 %v715
    %v783 = vpop.f32.mrb[0].mxu0
    %v784 = vadd.f32 0.0, %v783
    %v785 = vpop.f32.mrb[0].mxu0
    %v786 = vadd.f32 0.0, %v785
    %787 = vdwg.mxu0
    %v788 = vadd.f32 %v697, %v784
    %v789 = vadd.f32 %v698, %v786
    %v790 = vxor.u32 %v788, 2147483648
    %v791 = vmul.f32 %v790, 1.442695
    %v792 = vpow.pop %v791
    %v793 = vadd.f32 %v792, 1.0
    %v794 = vrcp.pop %v793
    %v795 = vmul.f32 1.0, %v794
    %v796 = vtanh.pop %v789
    %v797 = vxor.u32 %v789, 2147483648
    %v798 = vmul.f32 %v797, 1.442695
    %v799 = vpow.pop %v798
    %v800 = vadd.f32 %v799, 1.0
    %v801 = vrcp.pop %v800
    %v802 = vmul.f32 1.0, %v801
    %v803 = vmul.f32 %v795, %v687
    %v804 = vmul.f32 %v795, %v796
    %806 = vrot.lane.b32.xlu0 %v804, 64
    %v807 = vpop.permute.xlu0 %806
    %v809 = vadd.f32 %v803, %v807
    %v810 = vtanh.pop %v809
    %v811 = vmul.f32 %v802, %v810
    %813 = vrot.lane.b32.xlu0 %v811, 64
    %v814 = vpop.permute.xlu0 %813
    %s816 = scalar_lea.vmem [#allocation3], 16
    %817 = vst.msk [vmem:[%s816] sm:$0xff] %vm470, %v814
    %s818 = scalar_lea.vmem [#allocation2], 96
    %v819 = vld [vmem:[%s818] sm:$0xff]
    %v820 = vld [vmem:[%s818 + $0x8] sm:$0xff]
    %v821 = vld [vmem:[%s2] sm:$0xff]
    %v822 = vld [vmem:[%s2 + $0x8] sm:$0xff]
    %v823 = vld [vmem:[%s2 + $0x10] sm:$0xff]
    %v824 = vld [vmem:[%s2 + $0x18] sm:$0xff]
    %v825 = vld [vmem:[%s2 + $0x20] sm:$0xff]
    %v826 = vld [vmem:[%s2 + $0x28] sm:$0xff]
    %v827 = vld [vmem:[%s2 + $0x30] sm:$0xff]
    %v828 = vld [vmem:[%s2 + $0x38] sm:$0xff]
    %v829 = vld [vmem:[%s2 + $0x40] sm:$0xff]
    %v830 = vld [vmem:[%s2 + $0x48] sm:$0xff]
    %v831 = vld [vmem:[%s2 + $0x50] sm:$0xff]
    %v832 = vld [vmem:[%s2 + $0x58] sm:$0xff]
    %v833 = vld [vmem:[%s2 + $0x60] sm:$0xff]
    %v834 = vld [vmem:[%s2 + $0x68] sm:$0xff]
    %v835 = vld [vmem:[%s2 + $0x70] sm:$0xff]
    %v836 = vld [vmem:[%s2 + $0x78] sm:$0xff]
    %v837 = vsel %vm470, %v814, 0
    %839 = vmatprep.subr.mxu0 %v822
    %840 = vmatpush1.msra.mxu0 %v821
    %841 = vmatprep.subr.mxu0 %v824
    %842 = vmatpush1.msra.mxu0 %v823
    %843 = vmatprep.subr.mxu0 %v826
    %844 = vmatpush1.msra.mxu0 %v825
    %845 = vmatprep.subr.mxu0 %v828
    %846 = vmatpush1.msra.mxu0 %v827
    %847 = vmatprep.subr.mxu0 %v830
    %848 = vmatpush1.msra.mxu0 %v829
    %849 = vmatprep.subr.mxu0 %v832
    %850 = vmatpush1.msra.mxu0 %v831
    %851 = vmatprep.subr.mxu0 %v834
    %852 = vmatpush1.msra.mxu0 %v833
    %853 = vmatprep.subr.mxu0 %v836
    %854 = vmatpush1.msra.mxu0 %v835
    %855 = vmatprep.subr.mxu0 0.0
    %856 = vmatpush1.msra.mxu0 0.0
    %857 = vmatprep.subr.mxu0 0.0
    %858 = vmatpush1.msra.mxu0 0.0
    %859 = vmatprep.subr.mxu0 0.0
    %860 = vmatpush1.msra.mxu0 0.0
    %861 = vmatprep.subr.mxu0 0.0
    %862 = vmatpush1.msra.mxu0 0.0
    %863 = vmatprep.subr.mxu0 0.0
    %864 = vmatpush1.msra.mxu0 0.0
    %865 = vmatprep.subr.mxu0 0.0
    %866 = vmatpush1.msra.mxu0 0.0
    %867 = vmatprep.subr.mxu0 0.0
    %868 = vmatpush1.msra.mxu0 0.0
    %869 = vmatprep.subr.mxu0 0.0
    %870 = vmatpush1.msra.mxu0 0.0
    %871 = vmatprep.subr.mxu0 0.0
    %872 = vmatpush1.msra.mxu0 0.0
    %873 = vmatprep.subr.mxu0 0.0
    %874 = vmatpush1.msra.mxu0 0.0
    %875 = vmatprep.subr.mxu0 0.0
    %876 = vmatpush1.msra.mxu0 0.0
    %877 = vmatprep.subr.mxu0 0.0
    %878 = vmatpush1.msra.mxu0 0.0
    %879 = vmatprep.subr.mxu0 0.0
    %880 = vmatpush1.msra.mxu0 0.0
    %881 = vmatprep.subr.mxu0 0.0
    %882 = vmatpush1.msra.mxu0 0.0
    %883 = vmatprep.subr.mxu0 0.0
    %884 = vmatpush1.msra.mxu0 0.0
    %885 = vmatprep.subr.mxu0 0.0
    %886 = vmatpush1.msra.mxu0 0.0
    %887 = vmatprep.subr.mxu0 0.0
    %888 = vmatpush1.msra.mxu0 0.0
    %889 = vmatprep.subr.mxu0 0.0
    %890 = vmatpush1.msra.mxu0 0.0
    %891 = vmatprep.subr.mxu0 0.0
    %892 = vmatpush1.msra.mxu0 0.0
    %893 = vmatprep.subr.mxu0 0.0
    %894 = vmatpush1.msra.mxu0 0.0
    %895 = vmatprep.subr.mxu0 0.0
    %896 = vmatpush1.msra.mxu0 0.0
    %897 = vmatprep.subr.mxu0 0.0
    %898 = vmatpush1.msra.mxu0 0.0
    %899 = vmatprep.subr.mxu0 0.0
    %900 = vmatpush1.msra.mxu0 0.0
    %901 = vmatprep.subr.mxu0 0.0
    %902 = vmatpush1.msra.mxu0 0.0
    %903 = vmatprep.mubr.f32.mxu0 0.0
    %904 = vmatmul.mubr.f32.gmra.mrb[0].mxu0 %v837
    %v905 = vpop.f32.mrb[0].mxu0
    %v906 = vadd.f32 0.0, %v905
    %v907 = vpop.f32.mrb[0].mxu0
    %v908 = vadd.f32 0.0, %v907
    %909 = vdwg.mxu0
    %v910 = vadd.f32 %v819, %v906
    %v911 = vadd.f32 %v820, %v908
    %v912 = vxor.u32 %v910, 2147483648
    %v913 = vmul.f32 %v912, 1.442695
    %v914 = vpow.pop %v913
    %v915 = vadd.f32 %v914, 1.0
    %v916 = vrcp.pop %v915
    %v917 = vmul.f32 1.0, %v916
    %v918 = vtanh.pop %v911
    %v919 = vxor.u32 %v911, 2147483648
    %v920 = vmul.f32 %v919, 1.442695
    %v921 = vpow.pop %v920
    %v922 = vadd.f32 %v921, 1.0
    %v923 = vrcp.pop %v922
    %v924 = vmul.f32 1.0, %v923
    %v925 = vmul.f32 %v917, %v809
    %v926 = vmul.f32 %v917, %v918
    %928 = vrot.lane.b32.xlu0 %v926, 64
    %v929 = vpop.permute.xlu0 %928
    %v931 = vadd.f32 %v925, %v929
    %v932 = vtanh.pop %v931
    %v933 = vmul.f32 %v924, %v932
    %935 = vrot.lane.b32.xlu0 %v933, 64
    %v936 = vpop.permute.xlu0 %935
    %s938 = scalar_lea.vmem [#allocation3], 24
    %939 = vst.msk [vmem:[%s938] sm:$0xff] %vm470, %v936
    %s940 = scalar_lea.vmem [#allocation2], 128
    %v941 = vld [vmem:[%s940] sm:$0xff]
    %v942 = vld [vmem:[%s940 + $0x8] sm:$0xff]
    %v943 = vld [vmem:[%s2] sm:$0xff]
    %v944 = vld [vmem:[%s2 + $0x8] sm:$0xff]
    %v945 = vld [vmem:[%s2 + $0x10] sm:$0xff]
    %v946 = vld [vmem:[%s2 + $0x18] sm:$0xff]
    %v947 = vld [vmem:[%s2 + $0x20] sm:$0xff]
    %v948 = vld [vmem:[%s2 + $0x28] sm:$0xff]
    %v949 = vld [vmem:[%s2 + $0x30] sm:$0xff]
    %v950 = vld [vmem:[%s2 + $0x38] sm:$0xff]
    %v951 = vld [vmem:[%s2 + $0x40] sm:$0xff]
    %v952 = vld [vmem:[%s2 + $0x48] sm:$0xff]
    %v953 = vld [vmem:[%s2 + $0x50] sm:$0xff]
    %v954 = vld [vmem:[%s2 + $0x58] sm:$0xff]
    %v955 = vld [vmem:[%s2 + $0x60] sm:$0xff]
    %v956 = vld [vmem:[%s2 + $0x68] sm:$0xff]
    %v957 = vld [vmem:[%s2 + $0x70] sm:$0xff]
    %v958 = vld [vmem:[%s2 + $0x78] sm:$0xff]
    %v959 = vsel %vm470, %v936, 0
    %961 = vmatprep.subr.mxu0 %v944
    %962 = vmatpush1.msra.mxu0 %v943
    %963 = vmatprep.subr.mxu0 %v946
    %964 = vmatpush1.msra.mxu0 %v945
    %965 = vmatprep.subr.mxu0 %v948
    %966 = vmatpush1.msra.mxu0 %v947
    %967 = vmatprep.subr.mxu0 %v950
    %968 = vmatpush1.msra.mxu0 %v949
    %969 = vmatprep.subr.mxu0 %v952
    %970 = vmatpush1.msra.mxu0 %v951
    %971 = vmatprep.subr.mxu0 %v954
    %972 = vmatpush1.msra.mxu0 %v953
    %973 = vmatprep.subr.mxu0 %v956
    %974 = vmatpush1.msra.mxu0 %v955
    %975 = vmatprep.subr.mxu0 %v958
    %976 = vmatpush1.msra.mxu0 %v957
    %977 = vmatprep.subr.mxu0 0.0
    %978 = vmatpush1.msra.mxu0 0.0
    %979 = vmatprep.subr.mxu0 0.0
    %980 = vmatpush1.msra.mxu0 0.0
    %981 = vmatprep.subr.mxu0 0.0
    %982 = vmatpush1.msra.mxu0 0.0
    %983 = vmatprep.subr.mxu0 0.0
    %984 = vmatpush1.msra.mxu0 0.0
    %985 = vmatprep.subr.mxu0 0.0
    %986 = vmatpush1.msra.mxu0 0.0
    %987 = vmatprep.subr.mxu0 0.0
    %988 = vmatpush1.msra.mxu0 0.0
    %989 = vmatprep.subr.mxu0 0.0
    %990 = vmatpush1.msra.mxu0 0.0
    %991 = vmatprep.subr.mxu0 0.0
    %992 = vmatpush1.msra.mxu0 0.0
    %993 = vmatprep.subr.mxu0 0.0
    %994 = vmatpush1.msra.mxu0 0.0
    %995 = vmatprep.subr.mxu0 0.0
    %996 = vmatpush1.msra.mxu0 0.0
    %997 = vmatprep.subr.mxu0 0.0
    %998 = vmatpush1.msra.mxu0 0.0
    %999 = vmatprep.subr.mxu0 0.0
    %1000 = vmatpush1.msra.mxu0 0.0
    %1001 = vmatprep.subr.mxu0 0.0
    %1002 = vmatpush1.msra.mxu0 0.0
    %1003 = vmatprep.subr.mxu0 0.0
    %1004 = vmatpush1.msra.mxu0 0.0
    %1005 = vmatprep.subr.mxu0 0.0
    %1006 = vmatpush1.msra.mxu0 0.0
    %1007 = vmatprep.subr.mxu0 0.0
    %1008 = vmatpush1.msra.mxu0 0.0
    %1009 = vmatprep.subr.mxu0 0.0
    %1010 = vmatpush1.msra.mxu0 0.0
    %1011 = vmatprep.subr.mxu0 0.0
    %1012 = vmatpush1.msra.mxu0 0.0
    %1013 = vmatprep.subr.mxu0 0.0
    %1014 = vmatpush1.msra.mxu0 0.0
    %1015 = vmatprep.subr.mxu0 0.0
    %1016 = vmatpush1.msra.mxu0 0.0
    %1017 = vmatprep.subr.mxu0 0.0
    %1018 = vmatpush1.msra.mxu0 0.0
    %1019 = vmatprep.subr.mxu0 0.0
    %1020 = vmatpush1.msra.mxu0 0.0
    %1021 = vmatprep.subr.mxu0 0.0
    %1022 = vmatpush1.msra.mxu0 0.0
    %1023 = vmatprep.subr.mxu0 0.0
    %1024 = vmatpush1.msra.mxu0 0.0
    %1025 = vmatprep.mubr.f32.mxu0 0.0
    %1026 = vmatmul.mubr.f32.gmra.mrb[0].mxu0 %v959
    %v1027 = vpop.f32.mrb[0].mxu0
    %v1028 = vadd.f32 0.0, %v1027
    %v1029 = vpop.f32.mrb[0].mxu0
    %v1030 = vadd.f32 0.0, %v1029
    %1031 = vdwg.mxu0
    %v1032 = vadd.f32 %v941, %v1028
    %v1033 = vadd.f32 %v942, %v1030
    %v1034 = vxor.u32 %v1032, 2147483648
    %v1035 = vmul.f32 %v1034, 1.442695
    %v1036 = vpow.pop %v1035
    %v1037 = vadd.f32 %v1036, 1.0
    %v1038 = vrcp.pop %v1037
    %v1039 = vmul.f32 1.0, %v1038
    %v1040 = vtanh.pop %v1033
    %v1041 = vxor.u32 %v1033, 2147483648
    %v1042 = vmul.f32 %v1041, 1.442695
    %v1043 = vpow.pop %v1042
    %v1044 = vadd.f32 %v1043, 1.0
    %v1045 = vrcp.pop %v1044
    %v1046 = vmul.f32 1.0, %v1045
    %v1047 = vmul.f32 %v1039, %v931
    %v1048 = vmul.f32 %v1039, %v1040
    %1050 = vrot.lane.b32.xlu0 %v1048, 64
    %v1051 = vpop.permute.xlu0 %1050
    %v1053 = vadd.f32 %v1047, %v1051
    %v1054 = vtanh.pop %v1053
    %v1055 = vmul.f32 %v1046, %v1054
    %1057 = vrot.lane.b32.xlu0 %v1055, 64
    %v1058 = vpop.permute.xlu0 %1057
    %s1060 = scalar_lea.vmem [#allocation3], 32
    %1061 = vst.msk [vmem:[%s1060] sm:$0xff] %vm470, %v1058
    %s1062 = scalar_lea.vmem [#allocation2], 160
    %v1063 = vld [vmem:[%s1062] sm:$0xff]
    %v1064 = vld [vmem:[%s1062 + $0x8] sm:$0xff]
    %v1065 = vld [vmem:[%s2] sm:$0xff]
    %v1066 = vld [vmem:[%s2 + $0x8] sm:$0xff]
    %v1067 = vld [vmem:[%s2 + $0x10] sm:$0xff]
    %v1068 = vld [vmem:[%s2 + $0x18] sm:$0xff]
    %v1069 = vld [vmem:[%s2 + $0x20] sm:$0xff]
    %v1070 = vld [vmem:[%s2 + $0x28] sm:$0xff]
    %v1071 = vld [vmem:[%s2 + $0x30] sm:$0xff]
    %v1072 = vld [vmem:[%s2 + $0x38] sm:$0xff]
    %v1073 = vld [vmem:[%s2 + $0x40] sm:$0xff]
    %v1074 = vld [vmem:[%s2 + $0x48] sm:$0xff]
    %v1075 = vld [vmem:[%s2 + $0x50] sm:$0xff]
    %v1076 = vld [vmem:[%s2 + $0x58] sm:$0xff]
    %v1077 = vld [vmem:[%s2 + $0x60] sm:$0xff]
    %v1078 = vld [vmem:[%s2 + $0x68] sm:$0xff]
    %v1079 = vld [vmem:[%s2 + $0x70] sm:$0xff]
    %v1080 = vld [vmem:[%s2 + $0x78] sm:$0xff]
    %v1081 = vsel %vm470, %v1058, 0
    %1083 = vmatprep.subr.mxu0 %v1066
    %1084 = vmatpush1.msra.mxu0 %v1065
    %1085 = vmatprep.subr.mxu0 %v1068
    %1086 = vmatpush1.msra.mxu0 %v1067
    %1087 = vmatprep.subr.mxu0 %v1070
    %1088 = vmatpush1.msra.mxu0 %v1069
    %1089 = vmatprep.subr.mxu0 %v1072
    %1090 = vmatpush1.msra.mxu0 %v1071
    %1091 = vmatprep.subr.mxu0 %v1074
    %1092 = vmatpush1.msra.mxu0 %v1073
    %1093 = vmatprep.subr.mxu0 %v1076
    %1094 = vmatpush1.msra.mxu0 %v1075
    %1095 = vmatprep.subr.mxu0 %v1078
    %1096 = vmatpush1.msra.mxu0 %v1077
    %1097 = vmatprep.subr.mxu0 %v1080
    %1098 = vmatpush1.msra.mxu0 %v1079
    %1099 = vmatprep.subr.mxu0 0.0
    %1100 = vmatpush1.msra.mxu0 0.0
    %1101 = vmatprep.subr.mxu0 0.0
    %1102 = vmatpush1.msra.mxu0 0.0
    %1103 = vmatprep.subr.mxu0 0.0
    %1104 = vmatpush1.msra.mxu0 0.0
    %1105 = vmatprep.subr.mxu0 0.0
    %1106 = vmatpush1.msra.mxu0 0.0
    %1107 = vmatprep.subr.mxu0 0.0
    %1108 = vmatpush1.msra.mxu0 0.0
    %1109 = vmatprep.subr.mxu0 0.0
    %1110 = vmatpush1.msra.mxu0 0.0
    %1111 = vmatprep.subr.mxu0 0.0
    %1112 = vmatpush1.msra.mxu0 0.0
    %1113 = vmatprep.subr.mxu0 0.0
    %1114 = vmatpush1.msra.mxu0 0.0
    %1115 = vmatprep.subr.mxu0 0.0
    %1116 = vmatpush1.msra.mxu0 0.0
    %1117 = vmatprep.subr.mxu0 0.0
    %1118 = vmatpush1.msra.mxu0 0.0
    %1119 = vmatprep.subr.mxu0 0.0
    %1120 = vmatpush1.msra.mxu0 0.0
    %1121 = vmatprep.subr.mxu0 0.0
    %1122 = vmatpush1.msra.mxu0 0.0
    %1123 = vmatprep.subr.mxu0 0.0
    %1124 = vmatpush1.msra.mxu0 0.0
    %1125 = vmatprep.subr.mxu0 0.0
    %1126 = vmatpush1.msra.mxu0 0.0
    %1127 = vmatprep.subr.mxu0 0.0
    %1128 = vmatpush1.msra.mxu0 0.0
    %1129 = vmatprep.subr.mxu0 0.0
    %1130 = vmatpush1.msra.mxu0 0.0
    %1131 = vmatprep.subr.mxu0 0.0
    %1132 = vmatpush1.msra.mxu0 0.0
    %1133 = vmatprep.subr.mxu0 0.0
    %1134 = vmatpush1.msra.mxu0 0.0
    %1135 = vmatprep.subr.mxu0 0.0
    %1136 = vmatpush1.msra.mxu0 0.0
    %1137 = vmatprep.subr.mxu0 0.0
    %1138 = vmatpush1.msra.mxu0 0.0
    %1139 = vmatprep.subr.mxu0 0.0
    %1140 = vmatpush1.msra.mxu0 0.0
    %1141 = vmatprep.subr.mxu0 0.0
    %1142 = vmatpush1.msra.mxu0 0.0
    %1143 = vmatprep.subr.mxu0 0.0
    %1144 = vmatpush1.msra.mxu0 0.0
    %1145 = vmatprep.subr.mxu0 0.0
    %1146 = vmatpush1.msra.mxu0 0.0
    %1147 = vmatprep.mubr.f32.mxu0 0.0
    %1148 = vmatmul.mubr.f32.gmra.mrb[0].mxu0 %v1081
    %v1149 = vpop.f32.mrb[0].mxu0
    %v1150 = vadd.f32 0.0, %v1149
    %v1151 = vpop.f32.mrb[0].mxu0
    %v1152 = vadd.f32 0.0, %v1151
    %1153 = vdwg.mxu0
    %v1154 = vadd.f32 %v1063, %v1150
    %v1155 = vadd.f32 %v1064, %v1152
    %v1156 = vxor.u32 %v1154, 2147483648
    %v1157 = vmul.f32 %v1156, 1.442695
    %v1158 = vpow.pop %v1157
    %v1159 = vadd.f32 %v1158, 1.0
    %v1160 = vrcp.pop %v1159
    %v1161 = vmul.f32 1.0, %v1160
    %v1162 = vtanh.pop %v1155
    %v1163 = vxor.u32 %v1155, 2147483648
    %v1164 = vmul.f32 %v1163, 1.442695
    %v1165 = vpow.pop %v1164
    %v1166 = vadd.f32 %v1165, 1.0
    %v1167 = vrcp.pop %v1166
    %v1168 = vmul.f32 1.0, %v1167
    %v1169 = vmul.f32 %v1161, %v1053
    %v1170 = vmul.f32 %v1161, %v1162
    %1172 = vrot.lane.b32.xlu0 %v1170, 64
    %v1173 = vpop.permute.xlu0 %1172
    %v1175 = vadd.f32 %v1169, %v1173
    %v1176 = vtanh.pop %v1175
    %v1177 = vmul.f32 %v1168, %v1176
    %1179 = vrot.lane.b32.xlu0 %v1177, 64
    %v1180 = vpop.permute.xlu0 %1179
    %s1182 = scalar_lea.vmem [#allocation3], 40
    %1183 = vst.msk [vmem:[%s1182] sm:$0xff] %vm470, %v1180
    %s1184 = scalar_lea.vmem [#allocation2], 192
    %v1185 = vld [vmem:[%s1184] sm:$0xff]
    %v1186 = vld [vmem:[%s1184 + $0x8] sm:$0xff]
    %v1187 = vld [vmem:[%s2] sm:$0xff]
    %v1188 = vld [vmem:[%s2 + $0x8] sm:$0xff]
    %v1189 = vld [vmem:[%s2 + $0x10] sm:$0xff]
    %v1190 = vld [vmem:[%s2 + $0x18] sm:$0xff]
    %v1191 = vld [vmem:[%s2 + $0x20] sm:$0xff]
    %v1192 = vld [vmem:[%s2 + $0x28] sm:$0xff]
    %v1193 = vld [vmem:[%s2 + $0x30] sm:$0xff]
    %v1194 = vld [vmem:[%s2 + $0x38] sm:$0xff]
    %v1195 = vld [vmem:[%s2 + $0x40] sm:$0xff]
    %v1196 = vld [vmem:[%s2 + $0x48] sm:$0xff]
    %v1197 = vld [vmem:[%s2 + $0x50] sm:$0xff]
    %v1198 = vld [vmem:[%s2 + $0x58] sm:$0xff]
    %v1199 = vld [vmem:[%s2 + $0x60] sm:$0xff]
    %v1200 = vld [vmem:[%s2 + $0x68] sm:$0xff]
    %v1201 = vld [vmem:[%s2 + $0x70] sm:$0xff]
    %v1202 = vld [vmem:[%s2 + $0x78] sm:$0xff]
    %v1203 = vsel %vm470, %v1180, 0
    %1205 = vmatprep.subr.mxu0 %v1188
    %1206 = vmatpush1.msra.mxu0 %v1187
    %1207 = vmatprep.subr.mxu0 %v1190
    %1208 = vmatpush1.msra.mxu0 %v1189
    %1209 = vmatprep.subr.mxu0 %v1192
    %1210 = vmatpush1.msra.mxu0 %v1191
    %1211 = vmatprep.subr.mxu0 %v1194
    %1212 = vmatpush1.msra.mxu0 %v1193
    %1213 = vmatprep.subr.mxu0 %v1196
    %1214 = vmatpush1.msra.mxu0 %v1195
    %1215 = vmatprep.subr.mxu0 %v1198
    %1216 = vmatpush1.msra.mxu0 %v1197
    %1217 = vmatprep.subr.mxu0 %v1200
    %1218 = vmatpush1.msra.mxu0 %v1199
    %1219 = vmatprep.subr.mxu0 %v1202
    %1220 = vmatpush1.msra.mxu0 %v1201
    %1221 = vmatprep.subr.mxu0 0.0
    %1222 = vmatpush1.msra.mxu0 0.0
    %1223 = vmatprep.subr.mxu0 0.0
    %1224 = vmatpush1.msra.mxu0 0.0
    %1225 = vmatprep.subr.mxu0 0.0
    %1226 = vmatpush1.msra.mxu0 0.0
    %1227 = vmatprep.subr.mxu0 0.0
    %1228 = vmatpush1.msra.mxu0 0.0
    %1229 = vmatprep.subr.mxu0 0.0
    %1230 = vmatpush1.msra.mxu0 0.0
    %1231 = vmatprep.subr.mxu0 0.0
    %1232 = vmatpush1.msra.mxu0 0.0
    %1233 = vmatprep.subr.mxu0 0.0
    %1234 = vmatpush1.msra.mxu0 0.0
    %1235 = vmatprep.subr.mxu0 0.0
    %1236 = vmatpush1.msra.mxu0 0.0
    %1237 = vmatprep.subr.mxu0 0.0
    %1238 = vmatpush1.msra.mxu0 0.0
    %1239 = vmatprep.subr.mxu0 0.0
    %1240 = vmatpush1.msra.mxu0 0.0
    %1241 = vmatprep.subr.mxu0 0.0
    %1242 = vmatpush1.msra.mxu0 0.0
    %1243 = vmatprep.subr.mxu0 0.0
    %1244 = vmatpush1.msra.mxu0 0.0
    %1245 = vmatprep.subr.mxu0 0.0
    %1246 = vmatpush1.msra.mxu0 0.0
    %1247 = vmatprep.subr.mxu0 0.0
    %1248 = vmatpush1.msra.mxu0 0.0
    %1249 = vmatprep.subr.mxu0 0.0
    %1250 = vmatpush1.msra.mxu0 0.0
    %1251 = vmatprep.subr.mxu0 0.0
    %1252 = vmatpush1.msra.mxu0 0.0
    %1253 = vmatprep.subr.mxu0 0.0
    %1254 = vmatpush1.msra.mxu0 0.0
    %1255 = vmatprep.subr.mxu0 0.0
    %1256 = vmatpush1.msra.mxu0 0.0
    %1257 = vmatprep.subr.mxu0 0.0
    %1258 = vmatpush1.msra.mxu0 0.0
    %1259 = vmatprep.subr.mxu0 0.0
    %1260 = vmatpush1.msra.mxu0 0.0
    %1261 = vmatprep.subr.mxu0 0.0
    %1262 = vmatpush1.msra.mxu0 0.0
    %1263 = vmatprep.subr.mxu0 0.0
    %1264 = vmatpush1.msra.mxu0 0.0
    %1265 = vmatprep.subr.mxu0 0.0
    %1266 = vmatpush1.msra.mxu0 0.0
    %1267 = vmatprep.subr.mxu0 0.0
    %1268 = vmatpush1.msra.mxu0 0.0
    %1269 = vmatprep.mubr.f32.mxu0 0.0
    %1270 = vmatmul.mubr.f32.gmra.mrb[0].mxu0 %v1203
    %v1271 = vpop.f32.mrb[0].mxu0
    %v1272 = vadd.f32 0.0, %v1271
    %v1273 = vpop.f32.mrb[0].mxu0
    %v1274 = vadd.f32 0.0, %v1273
    %1275 = vdwg.mxu0
    %v1276 = vadd.f32 %v1185, %v1272
    %v1277 = vadd.f32 %v1186, %v1274
    %v1278 = vxor.u32 %v1276, 2147483648
    %v1279 = vmul.f32 %v1278, 1.442695
    %v1280 = vpow.pop %v1279
    %v1281 = vadd.f32 %v1280, 1.0
    %v1282 = vrcp.pop %v1281
    %v1283 = vmul.f32 1.0, %v1282
    %v1284 = vtanh.pop %v1277
    %v1285 = vxor.u32 %v1277, 2147483648
    %v1286 = vmul.f32 %v1285, 1.442695
    %v1287 = vpow.pop %v1286
    %v1288 = vadd.f32 %v1287, 1.0
    %v1289 = vrcp.pop %v1288
    %v1290 = vmul.f32 1.0, %v1289
    %v1291 = vmul.f32 %v1283, %v1175
    %v1292 = vmul.f32 %v1283, %v1284
    %1294 = vrot.lane.b32.xlu0 %v1292, 64
    %v1295 = vpop.permute.xlu0 %1294
    %v1297 = vadd.f32 %v1291, %v1295
    %v1298 = vtanh.pop %v1297
    %v1299 = vmul.f32 %v1290, %v1298
    %1301 = vrot.lane.b32.xlu0 %v1299, 64
    %v1302 = vpop.permute.xlu0 %1301
    %s1304 = scalar_lea.vmem [#allocation3], 48
    %1305 = vst.msk [vmem:[%s1304] sm:$0xff] %vm470, %v1302
    %s1306 = scalar_lea.vmem [#allocation2], 224
    %v1307 = vld [vmem:[%s1306] sm:$0xff]
    %v1308 = vld [vmem:[%s1306 + $0x8] sm:$0xff]
    %v1309 = vld [vmem:[%s2] sm:$0xff]
    %v1310 = vld [vmem:[%s2 + $0x8] sm:$0xff]
    %v1311 = vld [vmem:[%s2 + $0x10] sm:$0xff]
    %v1312 = vld [vmem:[%s2 + $0x18] sm:$0xff]
    %v1313 = vld [vmem:[%s2 + $0x20] sm:$0xff]
    %v1314 = vld [vmem:[%s2 + $0x28] sm:$0xff]
    %v1315 = vld [vmem:[%s2 + $0x30] sm:$0xff]
    %v1316 = vld [vmem:[%s2 + $0x38] sm:$0xff]
    %v1317 = vld [vmem:[%s2 + $0x40] sm:$0xff]
    %v1318 = vld [vmem:[%s2 + $0x48] sm:$0xff]
    %v1319 = vld [vmem:[%s2 + $0x50] sm:$0xff]
    %v1320 = vld [vmem:[%s2 + $0x58] sm:$0xff]
    %v1321 = vld [vmem:[%s2 + $0x60] sm:$0xff]
    %v1322 = vld [vmem:[%s2 + $0x68] sm:$0xff]
    %v1323 = vld [vmem:[%s2 + $0x70] sm:$0xff]
    %v1324 = vld [vmem:[%s2 + $0x78] sm:$0xff]
    %v1325 = vsel %vm470, %v1302, 0
    %1327 = vmatprep.subr.mxu0 %v1310
    %1328 = vmatpush1.msra.mxu0 %v1309
    %1329 = vmatprep.subr.mxu0 %v1312
    %1330 = vmatpush1.msra.mxu0 %v1311
    %1331 = vmatprep.subr.mxu0 %v1314
    %1332 = vmatpush1.msra.mxu0 %v1313
    %1333 = vmatprep.subr.mxu0 %v1316
    %1334 = vmatpush1.msra.mxu0 %v1315
    %1335 = vmatprep.subr.mxu0 %v1318
    %1336 = vmatpush1.msra.mxu0 %v1317
    %1337 = vmatprep.subr.mxu0 %v1320
    %1338 = vmatpush1.msra.mxu0 %v1319
    %1339 = vmatprep.subr.mxu0 %v1322
    %1340 = vmatpush1.msra.mxu0 %v1321
    %1341 = vmatprep.subr.mxu0 %v1324
    %1342 = vmatpush1.msra.mxu0 %v1323
    %1343 = vmatprep.subr.mxu0 0.0
    %1344 = vmatpush1.msra.mxu0 0.0
    %1345 = vmatprep.subr.mxu0 0.0
    %1346 = vmatpush1.msra.mxu0 0.0
    %1347 = vmatprep.subr.mxu0 0.0
    %1348 = vmatpush1.msra.mxu0 0.0
    %1349 = vmatprep.subr.mxu0 0.0
    %1350 = vmatpush1.msra.mxu0 0.0
    %1351 = vmatprep.subr.mxu0 0.0
    %1352 = vmatpush1.msra.mxu0 0.0
    %1353 = vmatprep.subr.mxu0 0.0
    %1354 = vmatpush1.msra.mxu0 0.0
    %1355 = vmatprep.subr.mxu0 0.0
    %1356 = vmatpush1.msra.mxu0 0.0
    %1357 = vmatprep.subr.mxu0 0.0
    %1358 = vmatpush1.msra.mxu0 0.0
    %1359 = vmatprep.subr.mxu0 0.0
    %1360 = vmatpush1.msra.mxu0 0.0
    %1361 = vmatprep.subr.mxu0 0.0
    %1362 = vmatpush1.msra.mxu0 0.0
    %1363 = vmatprep.subr.mxu0 0.0
    %1364 = vmatpush1.msra.mxu0 0.0
    %1365 = vmatprep.subr.mxu0 0.0
    %1366 = vmatpush1.msra.mxu0 0.0
    %1367 = vmatprep.subr.mxu0 0.0
    %1368 = vmatpush1.msra.mxu0 0.0
    %1369 = vmatprep.subr.mxu0 0.0
    %1370 = vmatpush1.msra.mxu0 0.0
    %1371 = vmatprep.subr.mxu0 0.0
    %1372 = vmatpush1.msra.mxu0 0.0
    %1373 = vmatprep.subr.mxu0 0.0
    %1374 = vmatpush1.msra.mxu0 0.0
    %1375 = vmatprep.subr.mxu0 0.0
    %1376 = vmatpush1.msra.mxu0 0.0
    %1377 = vmatprep.subr.mxu0 0.0
    %1378 = vmatpush1.msra.mxu0 0.0
    %1379 = vmatprep.subr.mxu0 0.0
    %1380 = vmatpush1.msra.mxu0 0.0
    %1381 = vmatprep.subr.mxu0 0.0
    %1382 = vmatpush1.msra.mxu0 0.0
    %1383 = vmatprep.subr.mxu0 0.0
    %1384 = vmatpush1.msra.mxu0 0.0
    %1385 = vmatprep.subr.mxu0 0.0
    %1386 = vmatpush1.msra.mxu0 0.0
    %1387 = vmatprep.subr.mxu0 0.0
    %1388 = vmatpush1.msra.mxu0 0.0
    %1389 = vmatprep.subr.mxu0 0.0
    %1390 = vmatpush1.msra.mxu0 0.0
    %1391 = vmatprep.mubr.f32.mxu0 0.0
    %1392 = vmatmul.mubr.f32.gmra.mrb[0].mxu0 %v1325
    %v1393 = vpop.f32.mrb[0].mxu0
    %v1394 = vadd.f32 0.0, %v1393
    %v1395 = vpop.f32.mrb[0].mxu0
    %v1396 = vadd.f32 0.0, %v1395
    %1397 = vdwg.mxu0
    %v1398 = vadd.f32 %v1307, %v1394
    %v1399 = vadd.f32 %v1308, %v1396
    %v1400 = vxor.u32 %v1398, 2147483648
    %v1401 = vmul.f32 %v1400, 1.442695
    %v1402 = vpow.pop %v1401
    %v1403 = vadd.f32 %v1402, 1.0
    %v1404 = vrcp.pop %v1403
    %v1405 = vmul.f32 1.0, %v1404
    %v1406 = vtanh.pop %v1399
    %v1407 = vxor.u32 %v1399, 2147483648
    %v1408 = vmul.f32 %v1407, 1.442695
    %v1409 = vpow.pop %v1408
    %v1410 = vadd.f32 %v1409, 1.0
    %v1411 = vrcp.pop %v1410
    %v1412 = vmul.f32 1.0, %v1411
    %v1413 = vmul.f32 %v1405, %v1297
    %v1414 = vmul.f32 %v1405, %v1406
    %1416 = vrot.lane.b32.xlu0 %v1414, 64
    %v1417 = vpop.permute.xlu0 %1416
    %v1419 = vadd.f32 %v1413, %v1417
    %v1420 = vtanh.pop %v1419
    %v1421 = vmul.f32 %v1412, %v1420
    %1423 = vrot.lane.b32.xlu0 %v1421, 64
    %v1424 = vpop.permute.xlu0 %1423
    %s1426 = scalar_lea.vmem [#allocation3], 56
    %1427 = vst.msk [vmem:[%s1426] sm:$0xff] %vm470, %v1424
    %v1428 = vld [vmem:[%s1306 + $0x10] sm:$0xff]
    %v1429 = vld [vmem:[%s1306 + $0x18] sm:$0xff]
    %v1430 = vld [vmem:[#allocation7] sm:$0xff]
    %v1431 = vld [vmem:[#allocation7 + $0x8] sm:$0xff]
    %v1432 = vld [vmem:[#allocation7 + $0x10] sm:$0xff]
    %v1433 = vld [vmem:[#allocation7 + $0x18] sm:$0xff]
    %v1434 = vld [vmem:[#allocation7 + $0x20] sm:$0xff]
    %v1435 = vld [vmem:[#allocation7 + $0x28] sm:$0xff]
    %v1436 = vld [vmem:[#allocation7 + $0x30] sm:$0xff]
    %v1437 = vld [vmem:[#allocation7 + $0x38] sm:$0xff]
    %v1438 = vld [vmem:[#allocation7 + $0x40] sm:$0xff]
    %v1439 = vld [vmem:[#allocation7 + $0x48] sm:$0xff]
    %v1440 = vld [vmem:[#allocation7 + $0x50] sm:$0xff]
    %v1441 = vld [vmem:[#allocation7 + $0x58] sm:$0xff]
    %v1442 = vld [vmem:[#allocation7 + $0x60] sm:$0xff]
    %v1443 = vld [vmem:[#allocation7 + $0x68] sm:$0xff]
    %v1444 = vld [vmem:[#allocation7 + $0x70] sm:$0xff]
    %v1445 = vld [vmem:[#allocation7 + $0x78] sm:$0xff]
    %1446 = vmatprep.subr.mxu0 %v1431
    %1447 = vmatpush1.msra.mxu0 %v1430
    %1448 = vmatprep.subr.mxu0 %v1433
    %1449 = vmatpush1.msra.mxu0 %v1432
    %1450 = vmatprep.subr.mxu0 %v1435
    %1451 = vmatpush1.msra.mxu0 %v1434
    %1452 = vmatprep.subr.mxu0 %v1437
    %1453 = vmatpush1.msra.mxu0 %v1436
    %1454 = vmatprep.subr.mxu0 %v1439
    %1455 = vmatpush1.msra.mxu0 %v1438
    %1456 = vmatprep.subr.mxu0 %v1441
    %1457 = vmatpush1.msra.mxu0 %v1440
    %1458 = vmatprep.subr.mxu0 %v1443
    %1459 = vmatpush1.msra.mxu0 %v1442
    %1460 = vmatprep.subr.mxu0 %v1445
    %1461 = vmatpush1.msra.mxu0 %v1444
    %1462 = vmatprep.subr.mxu0 0.0
    %1463 = vmatpush1.msra.mxu0 0.0
    %1464 = vmatprep.subr.mxu0 0.0
    %1465 = vmatpush1.msra.mxu0 0.0
    %1466 = vmatprep.subr.mxu0 0.0
    %1467 = vmatpush1.msra.mxu0 0.0
    %1468 = vmatprep.subr.mxu0 0.0
    %1469 = vmatpush1.msra.mxu0 0.0
    %1470 = vmatprep.subr.mxu0 0.0
    %1471 = vmatpush1.msra.mxu0 0.0
    %1472 = vmatprep.subr.mxu0 0.0
    %1473 = vmatpush1.msra.mxu0 0.0
    %1474 = vmatprep.subr.mxu0 0.0
    %1475 = vmatpush1.msra.mxu0 0.0
    %1476 = vmatprep.subr.mxu0 0.0
    %1477 = vmatpush1.msra.mxu0 0.0
    %1478 = vmatprep.subr.mxu0 0.0
    %1479 = vmatpush1.msra.mxu0 0.0
    %1480 = vmatprep.subr.mxu0 0.0
    %1481 = vmatpush1.msra.mxu0 0.0
    %1482 = vmatprep.subr.mxu0 0.0
    %1483 = vmatpush1.msra.mxu0 0.0
    %1484 = vmatprep.subr.mxu0 0.0
    %1485 = vmatpush1.msra.mxu0 0.0
    %1486 = vmatprep.subr.mxu0 0.0
    %1487 = vmatpush1.msra.mxu0 0.0
    %1488 = vmatprep.subr.mxu0 0.0
    %1489 = vmatpush1.msra.mxu0 0.0
    %1490 = vmatprep.subr.mxu0 0.0
    %1491 = vmatpush1.msra.mxu0 0.0
    %1492 = vmatprep.subr.mxu0 0.0
    %1493 = vmatpush1.msra.mxu0 0.0
    %1494 = vmatprep.subr.mxu0 0.0
    %1495 = vmatpush1.msra.mxu0 0.0
    %1496 = vmatprep.subr.mxu0 0.0
    %1497 = vmatpush1.msra.mxu0 0.0
    %1498 = vmatprep.subr.mxu0 0.0
    %1499 = vmatpush1.msra.mxu0 0.0
    %1500 = vmatprep.subr.mxu0 0.0
    %1501 = vmatpush1.msra.mxu0 0.0
    %1502 = vmatprep.subr.mxu0 0.0
    %1503 = vmatpush1.msra.mxu0 0.0
    %1504 = vmatprep.subr.mxu0 0.0
    %1505 = vmatpush1.msra.mxu0 0.0
    %1506 = vmatprep.subr.mxu0 0.0
    %1507 = vmatpush1.msra.mxu0 0.0
    %1508 = vmatprep.subr.mxu0 0.0
    %1509 = vmatpush1.msra.mxu0 0.0
    %1510 = vmatprep.mubr.f32.mxu0 0.0
    %1511 = vmatmul.mubr.f32.gmra.mrb[0].mxu0 %v472
    %v1512 = vpop.f32.mrb[0].mxu0
    %v1513 = vadd.f32 0.0, %v1512
    %v1514 = vpop.f32.mrb[0].mxu0
    %v1515 = vadd.f32 0.0, %v1514
    %1516 = vdwg.mxu0
    %v1517 = vadd.f32 %v1428, %v1513
    %v1518 = vadd.f32 %v1429, %v1515
    %v1519 = vxor.u32 %v1517, 2147483648
    %v1520 = vmul.f32 %v1519, 1.442695
    %v1521 = vpow.pop %v1520
    %v1522 = vadd.f32 %v1521, 1.0
    %v1523 = vrcp.pop %v1522
    %v1524 = vmul.f32 1.0, %v1523
    %v1525 = vtanh.pop %v1518
    %v1526 = vxor.u32 %v1518, 2147483648
    %v1527 = vmul.f32 %v1526, 1.442695
    %v1528 = vpow.pop %v1527
    %v1529 = vadd.f32 %v1528, 1.0
    %v1530 = vrcp.pop %v1529
    %v1531 = vmul.f32 1.0, %v1530
    %v1532 = vmul.f32 %v1524, 0.0
    %v1533 = vmul.f32 %v1524, %v1525
    %1535 = vrot.lane.b32.xlu0 %v1533, 64
    %v1536 = vpop.permute.xlu0 %1535
    %v1538 = vadd.f32 %v1532, %v1536
    %v1539 = vtanh.pop %v1538
    %v1540 = vmul.f32 %v1531, %v1539
    %vm1541 = vcmask 1048064
    %1542 = vst.msk [vmem:[%s1426] sm:$0xff] %vm1541, %v1540
    %v1543 = vld [vmem:[%s1184 + $0x10] sm:$0xff]
    %v1544 = vld [vmem:[%s1184 + $0x18] sm:$0xff]
    %v1545 = vld [vmem:[#allocation7] sm:$0xff]
    %v1546 = vld [vmem:[#allocation7 + $0x8] sm:$0xff]
    %v1547 = vld [vmem:[#allocation7 + $0x10] sm:$0xff]
    %v1548 = vld [vmem:[#allocation7 + $0x18] sm:$0xff]
    %v1549 = vld [vmem:[#allocation7 + $0x20] sm:$0xff]
    %v1550 = vld [vmem:[#allocation7 + $0x28] sm:$0xff]
    %v1551 = vld [vmem:[#allocation7 + $0x30] sm:$0xff]
    %v1552 = vld [vmem:[#allocation7 + $0x38] sm:$0xff]
    %v1553 = vld [vmem:[#allocation7 + $0x40] sm:$0xff]
    %v1554 = vld [vmem:[#allocation7 + $0x48] sm:$0xff]
    %v1555 = vld [vmem:[#allocation7 + $0x50] sm:$0xff]
    %v1556 = vld [vmem:[#allocation7 + $0x58] sm:$0xff]
    %v1557 = vld [vmem:[#allocation7 + $0x60] sm:$0xff]
    %v1558 = vld [vmem:[#allocation7 + $0x68] sm:$0xff]
    %v1559 = vld [vmem:[#allocation7 + $0x70] sm:$0xff]
    %v1560 = vld [vmem:[#allocation7 + $0x78] sm:$0xff]
    %1562 = vrot.lane.b32.xlu0 %v1540, 64
    %v1563 = vpop.permute.xlu0 %1562
    %v1564 = vsel %vm470, %v1563, 0
    %1566 = vmatprep.subr.mxu0 %v1546
    %1567 = vmatpush1.msra.mxu0 %v1545
    %1568 = vmatprep.subr.mxu0 %v1548
    %1569 = vmatpush1.msra.mxu0 %v1547
    %1570 = vmatprep.subr.mxu0 %v1550
    %1571 = vmatpush1.msra.mxu0 %v1549
    %1572 = vmatprep.subr.mxu0 %v1552
    %1573 = vmatpush1.msra.mxu0 %v1551
    %1574 = vmatprep.subr.mxu0 %v1554
    %1575 = vmatpush1.msra.mxu0 %v1553
    %1576 = vmatprep.subr.mxu0 %v1556
    %1577 = vmatpush1.msra.mxu0 %v1555
    %1578 = vmatprep.subr.mxu0 %v1558
    %1579 = vmatpush1.msra.mxu0 %v1557
    %1580 = vmatprep.subr.mxu0 %v1560
    %1581 = vmatpush1.msra.mxu0 %v1559
    %1582 = vmatprep.subr.mxu0 0.0
    %1583 = vmatpush1.msra.mxu0 0.0
    %1584 = vmatprep.subr.mxu0 0.0
    %1585 = vmatpush1.msra.mxu0 0.0
    %1586 = vmatprep.subr.mxu0 0.0
    %1587 = vmatpush1.msra.mxu0 0.0
    %1588 = vmatprep.subr.mxu0 0.0
    %1589 = vmatpush1.msra.mxu0 0.0
    %1590 = vmatprep.subr.mxu0 0.0
    %1591 = vmatpush1.msra.mxu0 0.0
    %1592 = vmatprep.subr.mxu0 0.0
    %1593 = vmatpush1.msra.mxu0 0.0
    %1594 = vmatprep.subr.mxu0 0.0
    %1595 = vmatpush1.msra.mxu0 0.0
    %1596 = vmatprep.subr.mxu0 0.0
    %1597 = vmatpush1.msra.mxu0 0.0
    %1598 = vmatprep.subr.mxu0 0.0
    %1599 = vmatpush1.msra.mxu0 0.0
    %1600 = vmatprep.subr.mxu0 0.0
    %1601 = vmatpush1.msra.mxu0 0.0
    %1602 = vmatprep.subr.mxu0 0.0
    %1603 = vmatpush1.msra.mxu0 0.0
    %1604 = vmatprep.subr.mxu0 0.0
    %1605 = vmatpush1.msra.mxu0 0.0
    %1606 = vmatprep.subr.mxu0 0.0
    %1607 = vmatpush1.msra.mxu0 0.0
    %1608 = vmatprep.subr.mxu0 0.0
    %1609 = vmatpush1.msra.mxu0 0.0
    %1610 = vmatprep.subr.mxu0 0.0
    %1611 = vmatpush1.msra.mxu0 0.0
    %1612 = vmatprep.subr.mxu0 0.0
    %1613 = vmatpush1.msra.mxu0 0.0
    %1614 = vmatprep.subr.mxu0 0.0
    %1615 = vmatpush1.msra.mxu0 0.0
    %1616 = vmatprep.subr.mxu0 0.0
    %1617 = vmatpush1.msra.mxu0 0.0
    %1618 = vmatprep.subr.mxu0 0.0
    %1619 = vmatpush1.msra.mxu0 0.0
    %1620 = vmatprep.subr.mxu0 0.0
    %1621 = vmatpush1.msra.mxu0 0.0
    %1622 = vmatprep.subr.mxu0 0.0
    %1623 = vmatpush1.msra.mxu0 0.0
    %1624 = vmatprep.subr.mxu0 0.0
    %1625 = vmatpush1.msra.mxu0 0.0
    %1626 = vmatprep.subr.mxu0 0.0
    %1627 = vmatpush1.msra.mxu0 0.0
    %1628 = vmatprep.subr.mxu0 0.0
    %1629 = vmatpush1.msra.mxu0 0.0
    %1630 = vmatprep.mubr.f32.mxu0 0.0
    %1631 = vmatmul.mubr.f32.gmra.mrb[0].mxu0 %v1564
    %v1632 = vpop.f32.mrb[0].mxu0
    %v1633 = vadd.f32 0.0, %v1632
    %v1634 = vpop.f32.mrb[0].mxu0
    %v1635 = vadd.f32 0.0, %v1634
    %1636 = vdwg.mxu0
    %v1637 = vadd.f32 %v1543, %v1633
    %v1638 = vadd.f32 %v1544, %v1635
    %v1639 = vxor.u32 %v1637, 2147483648
    %v1640 = vmul.f32 %v1639, 1.442695
    %v1641 = vpow.pop %v1640
    %v1642 = vadd.f32 %v1641, 1.0
    %v1643 = vrcp.pop %v1642
    %v1644 = vmul.f32 1.0, %v1643
    %v1645 = vtanh.pop %v1638
    %v1646 = vxor.u32 %v1638, 2147483648
    %v1647 = vmul.f32 %v1646, 1.442695
    %v1648 = vpow.pop %v1647
    %v1649 = vadd.f32 %v1648, 1.0
    %v1650 = vrcp.pop %v1649
    %v1651 = vmul.f32 1.0, %v1650
    %v1652 = vmul.f32 %v1644, %v1538
    %v1653 = vmul.f32 %v1644, %v1645
    %1655 = vrot.lane.b32.xlu0 %v1653, 64
    %v1656 = vpop.permute.xlu0 %1655
    %v1658 = vadd.f32 %v1652, %v1656
    %v1659 = vtanh.pop %v1658
    %v1660 = vmul.f32 %v1651, %v1659
    %1661 = vst.msk [vmem:[%s1304] sm:$0xff] %vm1541, %v1660
    %v1662 = vld [vmem:[%s1062 + $0x10] sm:$0xff]
    %v1663 = vld [vmem:[%s1062 + $0x18] sm:$0xff]
    %v1664 = vld [vmem:[#allocation7] sm:$0xff]
    %v1665 = vld [vmem:[#allocation7 + $0x8] sm:$0xff]
    %v1666 = vld [vmem:[#allocation7 + $0x10] sm:$0xff]
    %v1667 = vld [vmem:[#allocation7 + $0x18] sm:$0xff]
    %v1668 = vld [vmem:[#allocation7 + $0x20] sm:$0xff]
    %v1669 = vld [vmem:[#allocation7 + $0x28] sm:$0xff]
    %v1670 = vld [vmem:[#allocation7 + $0x30] sm:$0xff]
    %v1671 = vld [vmem:[#allocation7 + $0x38] sm:$0xff]
    %v1672 = vld [vmem:[#allocation7 + $0x40] sm:$0xff]
    %v1673 = vld [vmem:[#allocation7 + $0x48] sm:$0xff]
    %v1674 = vld [vmem:[#allocation7 + $0x50] sm:$0xff]
    %v1675 = vld [vmem:[#allocation7 + $0x58] sm:$0xff]
    %v1676 = vld [vmem:[#allocation7 + $0x60] sm:$0xff]
    %v1677 = vld [vmem:[#allocation7 + $0x68] sm:$0xff]
    %v1678 = vld [vmem:[#allocation7 + $0x70] sm:$0xff]
    %v1679 = vld [vmem:[#allocation7 + $0x78] sm:$0xff]
    %1681 = vrot.lane.b32.xlu0 %v1660, 64
    %v1682 = vpop.permute.xlu0 %1681
    %v1683 = vsel %vm470, %v1682, 0
    %1685 = vmatprep.subr.mxu0 %v1665
    %1686 = vmatpush1.msra.mxu0 %v1664
    %1687 = vmatprep.subr.mxu0 %v1667
    %1688 = vmatpush1.msra.mxu0 %v1666
    %1689 = vmatprep.subr.mxu0 %v1669
    %1690 = vmatpush1.msra.mxu0 %v1668
    %1691 = vmatprep.subr.mxu0 %v1671
    %1692 = vmatpush1.msra.mxu0 %v1670
    %1693 = vmatprep.subr.mxu0 %v1673
    %1694 = vmatpush1.msra.mxu0 %v1672
    %1695 = vmatprep.subr.mxu0 %v1675
    %1696 = vmatpush1.msra.mxu0 %v1674
    %1697 = vmatprep.subr.mxu0 %v1677
    %1698 = vmatpush1.msra.mxu0 %v1676
    %1699 = vmatprep.subr.mxu0 %v1679
    %1700 = vmatpush1.msra.mxu0 %v1678
    %1701 = vmatprep.subr.mxu0 0.0
    %1702 = vmatpush1.msra.mxu0 0.0
    %1703 = vmatprep.subr.mxu0 0.0
    %1704 = vmatpush1.msra.mxu0 0.0
    %1705 = vmatprep.subr.mxu0 0.0
    %1706 = vmatpush1.msra.mxu0 0.0
    %1707 = vmatprep.subr.mxu0 0.0
    %1708 = vmatpush1.msra.mxu0 0.0
    %1709 = vmatprep.subr.mxu0 0.0
    %1710 = vmatpush1.msra.mxu0 0.0
    %1711 = vmatprep.subr.mxu0 0.0
    %1712 = vmatpush1.msra.mxu0 0.0
    %1713 = vmatprep.subr.mxu0 0.0
    %1714 = vmatpush1.msra.mxu0 0.0
    %1715 = vmatprep.subr.mxu0 0.0
    %1716 = vmatpush1.msra.mxu0 0.0
    %1717 = vmatprep.subr.mxu0 0.0
    %1718 = vmatpush1.msra.mxu0 0.0
    %1719 = vmatprep.subr.mxu0 0.0
    %1720 = vmatpush1.msra.mxu0 0.0
    %1721 = vmatprep.subr.mxu0 0.0
    %1722 = vmatpush1.msra.mxu0 0.0
    %1723 = vmatprep.subr.mxu0 0.0
    %1724 = vmatpush1.msra.mxu0 0.0
    %1725 = vmatprep.subr.mxu0 0.0
    %1726 = vmatpush1.msra.mxu0 0.0
    %1727 = vmatprep.subr.mxu0 0.0
    %1728 = vmatpush1.msra.mxu0 0.0
    %1729 = vmatprep.subr.mxu0 0.0
    %1730 = vmatpush1.msra.mxu0 0.0
    %1731 = vmatprep.subr.mxu0 0.0
    %1732 = vmatpush1.msra.mxu0 0.0
    %1733 = vmatprep.subr.mxu0 0.0
    %1734 = vmatpush1.msra.mxu0 0.0
    %1735 = vmatprep.subr.mxu0 0.0
    %1736 = vmatpush1.msra.mxu0 0.0
    %1737 = vmatprep.subr.mxu0 0.0
    %1738 = vmatpush1.msra.mxu0 0.0
    %1739 = vmatprep.subr.mxu0 0.0
    %1740 = vmatpush1.msra.mxu0 0.0
    %1741 = vmatprep.subr.mxu0 0.0
    %1742 = vmatpush1.msra.mxu0 0.0
    %1743 = vmatprep.subr.mxu0 0.0
    %1744 = vmatpush1.msra.mxu0 0.0
    %1745 = vmatprep.subr.mxu0 0.0
    %1746 = vmatpush1.msra.mxu0 0.0
    %1747 = vmatprep.subr.mxu0 0.0
    %1748 = vmatpush1.msra.mxu0 0.0
    %1749 = vmatprep.mubr.f32.mxu0 0.0
    %1750 = vmatmul.mubr.f32.gmra.mrb[0].mxu0 %v1683
    %v1751 = vpop.f32.mrb[0].mxu0
    %v1752 = vadd.f32 0.0, %v1751
    %v1753 = vpop.f32.mrb[0].mxu0
    %v1754 = vadd.f32 0.0, %v1753
    %1755 = vdwg.mxu0
    %v1756 = vadd.f32 %v1662, %v1752
    %v1757 = vadd.f32 %v1663, %v1754
    %v1758 = vxor.u32 %v1756, 2147483648
    %v1759 = vmul.f32 %v1758, 1.442695
    %v1760 = vpow.pop %v1759
    %v1761 = vadd.f32 %v1760, 1.0
    %v1762 = vrcp.pop %v1761
    %v1763 = vmul.f32 1.0, %v1762
    %v1764 = vtanh.pop %v1757
    %v1765 = vxor.u32 %v1757, 2147483648
    %v1766 = vmul.f32 %v1765, 1.442695
    %v1767 = vpow.pop %v1766
    %v1768 = vadd.f32 %v1767, 1.0
    %v1769 = vrcp.pop %v1768
    %v1770 = vmul.f32 1.0, %v1769
    %v1771 = vmul.f32 %v1763, %v1658
    %v1772 = vmul.f32 %v1763, %v1764
    %1774 = vrot.lane.b32.xlu0 %v1772, 64
    %v1775 = vpop.permute.xlu0 %1774
    %v1777 = vadd.f32 %v1771, %v1775
    %v1778 = vtanh.pop %v1777
    %v1779 = vmul.f32 %v1770, %v1778
    %1780 = vst.msk [vmem:[%s1182] sm:$0xff] %vm1541, %v1779
    %v1781 = vld [vmem:[%s940 + $0x10] sm:$0xff]
    %v1782 = vld [vmem:[%s940 + $0x18] sm:$0xff]
    %v1783 = vld [vmem:[#allocation7] sm:$0xff]
    %v1784 = vld [vmem:[#allocation7 + $0x8] sm:$0xff]
    %v1785 = vld [vmem:[#allocation7 + $0x10] sm:$0xff]
    %v1786 = vld [vmem:[#allocation7 + $0x18] sm:$0xff]
    %v1787 = vld [vmem:[#allocation7 + $0x20] sm:$0xff]
    %v1788 = vld [vmem:[#allocation7 + $0x28] sm:$0xff]
    %v1789 = vld [vmem:[#allocation7 + $0x30] sm:$0xff]
    %v1790 = vld [vmem:[#allocation7 + $0x38] sm:$0xff]
    %v1791 = vld [vmem:[#allocation7 + $0x40] sm:$0xff]
    %v1792 = vld [vmem:[#allocation7 + $0x48] sm:$0xff]
    %v1793 = vld [vmem:[#allocation7 + $0x50] sm:$0xff]
    %v1794 = vld [vmem:[#allocation7 + $0x58] sm:$0xff]
    %v1795 = vld [vmem:[#allocation7 + $0x60] sm:$0xff]
    %v1796 = vld [vmem:[#allocation7 + $0x68] sm:$0xff]
    %v1797 = vld [vmem:[#allocation7 + $0x70] sm:$0xff]
    %v1798 = vld [vmem:[#allocation7 + $0x78] sm:$0xff]
    %1800 = vrot.lane.b32.xlu0 %v1779, 64
    %v1801 = vpop.permute.xlu0 %1800
    %v1802 = vsel %vm470, %v1801, 0
    %1804 = vmatprep.subr.mxu0 %v1784
    %1805 = vmatpush1.msra.mxu0 %v1783
    %1806 = vmatprep.subr.mxu0 %v1786
    %1807 = vmatpush1.msra.mxu0 %v1785
    %1808 = vmatprep.subr.mxu0 %v1788
    %1809 = vmatpush1.msra.mxu0 %v1787
    %1810 = vmatprep.subr.mxu0 %v1790
    %1811 = vmatpush1.msra.mxu0 %v1789
    %1812 = vmatprep.subr.mxu0 %v1792
    %1813 = vmatpush1.msra.mxu0 %v1791
    %1814 = vmatprep.subr.mxu0 %v1794
    %1815 = vmatpush1.msra.mxu0 %v1793
    %1816 = vmatprep.subr.mxu0 %v1796
    %1817 = vmatpush1.msra.mxu0 %v1795
    %1818 = vmatprep.subr.mxu0 %v1798
    %1819 = vmatpush1.msra.mxu0 %v1797
    %1820 = vmatprep.subr.mxu0 0.0
    %1821 = vmatpush1.msra.mxu0 0.0
    %1822 = vmatprep.subr.mxu0 0.0
    %1823 = vmatpush1.msra.mxu0 0.0
    %1824 = vmatprep.subr.mxu0 0.0
    %1825 = vmatpush1.msra.mxu0 0.0
    %1826 = vmatprep.subr.mxu0 0.0
    %1827 = vmatpush1.msra.mxu0 0.0
    %1828 = vmatprep.subr.mxu0 0.0
    %1829 = vmatpush1.msra.mxu0 0.0
    %1830 = vmatprep.subr.mxu0 0.0
    %1831 = vmatpush1.msra.mxu0 0.0
    %1832 = vmatprep.subr.mxu0 0.0
    %1833 = vmatpush1.msra.mxu0 0.0
    %1834 = vmatprep.subr.mxu0 0.0
    %1835 = vmatpush1.msra.mxu0 0.0
    %1836 = vmatprep.subr.mxu0 0.0
    %1837 = vmatpush1.msra.mxu0 0.0
    %1838 = vmatprep.subr.mxu0 0.0
    %1839 = vmatpush1.msra.mxu0 0.0
    %1840 = vmatprep.subr.mxu0 0.0
    %1841 = vmatpush1.msra.mxu0 0.0
    %1842 = vmatprep.subr.mxu0 0.0
    %1843 = vmatpush1.msra.mxu0 0.0
    %1844 = vmatprep.subr.mxu0 0.0
    %1845 = vmatpush1.msra.mxu0 0.0
    %1846 = vmatprep.subr.mxu0 0.0
    %1847 = vmatpush1.msra.mxu0 0.0
    %1848 = vmatprep.subr.mxu0 0.0
    %1849 = vmatpush1.msra.mxu0 0.0
    %1850 = vmatprep.subr.mxu0 0.0
    %1851 = vmatpush1.msra.mxu0 0.0
    %1852 = vmatprep.subr.mxu0 0.0
    %1853 = vmatpush1.msra.mxu0 0.0
    %1854 = vmatprep.subr.mxu0 0.0
    %1855 = vmatpush1.msra.mxu0 0.0
    %1856 = vmatprep.subr.mxu0 0.0
    %1857 = vmatpush1.msra.mxu0 0.0
    %1858 = vmatprep.subr.mxu0 0.0
    %1859 = vmatpush1.msra.mxu0 0.0
    %1860 = vmatprep.subr.mxu0 0.0
    %1861 = vmatpush1.msra.mxu0 0.0
    %1862 = vmatprep.subr.mxu0 0.0
    %1863 = vmatpush1.msra.mxu0 0.0
    %1864 = vmatprep.subr.mxu0 0.0
    %1865 = vmatpush1.msra.mxu0 0.0
    %1866 = vmatprep.subr.mxu0 0.0
    %1867 = vmatpush1.msra.mxu0 0.0
    %1868 = vmatprep.mubr.f32.mxu0 0.0
    %1869 = vmatmul.mubr.f32.gmra.mrb[0].mxu0 %v1802
    %v1870 = vpop.f32.mrb[0].mxu0
    %v1871 = vadd.f32 0.0, %v1870
    %v1872 = vpop.f32.mrb[0].mxu0
    %v1873 = vadd.f32 0.0, %v1872
    %1874 = vdwg.mxu0
    %v1875 = vadd.f32 %v1781, %v1871
    %v1876 = vadd.f32 %v1782, %v1873
    %v1877 = vxor.u32 %v1875, 2147483648
    %v1878 = vmul.f32 %v1877, 1.442695
    %v1879 = vpow.pop %v1878
    %v1880 = vadd.f32 %v1879, 1.0
    %v1881 = vrcp.pop %v1880
    %v1882 = vmul.f32 1.0, %v1881
    %v1883 = vtanh.pop %v1876
    %v1884 = vxor.u32 %v1876, 2147483648
    %v1885 = vmul.f32 %v1884, 1.442695
    %v1886 = vpow.pop %v1885
    %v1887 = vadd.f32 %v1886, 1.0
    %v1888 = vrcp.pop %v1887
    %v1889 = vmul.f32 1.0, %v1888
    %v1890 = vmul.f32 %v1882, %v1777
    %v1891 = vmul.f32 %v1882, %v1883
    %1893 = vrot.lane.b32.xlu0 %v1891, 64
    %v1894 = vpop.permute.xlu0 %1893
    %v1896 = vadd.f32 %v1890, %v1894
    %v1897 = vtanh.pop %v1896
    %v1898 = vmul.f32 %v1889, %v1897
    %1899 = vst.msk [vmem:[%s1060] sm:$0xff] %vm1541, %v1898
    %v1900 = vld [vmem:[%s818 + $0x10] sm:$0xff]
    %v1901 = vld [vmem:[%s818 + $0x18] sm:$0xff]
    %v1902 = vld [vmem:[#allocation7] sm:$0xff]
    %v1903 = vld [vmem:[#allocation7 + $0x8] sm:$0xff]
    %v1904 = vld [vmem:[#allocation7 + $0x10] sm:$0xff]
    %v1905 = vld [vmem:[#allocation7 + $0x18] sm:$0xff]
    %v1906 = vld [vmem:[#allocation7 + $0x20] sm:$0xff]
    %v1907 = vld [vmem:[#allocation7 + $0x28] sm:$0xff]
    %v1908 = vld [vmem:[#allocation7 + $0x30] sm:$0xff]
    %v1909 = vld [vmem:[#allocation7 + $0x38] sm:$0xff]
    %v1910 = vld [vmem:[#allocation7 + $0x40] sm:$0xff]
    %v1911 = vld [vmem:[#allocation7 + $0x48] sm:$0xff]
    %v1912 = vld [vmem:[#allocation7 + $0x50] sm:$0xff]
    %v1913 = vld [vmem:[#allocation7 + $0x58] sm:$0xff]
    %v1914 = vld [vmem:[#allocation7 + $0x60] sm:$0xff]
    %v1915 = vld [vmem:[#allocation7 + $0x68] sm:$0xff]
    %v1916 = vld [vmem:[#allocation7 + $0x70] sm:$0xff]
    %v1917 = vld [vmem:[#allocation7 + $0x78] sm:$0xff]
    %1919 = vrot.lane.b32.xlu0 %v1898, 64
    %v1920 = vpop.permute.xlu0 %1919
    %v1921 = vsel %vm470, %v1920, 0
    %1923 = vmatprep.subr.mxu0 %v1903
    %1924 = vmatpush1.msra.mxu0 %v1902
    %1925 = vmatprep.subr.mxu0 %v1905
    %1926 = vmatpush1.msra.mxu0 %v1904
    %1927 = vmatprep.subr.mxu0 %v1907
    %1928 = vmatpush1.msra.mxu0 %v1906
    %1929 = vmatprep.subr.mxu0 %v1909
    %1930 = vmatpush1.msra.mxu0 %v1908
    %1931 = vmatprep.subr.mxu0 %v1911
    %1932 = vmatpush1.msra.mxu0 %v1910
    %1933 = vmatprep.subr.mxu0 %v1913
    %1934 = vmatpush1.msra.mxu0 %v1912
    %1935 = vmatprep.subr.mxu0 %v1915
    %1936 = vmatpush1.msra.mxu0 %v1914
    %1937 = vmatprep.subr.mxu0 %v1917
    %1938 = vmatpush1.msra.mxu0 %v1916
    %1939 = vmatprep.subr.mxu0 0.0
    %1940 = vmatpush1.msra.mxu0 0.0
    %1941 = vmatprep.subr.mxu0 0.0
    %1942 = vmatpush1.msra.mxu0 0.0
    %1943 = vmatprep.subr.mxu0 0.0
    %1944 = vmatpush1.msra.mxu0 0.0
    %1945 = vmatprep.subr.mxu0 0.0
    %1946 = vmatpush1.msra.mxu0 0.0
    %1947 = vmatprep.subr.mxu0 0.0
    %1948 = vmatpush1.msra.mxu0 0.0
    %1949 = vmatprep.subr.mxu0 0.0
    %1950 = vmatpush1.msra.mxu0 0.0
    %1951 = vmatprep.subr.mxu0 0.0
    %1952 = vmatpush1.msra.mxu0 0.0
    %1953 = vmatprep.subr.mxu0 0.0
    %1954 = vmatpush1.msra.mxu0 0.0
    %1955 = vmatprep.subr.mxu0 0.0
    %1956 = vmatpush1.msra.mxu0 0.0
    %1957 = vmatprep.subr.mxu0 0.0
    %1958 = vmatpush1.msra.mxu0 0.0
    %1959 = vmatprep.subr.mxu0 0.0
    %1960 = vmatpush1.msra.mxu0 0.0
    %1961 = vmatprep.subr.mxu0 0.0
    %1962 = vmatpush1.msra.mxu0 0.0
    %1963 = vmatprep.subr.mxu0 0.0
    %1964 = vmatpush1.msra.mxu0 0.0
    %1965 = vmatprep.subr.mxu0 0.0
    %1966 = vmatpush1.msra.mxu0 0.0
    %1967 = vmatprep.subr.mxu0 0.0
    %1968 = vmatpush1.msra.mxu0 0.0
    %1969 = vmatprep.subr.mxu0 0.0
    %1970 = vmatpush1.msra.mxu0 0.0
    %1971 = vmatprep.subr.mxu0 0.0
    %1972 = vmatpush1.msra.mxu0 0.0
    %1973 = vmatprep.subr.mxu0 0.0
    %1974 = vmatpush1.msra.mxu0 0.0
    %1975 = vmatprep.subr.mxu0 0.0
    %1976 = vmatpush1.msra.mxu0 0.0
    %1977 = vmatprep.subr.mxu0 0.0
    %1978 = vmatpush1.msra.mxu0 0.0
    %1979 = vmatprep.subr.mxu0 0.0
    %1980 = vmatpush1.msra.mxu0 0.0
    %1981 = vmatprep.subr.mxu0 0.0
    %1982 = vmatpush1.msra.mxu0 0.0
    %1983 = vmatprep.subr.mxu0 0.0
    %1984 = vmatpush1.msra.mxu0 0.0
    %1985 = vmatprep.subr.mxu0 0.0
    %1986 = vmatpush1.msra.mxu0 0.0
    %1987 = vmatprep.mubr.f32.mxu0 0.0
    %1988 = vmatmul.mubr.f32.gmra.mrb[0].mxu0 %v1921
    %v1989 = vpop.f32.mrb[0].mxu0
    %v1990 = vadd.f32 0.0, %v1989
    %v1991 = vpop.f32.mrb[0].mxu0
    %v1992 = vadd.f32 0.0, %v1991
    %1993 = vdwg.mxu0
    %v1994 = vadd.f32 %v1900, %v1990
    %v1995 = vadd.f32 %v1901, %v1992
    %v1996 = vxor.u32 %v1994, 2147483648
    %v1997 = vmul.f32 %v1996, 1.442695
    %v1998 = vpow.pop %v1997
    %v1999 = vadd.f32 %v1998, 1.0
    %v2000 = vrcp.pop %v1999
    %v2001 = vmul.f32 1.0, %v2000
    %v2002 = vtanh.pop %v1995
    %v2003 = vxor.u32 %v1995, 2147483648
    %v2004 = vmul.f32 %v2003, 1.442695
    %v2005 = vpow.pop %v2004
    %v2006 = vadd.f32 %v2005, 1.0
    %v2007 = vrcp.pop %v2006
    %v2008 = vmul.f32 1.0, %v2007
    %v2009 = vmul.f32 %v2001, %v1896
    %v2010 = vmul.f32 %v2001, %v2002
    %2012 = vrot.lane.b32.xlu0 %v2010, 64
    %v2013 = vpop.permute.xlu0 %2012
    %v2015 = vadd.f32 %v2009, %v2013
    %v2016 = vtanh.pop %v2015
    %v2017 = vmul.f32 %v2008, %v2016
    %2018 = vst.msk [vmem:[%s938] sm:$0xff] %vm1541, %v2017
    %v2019 = vld [vmem:[%s696 + $0x10] sm:$0xff]
    %v2020 = vld [vmem:[%s696 + $0x18] sm:$0xff]
    %v2021 = vld [vmem:[#allocation7] sm:$0xff]
    %v2022 = vld [vmem:[#allocation7 + $0x8] sm:$0xff]
    %v2023 = vld [vmem:[#allocation7 + $0x10] sm:$0xff]
    %v2024 = vld [vmem:[#allocation7 + $0x18] sm:$0xff]
    %v2025 = vld [vmem:[#allocation7 + $0x20] sm:$0xff]
    %v2026 = vld [vmem:[#allocation7 + $0x28] sm:$0xff]
    %v2027 = vld [vmem:[#allocation7 + $0x30] sm:$0xff]
    %v2028 = vld [vmem:[#allocation7 + $0x38] sm:$0xff]
    %v2029 = vld [vmem:[#allocation7 + $0x40] sm:$0xff]
    %v2030 = vld [vmem:[#allocation7 + $0x48] sm:$0xff]
    %v2031 = vld [vmem:[#allocation7 + $0x50] sm:$0xff]
    %v2032 = vld [vmem:[#allocation7 + $0x58] sm:$0xff]
    %v2033 = vld [vmem:[#allocation7 + $0x60] sm:$0xff]
    %v2034 = vld [vmem:[#allocation7 + $0x68] sm:$0xff]
    %v2035 = vld [vmem:[#allocation7 + $0x70] sm:$0xff]
    %v2036 = vld [vmem:[#allocation7 + $0x78] sm:$0xff]
    %2038 = vrot.lane.b32.xlu0 %v2017, 64
    %v2039 = vpop.permute.xlu0 %2038
    %v2040 = vsel %vm470, %v2039, 0
    %2042 = vmatprep.subr.mxu0 %v2022
    %2043 = vmatpush1.msra.mxu0 %v2021
    %2044 = vmatprep.subr.mxu0 %v2024
    %2045 = vmatpush1.msra.mxu0 %v2023
    %2046 = vmatprep.subr.mxu0 %v2026
    %2047 = vmatpush1.msra.mxu0 %v2025
    %2048 = vmatprep.subr.mxu0 %v2028
    %2049 = vmatpush1.msra.mxu0 %v2027
    %2050 = vmatprep.subr.mxu0 %v2030
    %2051 = vmatpush1.msra.mxu0 %v2029
    %2052 = vmatprep.subr.mxu0 %v2032
    %2053 = vmatpush1.msra.mxu0 %v2031
    %2054 = vmatprep.subr.mxu0 %v2034
    %2055 = vmatpush1.msra.mxu0 %v2033
    %2056 = vmatprep.subr.mxu0 %v2036
    %2057 = vmatpush1.msra.mxu0 %v2035
    %2058 = vmatprep.subr.mxu0 0.0
    %2059 = vmatpush1.msra.mxu0 0.0
    %2060 = vmatprep.subr.mxu0 0.0
    %2061 = vmatpush1.msra.mxu0 0.0
    %2062 = vmatprep.subr.mxu0 0.0
    %2063 = vmatpush1.msra.mxu0 0.0
    %2064 = vmatprep.subr.mxu0 0.0
    %2065 = vmatpush1.msra.mxu0 0.0
    %2066 = vmatprep.subr.mxu0 0.0
    %2067 = vmatpush1.msra.mxu0 0.0
    %2068 = vmatprep.subr.mxu0 0.0
    %2069 = vmatpush1.msra.mxu0 0.0
    %2070 = vmatprep.subr.mxu0 0.0
    %2071 = vmatpush1.msra.mxu0 0.0
    %2072 = vmatprep.subr.mxu0 0.0
    %2073 = vmatpush1.msra.mxu0 0.0
    %2074 = vmatprep.subr.mxu0 0.0
    %2075 = vmatpush1.msra.mxu0 0.0
    %2076 = vmatprep.subr.mxu0 0.0
    %2077 = vmatpush1.msra.mxu0 0.0
    %2078 = vmatprep.subr.mxu0 0.0
    %2079 = vmatpush1.msra.mxu0 0.0
    %2080 = vmatprep.subr.mxu0 0.0
    %2081 = vmatpush1.msra.mxu0 0.0
    %2082 = vmatprep.subr.mxu0 0.0
    %2083 = vmatpush1.msra.mxu0 0.0
    %2084 = vmatprep.subr.mxu0 0.0
    %2085 = vmatpush1.msra.mxu0 0.0
    %2086 = vmatprep.subr.mxu0 0.0
    %2087 = vmatpush1.msra.mxu0 0.0
    %2088 = vmatprep.subr.mxu0 0.0
    %2089 = vmatpush1.msra.mxu0 0.0
    %2090 = vmatprep.subr.mxu0 0.0
    %2091 = vmatpush1.msra.mxu0 0.0
    %2092 = vmatprep.subr.mxu0 0.0
    %2093 = vmatpush1.msra.mxu0 0.0
    %2094 = vmatprep.subr.mxu0 0.0
    %2095 = vmatpush1.msra.mxu0 0.0
    %2096 = vmatprep.subr.mxu0 0.0
    %2097 = vmatpush1.msra.mxu0 0.0
    %2098 = vmatprep.subr.mxu0 0.0
    %2099 = vmatpush1.msra.mxu0 0.0
    %2100 = vmatprep.subr.mxu0 0.0
    %2101 = vmatpush1.msra.mxu0 0.0
    %2102 = vmatprep.subr.mxu0 0.0
    %2103 = vmatpush1.msra.mxu0 0.0
    %2104 = vmatprep.subr.mxu0 0.0
    %2105 = vmatpush1.msra.mxu0 0.0
    %2106 = vmatprep.mubr.f32.mxu0 0.0
    %2107 = vmatmul.mubr.f32.gmra.mrb[0].mxu0 %v2040
    %v2108 = vpop.f32.mrb[0].mxu0
    %v2109 = vadd.f32 0.0, %v2108
    %v2110 = vpop.f32.mrb[0].mxu0
    %v2111 = vadd.f32 0.0, %v2110
    %2112 = vdwg.mxu0
    %v2113 = vadd.f32 %v2019, %v2109
    %v2114 = vadd.f32 %v2020, %v2111
    %v2115 = vxor.u32 %v2113, 2147483648
    %v2116 = vmul.f32 %v2115, 1.442695
    %v2117 = vpow.pop %v2116
    %v2118 = vadd.f32 %v2117, 1.0
    %v2119 = vrcp.pop %v2118
    %v2120 = vmul.f32 1.0, %v2119
    %v2121 = vtanh.pop %v2114
    %v2122 = vxor.u32 %v2114, 2147483648
    %v2123 = vmul.f32 %v2122, 1.442695
    %v2124 = vpow.pop %v2123
    %v2125 = vadd.f32 %v2124, 1.0
    %v2126 = vrcp.pop %v2125
    %v2127 = vmul.f32 1.0, %v2126
    %v2128 = vmul.f32 %v2120, %v2015
    %v2129 = vmul.f32 %v2120, %v2121
    %2131 = vrot.lane.b32.xlu0 %v2129, 64
    %v2132 = vpop.permute.xlu0 %2131
    %v2134 = vadd.f32 %v2128, %v2132
    %v2135 = vtanh.pop %v2134
    %v2136 = vmul.f32 %v2127, %v2135
    %2137 = vst.msk [vmem:[%s816] sm:$0xff] %vm1541, %v2136
    %v2138 = vld [vmem:[%s574 + $0x10] sm:$0xff]
    %v2139 = vld [vmem:[%s574 + $0x18] sm:$0xff]
    %v2140 = vld [vmem:[#allocation7] sm:$0xff]
    %v2141 = vld [vmem:[#allocation7 + $0x8] sm:$0xff]
    %v2142 = vld [vmem:[#allocation7 + $0x10] sm:$0xff]
    %v2143 = vld [vmem:[#allocation7 + $0x18] sm:$0xff]
    %v2144 = vld [vmem:[#allocation7 + $0x20] sm:$0xff]
    %v2145 = vld [vmem:[#allocation7 + $0x28] sm:$0xff]
    %v2146 = vld [vmem:[#allocation7 + $0x30] sm:$0xff]
    %v2147 = vld [vmem:[#allocation7 + $0x38] sm:$0xff]
    %v2148 = vld [vmem:[#allocation7 + $0x40] sm:$0xff]
    %v2149 = vld [vmem:[#allocation7 + $0x48] sm:$0xff]
    %v2150 = vld [vmem:[#allocation7 + $0x50] sm:$0xff]
    %v2151 = vld [vmem:[#allocation7 + $0x58] sm:$0xff]
    %v2152 = vld [vmem:[#allocation7 + $0x60] sm:$0xff]
    %v2153 = vld [vmem:[#allocation7 + $0x68] sm:$0xff]
    %v2154 = vld [vmem:[#allocation7 + $0x70] sm:$0xff]
    %v2155 = vld [vmem:[#allocation7 + $0x78] sm:$0xff]
    %2157 = vrot.lane.b32.xlu0 %v2136, 64
    %v2158 = vpop.permute.xlu0 %2157
    %v2159 = vsel %vm470, %v2158, 0
    %2161 = vmatprep.subr.mxu0 %v2141
    %2162 = vmatpush1.msra.mxu0 %v2140
    %2163 = vmatprep.subr.mxu0 %v2143
    %2164 = vmatpush1.msra.mxu0 %v2142
    %2165 = vmatprep.subr.mxu0 %v2145
    %2166 = vmatpush1.msra.mxu0 %v2144
    %2167 = vmatprep.subr.mxu0 %v2147
    %2168 = vmatpush1.msra.mxu0 %v2146
    %2169 = vmatprep.subr.mxu0 %v2149
    %2170 = vmatpush1.msra.mxu0 %v2148
    %2171 = vmatprep.subr.mxu0 %v2151
    %2172 = vmatpush1.msra.mxu0 %v2150
    %2173 = vmatprep.subr.mxu0 %v2153
    %2174 = vmatpush1.msra.mxu0 %v2152
    %2175 = vmatprep.subr.mxu0 %v2155
    %2176 = vmatpush1.msra.mxu0 %v2154
    %2177 = vmatprep.subr.mxu0 0.0
    %2178 = vmatpush1.msra.mxu0 0.0
    %2179 = vmatprep.subr.mxu0 0.0
    %2180 = vmatpush1.msra.mxu0 0.0
    %2181 = vmatprep.subr.mxu0 0.0
    %2182 = vmatpush1.msra.mxu0 0.0
    %2183 = vmatprep.subr.mxu0 0.0
    %2184 = vmatpush1.msra.mxu0 0.0
    %2185 = vmatprep.subr.mxu0 0.0
    %2186 = vmatpush1.msra.mxu0 0.0
    %2187 = vmatprep.subr.mxu0 0.0
    %2188 = vmatpush1.msra.mxu0 0.0
    %2189 = vmatprep.subr.mxu0 0.0
    %2190 = vmatpush1.msra.mxu0 0.0
    %2191 = vmatprep.subr.mxu0 0.0
    %2192 = vmatpush1.msra.mxu0 0.0
    %2193 = vmatprep.subr.mxu0 0.0
    %2194 = vmatpush1.msra.mxu0 0.0
    %2195 = vmatprep.subr.mxu0 0.0
    %2196 = vmatpush1.msra.mxu0 0.0
    %2197 = vmatprep.subr.mxu0 0.0
    %2198 = vmatpush1.msra.mxu0 0.0
    %2199 = vmatprep.subr.mxu0 0.0
    %2200 = vmatpush1.msra.mxu0 0.0
    %2201 = vmatprep.subr.mxu0 0.0
    %2202 = vmatpush1.msra.mxu0 0.0
    %2203 = vmatprep.subr.mxu0 0.0
    %2204 = vmatpush1.msra.mxu0 0.0
    %2205 = vmatprep.subr.mxu0 0.0
    %2206 = vmatpush1.msra.mxu0 0.0
    %2207 = vmatprep.subr.mxu0 0.0
    %2208 = vmatpush1.msra.mxu0 0.0
    %2209 = vmatprep.subr.mxu0 0.0
    %2210 = vmatpush1.msra.mxu0 0.0
    %2211 = vmatprep.subr.mxu0 0.0
    %2212 = vmatpush1.msra.mxu0 0.0
    %2213 = vmatprep.subr.mxu0 0.0
    %2214 = vmatpush1.msra.mxu0 0.0
    %2215 = vmatprep.subr.mxu0 0.0
    %2216 = vmatpush1.msra.mxu0 0.0
    %2217 = vmatprep.subr.mxu0 0.0
    %2218 = vmatpush1.msra.mxu0 0.0
    %2219 = vmatprep.subr.mxu0 0.0
    %2220 = vmatpush1.msra.mxu0 0.0
    %2221 = vmatprep.subr.mxu0 0.0
    %2222 = vmatpush1.msra.mxu0 0.0
    %2223 = vmatprep.subr.mxu0 0.0
    %2224 = vmatpush1.msra.mxu0 0.0
    %2225 = vmatprep.mubr.f32.mxu0 0.0
    %2226 = vmatmul.mubr.f32.gmra.mrb[0].mxu0 %v2159
    %v2227 = vpop.f32.mrb[0].mxu0
    %v2228 = vadd.f32 0.0, %v2227
    %v2229 = vpop.f32.mrb[0].mxu0
    %v2230 = vadd.f32 0.0, %v2229
    %2231 = vdwg.mxu0
    %v2232 = vadd.f32 %v2138, %v2228
    %v2233 = vadd.f32 %v2139, %v2230
    %v2234 = vxor.u32 %v2232, 2147483648
    %v2235 = vmul.f32 %v2234, 1.442695
    %v2236 = vpow.pop %v2235
    %v2237 = vadd.f32 %v2236, 1.0
    %v2238 = vrcp.pop %v2237
    %v2239 = vmul.f32 1.0, %v2238
    %v2240 = vtanh.pop %v2233
    %v2241 = vxor.u32 %v2233, 2147483648
    %v2242 = vmul.f32 %v2241, 1.442695
    %v2243 = vpow.pop %v2242
    %v2244 = vadd.f32 %v2243, 1.0
    %v2245 = vrcp.pop %v2244
    %v2246 = vmul.f32 1.0, %v2245
    %v2247 = vmul.f32 %v2239, %v2134
    %v2248 = vmul.f32 %v2239, %v2240
    %2250 = vrot.lane.b32.xlu0 %v2248, 64
    %v2251 = vpop.permute.xlu0 %2250
    %v2253 = vadd.f32 %v2247, %v2251
    %v2254 = vtanh.pop %v2253
    %v2255 = vmul.f32 %v2246, %v2254
    %2256 = vst.msk [vmem:[%s694] sm:$0xff] %vm1541, %v2255
    %v2257 = vld [vmem:[#allocation2 + $0x10] sm:$0xff]
    %v2258 = vld [vmem:[#allocation2 + $0x18] sm:$0xff]
    %v2259 = vld [vmem:[#allocation7] sm:$0xff]
    %v2260 = vld [vmem:[#allocation7 + $0x8] sm:$0xff]
    %v2261 = vld [vmem:[#allocation7 + $0x10] sm:$0xff]
    %v2262 = vld [vmem:[#allocation7 + $0x18] sm:$0xff]
    %v2263 = vld [vmem:[#allocation7 + $0x20] sm:$0xff]
    %v2264 = vld [vmem:[#allocation7 + $0x28] sm:$0xff]
    %v2265 = vld [vmem:[#allocation7 + $0x30] sm:$0xff]
    %v2266 = vld [vmem:[#allocation7 + $0x38] sm:$0xff]
    %v2267 = vld [vmem:[#allocation7 + $0x40] sm:$0xff]
    %v2268 = vld [vmem:[#allocation7 + $0x48] sm:$0xff]
    %v2269 = vld [vmem:[#allocation7 + $0x50] sm:$0xff]
    %v2270 = vld [vmem:[#allocation7 + $0x58] sm:$0xff]
    %v2271 = vld [vmem:[#allocation7 + $0x60] sm:$0xff]
    %v2272 = vld [vmem:[#allocation7 + $0x68] sm:$0xff]
    %v2273 = vld [vmem:[#allocation7 + $0x70] sm:$0xff]
    %v2274 = vld [vmem:[#allocation7 + $0x78] sm:$0xff]
    %2276 = vrot.lane.b32.xlu0 %v2255, 64
    %v2277 = vpop.permute.xlu0 %2276
    %v2278 = vsel %vm470, %v2277, 0
    %2280 = vmatprep.subr.mxu0 %v2260
    %2281 = vmatpush1.msra.mxu0 %v2259
    %2282 = vmatprep.subr.mxu0 %v2262
    %2283 = vmatpush1.msra.mxu0 %v2261
    %2284 = vmatprep.subr.mxu0 %v2264
    %2285 = vmatpush1.msra.mxu0 %v2263
    %2286 = vmatprep.subr.mxu0 %v2266
    %2287 = vmatpush1.msra.mxu0 %v2265
    %2288 = vmatprep.subr.mxu0 %v2268
    %2289 = vmatpush1.msra.mxu0 %v2267
    %2290 = vmatprep.subr.mxu0 %v2270
    %2291 = vmatpush1.msra.mxu0 %v2269
    %2292 = vmatprep.subr.mxu0 %v2272
    %2293 = vmatpush1.msra.mxu0 %v2271
    %2294 = vmatprep.subr.mxu0 %v2274
    %2295 = vmatpush1.msra.mxu0 %v2273
    %2296 = vmatprep.subr.mxu0 0.0
    %2297 = vmatpush1.msra.mxu0 0.0
    %2298 = vmatprep.subr.mxu0 0.0
    %2299 = vmatpush1.msra.mxu0 0.0
    %2300 = vmatprep.subr.mxu0 0.0
    %2301 = vmatpush1.msra.mxu0 0.0
    %2302 = vmatprep.subr.mxu0 0.0
    %2303 = vmatpush1.msra.mxu0 0.0
    %2304 = vmatprep.subr.mxu0 0.0
    %2305 = vmatpush1.msra.mxu0 0.0
    %2306 = vmatprep.subr.mxu0 0.0
    %2307 = vmatpush1.msra.mxu0 0.0
    %2308 = vmatprep.subr.mxu0 0.0
    %2309 = vmatpush1.msra.mxu0 0.0
    %2310 = vmatprep.subr.mxu0 0.0
    %2311 = vmatpush1.msra.mxu0 0.0
    %2312 = vmatprep.subr.mxu0 0.0
    %2313 = vmatpush1.msra.mxu0 0.0
    %2314 = vmatprep.subr.mxu0 0.0
    %2315 = vmatpush1.msra.mxu0 0.0
    %2316 = vmatprep.subr.mxu0 0.0
    %2317 = vmatpush1.msra.mxu0 0.0
    %2318 = vmatprep.subr.mxu0 0.0
    %2319 = vmatpush1.msra.mxu0 0.0
    %2320 = vmatprep.subr.mxu0 0.0
    %2321 = vmatpush1.msra.mxu0 0.0
    %2322 = vmatprep.subr.mxu0 0.0
    %2323 = vmatpush1.msra.mxu0 0.0
    %2324 = vmatprep.subr.mxu0 0.0
    %2325 = vmatpush1.msra.mxu0 0.0
    %2326 = vmatprep.subr.mxu0 0.0
    %2327 = vmatpush1.msra.mxu0 0.0
    %2328 = vmatprep.subr.mxu0 0.0
    %2329 = vmatpush1.msra.mxu0 0.0
    %2330 = vmatprep.subr.mxu0 0.0
    %2331 = vmatpush1.msra.mxu0 0.0
    %2332 = vmatprep.subr.mxu0 0.0
    %2333 = vmatpush1.msra.mxu0 0.0
    %2334 = vmatprep.subr.mxu0 0.0
    %2335 = vmatpush1.msra.mxu0 0.0
    %2336 = vmatprep.subr.mxu0 0.0
    %2337 = vmatpush1.msra.mxu0 0.0
    %2338 = vmatprep.subr.mxu0 0.0
    %2339 = vmatpush1.msra.mxu0 0.0
    %2340 = vmatprep.subr.mxu0 0.0
    %2341 = vmatpush1.msra.mxu0 0.0
    %2342 = vmatprep.subr.mxu0 0.0
    %2343 = vmatpush1.msra.mxu0 0.0
    %2344 = vmatprep.mubr.f32.mxu0 0.0
    %2345 = vmatmul.mubr.f32.gmra.mrb[0].mxu0 %v2278
    %v2346 = vpop.f32.mrb[0].mxu0
    %v2347 = vadd.f32 0.0, %v2346
    %v2348 = vpop.f32.mrb[0].mxu0
    %v2349 = vadd.f32 0.0, %v2348
    %2350 = vdwg.mxu0
    %v2351 = vadd.f32 %v2257, %v2347
    %v2352 = vadd.f32 %v2258, %v2349
    %v2353 = vxor.u32 %v2351, 2147483648
    %v2354 = vmul.f32 %v2353, 1.442695
    %v2355 = vpow.pop %v2354
    %v2356 = vadd.f32 %v2355, 1.0
    %v2357 = vrcp.pop %v2356
    %v2358 = vmul.f32 1.0, %v2357
    %v2359 = vtanh.pop %v2352
    %v2360 = vxor.u32 %v2352, 2147483648
    %v2361 = vmul.f32 %v2360, 1.442695
    %v2362 = vpow.pop %v2361
    %v2363 = vadd.f32 %v2362, 1.0
    %v2364 = vrcp.pop %v2363
    %v2365 = vmul.f32 1.0, %v2364
    %v2366 = vmul.f32 %v2358, %v2253
    %v2367 = vmul.f32 %v2358, %v2359
    %2369 = vrot.lane.b32.xlu0 %v2367, 64
    %v2370 = vpop.permute.xlu0 %2369
    %v2372 = vadd.f32 %v2366, %v2370
    %v2373 = vtanh.pop %v2372
    %v2374 = vmul.f32 %v2365, %v2373
    %2375 = vst.msk [vmem:[#allocation3] sm:$0xff] %vm1541, %v2374
    %v2376 = vld [vmem:[#allocation3] sm:$0xff]
    %v2377 = vld [vmem:[#allocation3 + $0x8] sm:$0xff]
    %v2378 = vld [vmem:[#allocation3 + $0x10] sm:$0xff]
    %v2379 = vld [vmem:[#allocation3 + $0x18] sm:$0xff]
    %v2380 = vld [vmem:[#allocation3 + $0x20] sm:$0xff]
    %v2381 = vld [vmem:[#allocation3 + $0x28] sm:$0xff]
    %v2382 = vld [vmem:[#allocation3 + $0x30] sm:$0xff]
    %v2383 = vld [vmem:[#allocation3 + $0x38] sm:$0xff]
    %v2384 = vld [vmem:[#allocation10] sm:$0xff]
    %v2385 = vld [vmem:[#allocation10 + $0x8] sm:$0xff]
    %v2386 = vld [vmem:[#allocation10 + $0x10] sm:$0xff]
    %v2387 = vld [vmem:[#allocation10 + $0x18] sm:$0xff]
    %v2388 = vld [vmem:[#allocation10 + $0x20] sm:$0xff]
    %v2389 = vld [vmem:[#allocation10 + $0x28] sm:$0xff]
    %v2390 = vld [vmem:[#allocation10 + $0x30] sm:$0xff]
    %v2391 = vld [vmem:[#allocation10 + $0x38] sm:$0xff]
    %v2392 = vld [vmem:[#allocation10 + $0x40] sm:$0xff]
    %v2393 = vld [vmem:[#allocation10 + $0x48] sm:$0xff]
    %v2394 = vld [vmem:[#allocation10 + $0x50] sm:$0xff]
    %v2395 = vld [vmem:[#allocation10 + $0x58] sm:$0xff]
    %v2396 = vld [vmem:[#allocation10 + $0x60] sm:$0xff]
    %v2397 = vld [vmem:[#allocation10 + $0x68] sm:$0xff]
    %v2398 = vld [vmem:[#allocation10 + $0x70] sm:$0xff]
    %v2399 = vld [vmem:[#allocation10 + $0x78] sm:$0xff]
    %v2400 = vld [vmem:[#allocation10 + $0x80] sm:$0xff]
    %v2401 = vld [vmem:[#allocation10 + $0x88] sm:$0xff]
    %v2402 = vld [vmem:[#allocation10 + $0x90] sm:$0xff]
    %v2403 = vld [vmem:[#allocation10 + $0x98] sm:$0xff]
    %v2404 = vld [vmem:[#allocation10 + $0xa0] sm:$0xff]
    %v2405 = vld [vmem:[#allocation10 + $0xa8] sm:$0xff]
    %v2406 = vld [vmem:[#allocation10 + $0xb0] sm:$0xff]
    %v2407 = vld [vmem:[#allocation10 + $0xb8] sm:$0xff]
    %v2408 = vld [vmem:[#allocation10 + $0xc0] sm:$0xff]
    %v2409 = vld [vmem:[#allocation10 + $0xc8] sm:$0xff]
    %v2410 = vld [vmem:[#allocation10 + $0xd0] sm:$0xff]
    %v2411 = vld [vmem:[#allocation10 + $0xd8] sm:$0xff]
    %v2412 = vld [vmem:[#allocation10 + $0xe0] sm:$0xff]
    %v2413 = vld [vmem:[#allocation10 + $0xe8] sm:$0xff]
    %v2414 = vld [vmem:[#allocation10 + $0xf0] sm:$0xff]
    %v2415 = vld [vmem:[#allocation10 + $0xf8] sm:$0xff]
    %v2416 = vld [vmem:[%s8] sm:$0x3]
    %v2418 = vlaneseq
    %v2419 = vshrl.u32 %v2418, 7
    %v2420 = vsub.s32 0, %v2419
    %v2421 = vrot.slane %v2416, %v2420
    %v2422 = vlaneseq
    %v2423 = vshrl.u32 %v2422, 7
    %v2424 = vsub.s32 1, %v2423
    %v2425 = vrot.slane %v2416, %v2424
    %2428 = vmatprep.subr.mxu0 %v2385
    %2429 = vmatpush1.msra.mxu0 %v2384
    %2430 = vmatprep.subr.mxu0 %v2387
    %2431 = vmatpush1.msra.mxu0 %v2386
    %2432 = vmatprep.subr.mxu0 %v2389
    %2433 = vmatpush1.msra.mxu0 %v2388
    %2434 = vmatprep.subr.mxu0 %v2391
    %2435 = vmatpush1.msra.mxu0 %v2390
    %2436 = vmatprep.subr.mxu0 %v2393
    %2437 = vmatpush1.msra.mxu0 %v2392
    %2438 = vmatprep.subr.mxu0 %v2395
    %2439 = vmatpush1.msra.mxu0 %v2394
    %2440 = vmatprep.subr.mxu0 %v2397
    %2441 = vmatpush1.msra.mxu0 %v2396
    %2442 = vmatprep.subr.mxu0 %v2399
    %2443 = vmatpush1.msra.mxu0 %v2398
    %2444 = vmatprep.subr.mxu0 %v2401
    %2445 = vmatpush1.msra.mxu0 %v2400
    %2446 = vmatprep.subr.mxu0 %v2403
    %2447 = vmatpush1.msra.mxu0 %v2402
    %2448 = vmatprep.subr.mxu0 %v2405
    %2449 = vmatpush1.msra.mxu0 %v2404
    %2450 = vmatprep.subr.mxu0 %v2407
    %2451 = vmatpush1.msra.mxu0 %v2406
    %2452 = vmatprep.subr.mxu0 %v2409
    %2453 = vmatpush1.msra.mxu0 %v2408
    %2454 = vmatprep.subr.mxu0 %v2411
    %2455 = vmatpush1.msra.mxu0 %v2410
    %2456 = vmatprep.subr.mxu0 %v2413
    %2457 = vmatpush1.msra.mxu0 %v2412
    %2458 = vmatprep.subr.mxu0 %v2415
    %2459 = vmatpush1.msra.mxu0 %v2414
    %2460 = vmatprep.subr.mxu0 0.0
    %2461 = vmatpush1.msra.mxu0 0.0
    %2462 = vmatprep.subr.mxu0 0.0
    %2463 = vmatpush1.msra.mxu0 0.0
    %2464 = vmatprep.subr.mxu0 0.0
    %2465 = vmatpush1.msra.mxu0 0.0
    %2466 = vmatprep.subr.mxu0 0.0
    %2467 = vmatpush1.msra.mxu0 0.0
    %2468 = vmatprep.subr.mxu0 0.0
    %2469 = vmatpush1.msra.mxu0 0.0
    %2470 = vmatprep.subr.mxu0 0.0
    %2471 = vmatpush1.msra.mxu0 0.0
    %2472 = vmatprep.subr.mxu0 0.0
    %2473 = vmatpush1.msra.mxu0 0.0
    %2474 = vmatprep.subr.mxu0 0.0
    %2475 = vmatpush1.msra.mxu0 0.0
    %2476 = vmatprep.subr.mxu0 0.0
    %2477 = vmatpush1.msra.mxu0 0.0
    %2478 = vmatprep.subr.mxu0 0.0
    %2479 = vmatpush1.msra.mxu0 0.0
    %2480 = vmatprep.subr.mxu0 0.0
    %2481 = vmatpush1.msra.mxu0 0.0
    %2482 = vmatprep.subr.mxu0 0.0
    %2483 = vmatpush1.msra.mxu0 0.0
    %2484 = vmatprep.subr.mxu0 0.0
    %2485 = vmatpush1.msra.mxu0 0.0
    %2486 = vmatprep.subr.mxu0 0.0
    %2487 = vmatpush1.msra.mxu0 0.0
    %2488 = vmatprep.subr.mxu0 0.0
    %2489 = vmatpush1.msra.mxu0 0.0
    %2490 = vmatprep.subr.mxu0 0.0
    %2491 = vmatpush1.msra.mxu0 0.0
    %2492 = vmatprep.mubr.f32.mxu0 0.0
    %2493 = vmatmul.mubr.f32.gmra.mrb[0].mxu0 %v2376
    %v2494 = vpop.f32.mrb[0].mxu0
    %v2495 = vadd.f32 %v2421, %v2494
    %v2496 = vpop.f32.mrb[0].mxu0
    %v2497 = vadd.f32 %v2425, %v2496
    %2498 = vmatprep.mubr.f32.mxu0 0.0
    %2499 = vmatmul.mubr.f32.gmra.mrb[0].mxu0 %v2377
    %v2500 = vpop.f32.mrb[0].mxu0
    %v2501 = vadd.f32 %v2421, %v2500
    %v2502 = vpop.f32.mrb[0].mxu0
    %v2503 = vadd.f32 %v2425, %v2502
    %2504 = vmatprep.mubr.f32.mxu0 0.0
    %2505 = vmatmul.mubr.f32.gmra.mrb[0].mxu0 %v2378
    %v2506 = vpop.f32.mrb[0].mxu0
    %v2507 = vadd.f32 %v2421, %v2506
    %v2508 = vpop.f32.mrb[0].mxu0
    %v2509 = vadd.f32 %v2425, %v2508
    %2510 = vmatprep.mubr.f32.mxu0 0.0
    %2511 = vmatmul.mubr.f32.gmra.mrb[0].mxu0 %v2379
    %v2512 = vpop.f32.mrb[0].mxu0
    %v2513 = vadd.f32 %v2421, %v2512
    %v2514 = vpop.f32.mrb[0].mxu0
    %v2515 = vadd.f32 %v2425, %v2514
    %2516 = vmatprep.mubr.f32.mxu0 0.0
    %2517 = vmatmul.mubr.f32.gmra.mrb[0].mxu0 %v2380
    %v2518 = vpop.f32.mrb[0].mxu0
    %v2519 = vadd.f32 %v2421, %v2518
    %v2520 = vpop.f32.mrb[0].mxu0
    %v2521 = vadd.f32 %v2425, %v2520
    %2522 = vmatprep.mubr.f32.mxu0 0.0
    %2523 = vmatmul.mubr.f32.gmra.mrb[0].mxu0 %v2381
    %v2524 = vpop.f32.mrb[0].mxu0
    %v2525 = vadd.f32 %v2421, %v2524
    %v2526 = vpop.f32.mrb[0].mxu0
    %v2527 = vadd.f32 %v2425, %v2526
    %2528 = vmatprep.mubr.f32.mxu0 0.0
    %2529 = vmatmul.mubr.f32.gmra.mrb[0].mxu0 %v2382
    %v2530 = vpop.f32.mrb[0].mxu0
    %v2531 = vadd.f32 %v2421, %v2530
    %v2532 = vpop.f32.mrb[0].mxu0
    %v2533 = vadd.f32 %v2425, %v2532
    %2534 = vmatprep.mubr.f32.mxu0 0.0
    %2535 = vmatmul.mubr.f32.gmra.mrb[0].mxu0 %v2383
    %v2536 = vpop.f32.mrb[0].mxu0
    %v2537 = vadd.f32 %v2421, %v2536
    %v2538 = vpop.f32.mrb[0].mxu0
    %v2539 = vadd.f32 %v2425, %v2538
    %2540 = vdwg.mxu0
    %2541 = vst [vmem:[#allocation4] sm:$0xff] %v2495
    %2542 = vst [vmem:[#allocation4 + $0x8] sm:$0xff] %v2497
    %2543 = vst [vmem:[#allocation4 + $0x10] sm:$0xff] %v2501
    %2544 = vst [vmem:[#allocation4 + $0x18] sm:$0xff] %v2503
    %2545 = vst [vmem:[#allocation4 + $0x20] sm:$0xff] %v2507
    %2546 = vst [vmem:[#allocation4 + $0x28] sm:$0xff] %v2509
    %2547 = vst [vmem:[#allocation4 + $0x30] sm:$0xff] %v2513
    %2548 = vst [vmem:[#allocation4 + $0x38] sm:$0xff] %v2515
    %2549 = vst [vmem:[#allocation4 + $0x40] sm:$0xff] %v2519
    %2550 = vst [vmem:[#allocation4 + $0x48] sm:$0xff] %v2521
    %2551 = vst [vmem:[#allocation4 + $0x50] sm:$0xff] %v2525
    %2552 = vst [vmem:[#allocation4 + $0x58] sm:$0xff] %v2527
    %2553 = vst [vmem:[#allocation4 + $0x60] sm:$0xff] %v2531
    %2554 = vst [vmem:[#allocation4 + $0x68] sm:$0xff] %v2533
    %2555 = vst [vmem:[#allocation4 + $0x70] sm:$0xff] %v2537
    %2556 = vst [vmem:[#allocation4 + $0x78] sm:$0xff] %v2539
    %v2557 = vld [vmem:[#allocation4] sm:$0xff]
    %v2558 = vld [vmem:[#allocation12] sm:$0xff]
    %v2559 = vld [vmem:[#allocation12 + $0x8] sm:$0xff]
    %v2560 = vld [vmem:[#allocation12 + $0x10] sm:$0xff]
    %v2561 = vld [vmem:[#allocation12 + $0x18] sm:$0xff]
    %vm2562 = vcmask 261120
    %v2563 = vsel %vm2562, 0.0, 0
    %2565 = vmatprep.subr.mxu0 0.0
    %2566 = vmatpush1.msra.mxu0 %v2558
    %2567 = vmatprep.subr.mxu0 0.0
    %2568 = vmatpush1.msra.mxu0 %v2559
    %2569 = vmatprep.subr.mxu0 0.0
    %2570 = vmatpush1.msra.mxu0 %v2560
    %2571 = vmatprep.subr.mxu0 0.0
    %2572 = vmatpush1.msra.mxu0 %v2561
    %2573 = vmatprep.subr.mxu0 0.0
    %2574 = vmatpush1.msra.mxu0 0.0
    %2575 = vmatprep.subr.mxu0 0.0
    %2576 = vmatpush1.msra.mxu0 0.0
    %2577 = vmatprep.subr.mxu0 0.0
    %2578 = vmatpush1.msra.mxu0 0.0
    %2579 = vmatprep.subr.mxu0 0.0
    %2580 = vmatpush1.msra.mxu0 0.0
    %2581 = vmatprep.subr.mxu0 0.0
    %2582 = vmatpush1.msra.mxu0 0.0
    %2583 = vmatprep.subr.mxu0 0.0
    %2584 = vmatpush1.msra.mxu0 0.0
    %2585 = vmatprep.subr.mxu0 0.0
    %2586 = vmatpush1.msra.mxu0 0.0
    %2587 = vmatprep.subr.mxu0 0.0
    %2588 = vmatpush1.msra.mxu0 0.0
    %2589 = vmatprep.subr.mxu0 0.0
    %2590 = vmatpush1.msra.mxu0 0.0
    %2591 = vmatprep.subr.mxu0 0.0
    %2592 = vmatpush1.msra.mxu0 0.0
    %2593 = vmatprep.subr.mxu0 0.0
    %2594 = vmatpush1.msra.mxu0 0.0
    %2595 = vmatprep.subr.mxu0 0.0
    %2596 = vmatpush1.msra.mxu0 0.0
    %2597 = vmatprep.subr.mxu0 0.0
    %2598 = vmatpush1.msra.mxu0 0.0
    %2599 = vmatprep.subr.mxu0 0.0
    %2600 = vmatpush1.msra.mxu0 0.0
    %2601 = vmatprep.subr.mxu0 0.0
    %2602 = vmatpush1.msra.mxu0 0.0
    %2603 = vmatprep.subr.mxu0 0.0
    %2604 = vmatpush1.msra.mxu0 0.0
    %2605 = vmatprep.subr.mxu0 0.0
    %2606 = vmatpush1.msra.mxu0 0.0
    %2607 = vmatprep.subr.mxu0 0.0
    %2608 = vmatpush1.msra.mxu0 0.0
    %2609 = vmatprep.subr.mxu0 0.0
    %2610 = vmatpush1.msra.mxu0 0.0
    %2611 = vmatprep.subr.mxu0 0.0
    %2612 = vmatpush1.msra.mxu0 0.0
    %2613 = vmatprep.subr.mxu0 0.0
    %2614 = vmatpush1.msra.mxu0 0.0
    %2615 = vmatprep.subr.mxu0 0.0
    %2616 = vmatpush1.msra.mxu0 0.0
    %2617 = vmatprep.subr.mxu0 0.0
    %2618 = vmatpush1.msra.mxu0 0.0
    %2619 = vmatprep.subr.mxu0 0.0
    %2620 = vmatpush1.msra.mxu0 0.0
    %2621 = vmatprep.subr.mxu0 0.0
    %2622 = vmatpush1.msra.mxu0 0.0
    %2623 = vmatprep.subr.mxu0 0.0
    %2624 = vmatpush1.msra.mxu0 0.0
    %2625 = vmatprep.subr.mxu0 0.0
    %2626 = vmatpush1.msra.mxu0 0.0
    %2627 = vmatprep.subr.mxu0 0.0
    %2628 = vmatpush1.msra.mxu0 0.0
    %2629 = vmatprep.mubr.f32.mxu0 0.0
    %2630 = vmatmul.mubr.f32.gmra.mrb[0].mxu0 %v2563
    %v2631 = vpop.f32.mrb[0].mxu0
    %v2632 = vadd.f32 0.0, %v2631
    %v2633 = vpop.f32.mrb[0].mxu0
    %2634 = vdwg.mxu0
    %v2635 = vadd.f32 %v2557, %v2632
    %v2636 = vxor.u32 %v2635, 2147483648
    %v2637 = vmul.f32 %v2636, 1.442695
    %v2638 = vpow.pop %v2637
    %v2639 = vadd.f32 %v2638, 1.0
    %v2640 = vrcp.pop %v2639
    %v2641 = vmul.f32 1.0, %v2640
    %v2642 = vtanh.pop %v2635
    %v2643 = vmul.f32 %v2641, 0.0
    %2645 = vrot.lane.b32.xlu0 %v2642, 64
    %v2646 = vpop.permute.xlu0 %2645
    %v2648 = vmul.f32 %v2641, %v2646
    %2650 = vrot.lane.b32.xlu0 %v2648, 32
    %v2651 = vpop.permute.xlu0 %2650
    %v2653 = vadd.f32 %v2643, %v2651
    %v2654 = vtanh.pop %v2653
    %2656 = vrot.lane.b32.xlu0 %v2654, 64
    %v2657 = vpop.permute.xlu0 %2656
    %v2659 = vmul.f32 %v2641, %v2657
    %s2660 = scalar_lea.vmem [#allocation4], 16
    %v2661 = vld [vmem:[%s2660] sm:$0xff]
    %2663 = vrot.lane.b32.xlu0 %v2659, 32
    %v2664 = vpop.permute.xlu0 %2663
    %v2665 = vsel %vm2562, %v2664, 0
    %2667 = vmatprep.subr.mxu0 0.0
    %2668 = vmatpush1.msra.mxu0 %v2558
    %2669 = vmatprep.subr.mxu0 0.0
    %2670 = vmatpush1.msra.mxu0 %v2559
    %2671 = vmatprep.subr.mxu0 0.0
    %2672 = vmatpush1.msra.mxu0 %v2560
    %2673 = vmatprep.subr.mxu0 0.0
    %2674 = vmatpush1.msra.mxu0 %v2561
    %2675 = vmatprep.subr.mxu0 0.0
    %2676 = vmatpush1.msra.mxu0 0.0
    %2677 = vmatprep.subr.mxu0 0.0
    %2678 = vmatpush1.msra.mxu0 0.0
    %2679 = vmatprep.subr.mxu0 0.0
    %2680 = vmatpush1.msra.mxu0 0.0
    %2681 = vmatprep.subr.mxu0 0.0
    %2682 = vmatpush1.msra.mxu0 0.0
    %2683 = vmatprep.subr.mxu0 0.0
    %2684 = vmatpush1.msra.mxu0 0.0
    %2685 = vmatprep.subr.mxu0 0.0
    %2686 = vmatpush1.msra.mxu0 0.0
    %2687 = vmatprep.subr.mxu0 0.0
    %2688 = vmatpush1.msra.mxu0 0.0
    %2689 = vmatprep.subr.mxu0 0.0
    %2690 = vmatpush1.msra.mxu0 0.0
    %2691 = vmatprep.subr.mxu0 0.0
    %2692 = vmatpush1.msra.mxu0 0.0
    %2693 = vmatprep.subr.mxu0 0.0
    %2694 = vmatpush1.msra.mxu0 0.0
    %2695 = vmatprep.subr.mxu0 0.0
    %2696 = vmatpush1.msra.mxu0 0.0
    %2697 = vmatprep.subr.mxu0 0.0
    %2698 = vmatpush1.msra.mxu0 0.0
    %2699 = vmatprep.subr.mxu0 0.0
    %2700 = vmatpush1.msra.mxu0 0.0
    %2701 = vmatprep.subr.mxu0 0.0
    %2702 = vmatpush1.msra.mxu0 0.0
    %2703 = vmatprep.subr.mxu0 0.0
    %2704 = vmatpush1.msra.mxu0 0.0
    %2705 = vmatprep.subr.mxu0 0.0
    %2706 = vmatpush1.msra.mxu0 0.0
    %2707 = vmatprep.subr.mxu0 0.0
    %2708 = vmatpush1.msra.mxu0 0.0
    %2709 = vmatprep.subr.mxu0 0.0
    %2710 = vmatpush1.msra.mxu0 0.0
    %2711 = vmatprep.subr.mxu0 0.0
    %2712 = vmatpush1.msra.mxu0 0.0
    %2713 = vmatprep.subr.mxu0 0.0
    %2714 = vmatpush1.msra.mxu0 0.0
    %2715 = vmatprep.subr.mxu0 0.0
    %2716 = vmatpush1.msra.mxu0 0.0
    %2717 = vmatprep.subr.mxu0 0.0
    %2718 = vmatpush1.msra.mxu0 0.0
    %2719 = vmatprep.subr.mxu0 0.0
    %2720 = vmatpush1.msra.mxu0 0.0
    %2721 = vmatprep.subr.mxu0 0.0
    %2722 = vmatpush1.msra.mxu0 0.0
    %2723 = vmatprep.subr.mxu0 0.0
    %2724 = vmatpush1.msra.mxu0 0.0
    %2725 = vmatprep.subr.mxu0 0.0
    %2726 = vmatpush1.msra.mxu0 0.0
    %2727 = vmatprep.subr.mxu0 0.0
    %2728 = vmatpush1.msra.mxu0 0.0
    %2729 = vmatprep.subr.mxu0 0.0
    %2730 = vmatpush1.msra.mxu0 0.0
    %2731 = vmatprep.mubr.f32.mxu0 0.0
    %2732 = vmatmul.mubr.f32.gmra.mrb[0].mxu0 %v2665
    %v2733 = vpop.f32.mrb[0].mxu0
    %v2734 = vadd.f32 0.0, %v2733
    %v2735 = vpop.f32.mrb[0].mxu0
    %2736 = vdwg.mxu0
    %v2737 = vadd.f32 %v2661, %v2734
    %v2738 = vxor.u32 %v2737, 2147483648
    %v2739 = vmul.f32 %v2738, 1.442695
    %v2740 = vpow.pop %v2739
    %v2741 = vadd.f32 %v2740, 1.0
    %v2742 = vrcp.pop %v2741
    %v2743 = vmul.f32 1.0, %v2742
    %v2744 = vtanh.pop %v2737
    %v2745 = vmul.f32 %v2743, %v2653
    %2747 = vrot.lane.b32.xlu0 %v2744, 64
    %v2748 = vpop.permute.xlu0 %2747
    %v2750 = vmul.f32 %v2743, %v2748
    %2752 = vrot.lane.b32.xlu0 %v2750, 32
    %v2753 = vpop.permute.xlu0 %2752
    %v2755 = vadd.f32 %v2745, %v2753
    %v2756 = vtanh.pop %v2755
    %2758 = vrot.lane.b32.xlu0 %v2756, 64
    %v2759 = vpop.permute.xlu0 %2758
    %v2761 = vmul.f32 %v2743, %v2759
    %s2762 = scalar_lea.vmem [#allocation4], 32
    %v2763 = vld [vmem:[%s2762] sm:$0xff]
    %2765 = vrot.lane.b32.xlu0 %v2761, 32
    %v2766 = vpop.permute.xlu0 %2765
    %v2767 = vsel %vm2562, %v2766, 0
    %2769 = vmatprep.subr.mxu0 0.0
    %2770 = vmatpush1.msra.mxu0 %v2558
    %2771 = vmatprep.subr.mxu0 0.0
    %2772 = vmatpush1.msra.mxu0 %v2559
    %2773 = vmatprep.subr.mxu0 0.0
    %2774 = vmatpush1.msra.mxu0 %v2560
    %2775 = vmatprep.subr.mxu0 0.0
    %2776 = vmatpush1.msra.mxu0 %v2561
    %2777 = vmatprep.subr.mxu0 0.0
    %2778 = vmatpush1.msra.mxu0 0.0
    %2779 = vmatprep.subr.mxu0 0.0
    %2780 = vmatpush1.msra.mxu0 0.0
    %2781 = vmatprep.subr.mxu0 0.0
    %2782 = vmatpush1.msra.mxu0 0.0
    %2783 = vmatprep.subr.mxu0 0.0
    %2784 = vmatpush1.msra.mxu0 0.0
    %2785 = vmatprep.subr.mxu0 0.0
    %2786 = vmatpush1.msra.mxu0 0.0
    %2787 = vmatprep.subr.mxu0 0.0
    %2788 = vmatpush1.msra.mxu0 0.0
    %2789 = vmatprep.subr.mxu0 0.0
    %2790 = vmatpush1.msra.mxu0 0.0
    %2791 = vmatprep.subr.mxu0 0.0
    %2792 = vmatpush1.msra.mxu0 0.0
    %2793 = vmatprep.subr.mxu0 0.0
    %2794 = vmatpush1.msra.mxu0 0.0
    %2795 = vmatprep.subr.mxu0 0.0
    %2796 = vmatpush1.msra.mxu0 0.0
    %2797 = vmatprep.subr.mxu0 0.0
    %2798 = vmatpush1.msra.mxu0 0.0
    %2799 = vmatprep.subr.mxu0 0.0
    %2800 = vmatpush1.msra.mxu0 0.0
    %2801 = vmatprep.subr.mxu0 0.0
    %2802 = vmatpush1.msra.mxu0 0.0
    %2803 = vmatprep.subr.mxu0 0.0
    %2804 = vmatpush1.msra.mxu0 0.0
    %2805 = vmatprep.subr.mxu0 0.0
    %2806 = vmatpush1.msra.mxu0 0.0
    %2807 = vmatprep.subr.mxu0 0.0
    %2808 = vmatpush1.msra.mxu0 0.0
    %2809 = vmatprep.subr.mxu0 0.0
    %2810 = vmatpush1.msra.mxu0 0.0
    %2811 = vmatprep.subr.mxu0 0.0
    %2812 = vmatpush1.msra.mxu0 0.0
    %2813 = vmatprep.subr.mxu0 0.0
    %2814 = vmatpush1.msra.mxu0 0.0
    %2815 = vmatprep.subr.mxu0 0.0
    %2816 = vmatpush1.msra.mxu0 0.0
    %2817 = vmatprep.subr.mxu0 0.0
    %2818 = vmatpush1.msra.mxu0 0.0
    %2819 = vmatprep.subr.mxu0 0.0
    %2820 = vmatpush1.msra.mxu0 0.0
    %2821 = vmatprep.subr.mxu0 0.0
    %2822 = vmatpush1.msra.mxu0 0.0
    %2823 = vmatprep.subr.mxu0 0.0
    %2824 = vmatpush1.msra.mxu0 0.0
    %2825 = vmatprep.subr.mxu0 0.0
    %2826 = vmatpush1.msra.mxu0 0.0
    %2827 = vmatprep.subr.mxu0 0.0
    %2828 = vmatpush1.msra.mxu0 0.0
    %2829 = vmatprep.subr.mxu0 0.0
    %2830 = vmatpush1.msra.mxu0 0.0
    %2831 = vmatprep.subr.mxu0 0.0
    %2832 = vmatpush1.msra.mxu0 0.0
    %2833 = vmatprep.mubr.f32.mxu0 0.0
    %2834 = vmatmul.mubr.f32.gmra.mrb[0].mxu0 %v2767
    %v2835 = vpop.f32.mrb[0].mxu0
    %v2836 = vadd.f32 0.0, %v2835
    %v2837 = vpop.f32.mrb[0].mxu0
    %2838 = vdwg.mxu0
    %v2839 = vadd.f32 %v2763, %v2836
    %v2840 = vxor.u32 %v2839, 2147483648
    %v2841 = vmul.f32 %v2840, 1.442695
    %v2842 = vpow.pop %v2841
    %v2843 = vadd.f32 %v2842, 1.0
    %v2844 = vrcp.pop %v2843
    %v2845 = vmul.f32 1.0, %v2844
    %v2846 = vtanh.pop %v2839
    %v2847 = vmul.f32 %v2845, %v2755
    %2849 = vrot.lane.b32.xlu0 %v2846, 64
    %v2850 = vpop.permute.xlu0 %2849
    %v2852 = vmul.f32 %v2845, %v2850
    %2854 = vrot.lane.b32.xlu0 %v2852, 32
    %v2855 = vpop.permute.xlu0 %2854
    %v2857 = vadd.f32 %v2847, %v2855
    %v2858 = vtanh.pop %v2857
    %2860 = vrot.lane.b32.xlu0 %v2858, 64
    %v2861 = vpop.permute.xlu0 %2860
    %v2863 = vmul.f32 %v2845, %v2861
    %s2864 = scalar_lea.vmem [#allocation4], 48
    %v2865 = vld [vmem:[%s2864] sm:$0xff]
    %2867 = vrot.lane.b32.xlu0 %v2863, 32
    %v2868 = vpop.permute.xlu0 %2867
    %v2869 = vsel %vm2562, %v2868, 0
    %2871 = vmatprep.subr.mxu0 0.0
    %2872 = vmatpush1.msra.mxu0 %v2558
    %2873 = vmatprep.subr.mxu0 0.0
    %2874 = vmatpush1.msra.mxu0 %v2559
    %2875 = vmatprep.subr.mxu0 0.0
    %2876 = vmatpush1.msra.mxu0 %v2560
    %2877 = vmatprep.subr.mxu0 0.0
    %2878 = vmatpush1.msra.mxu0 %v2561
    %2879 = vmatprep.subr.mxu0 0.0
    %2880 = vmatpush1.msra.mxu0 0.0
    %2881 = vmatprep.subr.mxu0 0.0
    %2882 = vmatpush1.msra.mxu0 0.0
    %2883 = vmatprep.subr.mxu0 0.0
    %2884 = vmatpush1.msra.mxu0 0.0
    %2885 = vmatprep.subr.mxu0 0.0
    %2886 = vmatpush1.msra.mxu0 0.0
    %2887 = vmatprep.subr.mxu0 0.0
    %2888 = vmatpush1.msra.mxu0 0.0
    %2889 = vmatprep.subr.mxu0 0.0
    %2890 = vmatpush1.msra.mxu0 0.0
    %2891 = vmatprep.subr.mxu0 0.0
    %2892 = vmatpush1.msra.mxu0 0.0
    %2893 = vmatprep.subr.mxu0 0.0
    %2894 = vmatpush1.msra.mxu0 0.0
    %2895 = vmatprep.subr.mxu0 0.0
    %2896 = vmatpush1.msra.mxu0 0.0
    %2897 = vmatprep.subr.mxu0 0.0
    %2898 = vmatpush1.msra.mxu0 0.0
    %2899 = vmatprep.subr.mxu0 0.0
    %2900 = vmatpush1.msra.mxu0 0.0
    %2901 = vmatprep.subr.mxu0 0.0
    %2902 = vmatpush1.msra.mxu0 0.0
    %2903 = vmatprep.subr.mxu0 0.0
    %2904 = vmatpush1.msra.mxu0 0.0
    %2905 = vmatprep.subr.mxu0 0.0
    %2906 = vmatpush1.msra.mxu0 0.0
    %2907 = vmatprep.subr.mxu0 0.0
    %2908 = vmatpush1.msra.mxu0 0.0
    %2909 = vmatprep.subr.mxu0 0.0
    %2910 = vmatpush1.msra.mxu0 0.0
    %2911 = vmatprep.subr.mxu0 0.0
    %2912 = vmatpush1.msra.mxu0 0.0
    %2913 = vmatprep.subr.mxu0 0.0
    %2914 = vmatpush1.msra.mxu0 0.0
    %2915 = vmatprep.subr.mxu0 0.0
    %2916 = vmatpush1.msra.mxu0 0.0
    %2917 = vmatprep.subr.mxu0 0.0
    %2918 = vmatpush1.msra.mxu0 0.0
    %2919 = vmatprep.subr.mxu0 0.0
    %2920 = vmatpush1.msra.mxu0 0.0
    %2921 = vmatprep.subr.mxu0 0.0
    %2922 = vmatpush1.msra.mxu0 0.0
    %2923 = vmatprep.subr.mxu0 0.0
    %2924 = vmatpush1.msra.mxu0 0.0
    %2925 = vmatprep.subr.mxu0 0.0
    %2926 = vmatpush1.msra.mxu0 0.0
    %2927 = vmatprep.subr.mxu0 0.0
    %2928 = vmatpush1.msra.mxu0 0.0
    %2929 = vmatprep.subr.mxu0 0.0
    %2930 = vmatpush1.msra.mxu0 0.0
    %2931 = vmatprep.subr.mxu0 0.0
    %2932 = vmatpush1.msra.mxu0 0.0
    %2933 = vmatprep.subr.mxu0 0.0
    %2934 = vmatpush1.msra.mxu0 0.0
    %2935 = vmatprep.mubr.f32.mxu0 0.0
    %2936 = vmatmul.mubr.f32.gmra.mrb[0].mxu0 %v2869
    %v2937 = vpop.f32.mrb[0].mxu0
    %v2938 = vadd.f32 0.0, %v2937
    %v2939 = vpop.f32.mrb[0].mxu0
    %2940 = vdwg.mxu0
    %v2941 = vadd.f32 %v2865, %v2938
    %v2942 = vxor.u32 %v2941, 2147483648
    %v2943 = vmul.f32 %v2942, 1.442695
    %v2944 = vpow.pop %v2943
    %v2945 = vadd.f32 %v2944, 1.0
    %v2946 = vrcp.pop %v2945
    %v2947 = vmul.f32 1.0, %v2946
    %v2948 = vtanh.pop %v2941
    %v2949 = vmul.f32 %v2947, %v2857
    %2951 = vrot.lane.b32.xlu0 %v2948, 64
    %v2952 = vpop.permute.xlu0 %2951
    %v2954 = vmul.f32 %v2947, %v2952
    %2956 = vrot.lane.b32.xlu0 %v2954, 32
    %v2957 = vpop.permute.xlu0 %2956
    %v2959 = vadd.f32 %v2949, %v2957
    %v2960 = vtanh.pop %v2959
    %2962 = vrot.lane.b32.xlu0 %v2960, 64
    %v2963 = vpop.permute.xlu0 %2962
    %v2965 = vmul.f32 %v2947, %v2963
    %s2966 = scalar_lea.vmem [#allocation4], 64
    %v2967 = vld [vmem:[%s2966] sm:$0xff]
    %2969 = vrot.lane.b32.xlu0 %v2965, 32
    %v2970 = vpop.permute.xlu0 %2969
    %v2971 = vsel %vm2562, %v2970, 0
    %2973 = vmatprep.subr.mxu0 0.0
    %2974 = vmatpush1.msra.mxu0 %v2558
    %2975 = vmatprep.subr.mxu0 0.0
    %2976 = vmatpush1.msra.mxu0 %v2559
    %2977 = vmatprep.subr.mxu0 0.0
    %2978 = vmatpush1.msra.mxu0 %v2560
    %2979 = vmatprep.subr.mxu0 0.0
    %2980 = vmatpush1.msra.mxu0 %v2561
    %2981 = vmatprep.subr.mxu0 0.0
    %2982 = vmatpush1.msra.mxu0 0.0
    %2983 = vmatprep.subr.mxu0 0.0
    %2984 = vmatpush1.msra.mxu0 0.0
    %2985 = vmatprep.subr.mxu0 0.0
    %2986 = vmatpush1.msra.mxu0 0.0
    %2987 = vmatprep.subr.mxu0 0.0
    %2988 = vmatpush1.msra.mxu0 0.0
    %2989 = vmatprep.subr.mxu0 0.0
    %2990 = vmatpush1.msra.mxu0 0.0
    %2991 = vmatprep.subr.mxu0 0.0
    %2992 = vmatpush1.msra.mxu0 0.0
    %2993 = vmatprep.subr.mxu0 0.0
    %2994 = vmatpush1.msra.mxu0 0.0
    %2995 = vmatprep.subr.mxu0 0.0
    %2996 = vmatpush1.msra.mxu0 0.0
    %2997 = vmatprep.subr.mxu0 0.0
    %2998 = vmatpush1.msra.mxu0 0.0
    %2999 = vmatprep.subr.mxu0 0.0
    %3000 = vmatpush1.msra.mxu0 0.0
    %3001 = vmatprep.subr.mxu0 0.0
    %3002 = vmatpush1.msra.mxu0 0.0
    %3003 = vmatprep.subr.mxu0 0.0
    %3004 = vmatpush1.msra.mxu0 0.0
    %3005 = vmatprep.subr.mxu0 0.0
    %3006 = vmatpush1.msra.mxu0 0.0
    %3007 = vmatprep.subr.mxu0 0.0
    %3008 = vmatpush1.msra.mxu0 0.0
    %3009 = vmatprep.subr.mxu0 0.0
    %3010 = vmatpush1.msra.mxu0 0.0
    %3011 = vmatprep.subr.mxu0 0.0
    %3012 = vmatpush1.msra.mxu0 0.0
    %3013 = vmatprep.subr.mxu0 0.0
    %3014 = vmatpush1.msra.mxu0 0.0
    %3015 = vmatprep.subr.mxu0 0.0
    %3016 = vmatpush1.msra.mxu0 0.0
    %3017 = vmatprep.subr.mxu0 0.0
    %3018 = vmatpush1.msra.mxu0 0.0
    %3019 = vmatprep.subr.mxu0 0.0
    %3020 = vmatpush1.msra.mxu0 0.0
    %3021 = vmatprep.subr.mxu0 0.0
    %3022 = vmatpush1.msra.mxu0 0.0
    %3023 = vmatprep.subr.mxu0 0.0
    %3024 = vmatpush1.msra.mxu0 0.0
    %3025 = vmatprep.subr.mxu0 0.0
    %3026 = vmatpush1.msra.mxu0 0.0
    %3027 = vmatprep.subr.mxu0 0.0
    %3028 = vmatpush1.msra.mxu0 0.0
    %3029 = vmatprep.subr.mxu0 0.0
    %3030 = vmatpush1.msra.mxu0 0.0
    %3031 = vmatprep.subr.mxu0 0.0
    %3032 = vmatpush1.msra.mxu0 0.0
    %3033 = vmatprep.subr.mxu0 0.0
    %3034 = vmatpush1.msra.mxu0 0.0
    %3035 = vmatprep.subr.mxu0 0.0
    %3036 = vmatpush1.msra.mxu0 0.0
    %3037 = vmatprep.mubr.f32.mxu0 0.0
    %3038 = vmatmul.mubr.f32.gmra.mrb[0].mxu0 %v2971
    %v3039 = vpop.f32.mrb[0].mxu0
    %v3040 = vadd.f32 0.0, %v3039
    %v3041 = vpop.f32.mrb[0].mxu0
    %3042 = vdwg.mxu0
    %v3043 = vadd.f32 %v2967, %v3040
    %v3044 = vxor.u32 %v3043, 2147483648
    %v3045 = vmul.f32 %v3044, 1.442695
    %v3046 = vpow.pop %v3045
    %v3047 = vadd.f32 %v3046, 1.0
    %v3048 = vrcp.pop %v3047
    %v3049 = vmul.f32 1.0, %v3048
    %v3050 = vtanh.pop %v3043
    %v3051 = vmul.f32 %v3049, %v2959
    %3053 = vrot.lane.b32.xlu0 %v3050, 64
    %v3054 = vpop.permute.xlu0 %3053
    %v3056 = vmul.f32 %v3049, %v3054
    %3058 = vrot.lane.b32.xlu0 %v3056, 32
    %v3059 = vpop.permute.xlu0 %3058
    %v3061 = vadd.f32 %v3051, %v3059
    %v3062 = vtanh.pop %v3061
    %3064 = vrot.lane.b32.xlu0 %v3062, 64
    %v3065 = vpop.permute.xlu0 %3064
    %v3067 = vmul.f32 %v3049, %v3065
    %s3068 = scalar_lea.vmem [#allocation4], 80
    %v3069 = vld [vmem:[%s3068] sm:$0xff]
    %3071 = vrot.lane.b32.xlu0 %v3067, 32
    %v3072 = vpop.permute.xlu0 %3071
    %v3073 = vsel %vm2562, %v3072, 0
    %3075 = vmatprep.subr.mxu0 0.0
    %3076 = vmatpush1.msra.mxu0 %v2558
    %3077 = vmatprep.subr.mxu0 0.0
    %3078 = vmatpush1.msra.mxu0 %v2559
    %3079 = vmatprep.subr.mxu0 0.0
    %3080 = vmatpush1.msra.mxu0 %v2560
    %3081 = vmatprep.subr.mxu0 0.0
    %3082 = vmatpush1.msra.mxu0 %v2561
    %3083 = vmatprep.subr.mxu0 0.0
    %3084 = vmatpush1.msra.mxu0 0.0
    %3085 = vmatprep.subr.mxu0 0.0
    %3086 = vmatpush1.msra.mxu0 0.0
    %3087 = vmatprep.subr.mxu0 0.0
    %3088 = vmatpush1.msra.mxu0 0.0
    %3089 = vmatprep.subr.mxu0 0.0
    %3090 = vmatpush1.msra.mxu0 0.0
    %3091 = vmatprep.subr.mxu0 0.0
    %3092 = vmatpush1.msra.mxu0 0.0
    %3093 = vmatprep.subr.mxu0 0.0
    %3094 = vmatpush1.msra.mxu0 0.0
    %3095 = vmatprep.subr.mxu0 0.0
    %3096 = vmatpush1.msra.mxu0 0.0
    %3097 = vmatprep.subr.mxu0 0.0
    %3098 = vmatpush1.msra.mxu0 0.0
    %3099 = vmatprep.subr.mxu0 0.0
    %3100 = vmatpush1.msra.mxu0 0.0
    %3101 = vmatprep.subr.mxu0 0.0
    %3102 = vmatpush1.msra.mxu0 0.0
    %3103 = vmatprep.subr.mxu0 0.0
    %3104 = vmatpush1.msra.mxu0 0.0
    %3105 = vmatprep.subr.mxu0 0.0
    %3106 = vmatpush1.msra.mxu0 0.0
    %3107 = vmatprep.subr.mxu0 0.0
    %3108 = vmatpush1.msra.mxu0 0.0
    %3109 = vmatprep.subr.mxu0 0.0
    %3110 = vmatpush1.msra.mxu0 0.0
    %3111 = vmatprep.subr.mxu0 0.0
    %3112 = vmatpush1.msra.mxu0 0.0
    %3113 = vmatprep.subr.mxu0 0.0
    %3114 = vmatpush1.msra.mxu0 0.0
    %3115 = vmatprep.subr.mxu0 0.0
    %3116 = vmatpush1.msra.mxu0 0.0
    %3117 = vmatprep.subr.mxu0 0.0
    %3118 = vmatpush1.msra.mxu0 0.0
    %3119 = vmatprep.subr.mxu0 0.0
    %3120 = vmatpush1.msra.mxu0 0.0
    %3121 = vmatprep.subr.mxu0 0.0
    %3122 = vmatpush1.msra.mxu0 0.0
    %3123 = vmatprep.subr.mxu0 0.0
    %3124 = vmatpush1.msra.mxu0 0.0
    %3125 = vmatprep.subr.mxu0 0.0
    %3126 = vmatpush1.msra.mxu0 0.0
    %3127 = vmatprep.subr.mxu0 0.0
    %3128 = vmatpush1.msra.mxu0 0.0
    %3129 = vmatprep.subr.mxu0 0.0
    %3130 = vmatpush1.msra.mxu0 0.0
    %3131 = vmatprep.subr.mxu0 0.0
    %3132 = vmatpush1.msra.mxu0 0.0
    %3133 = vmatprep.subr.mxu0 0.0
    %3134 = vmatpush1.msra.mxu0 0.0
    %3135 = vmatprep.subr.mxu0 0.0
    %3136 = vmatpush1.msra.mxu0 0.0
    %3137 = vmatprep.subr.mxu0 0.0
    %3138 = vmatpush1.msra.mxu0 0.0
    %3139 = vmatprep.mubr.f32.mxu0 0.0
    %3140 = vmatmul.mubr.f32.gmra.mrb[0].mxu0 %v3073
    %v3141 = vpop.f32.mrb[0].mxu0
    %v3142 = vadd.f32 0.0, %v3141
    %v3143 = vpop.f32.mrb[0].mxu0
    %3144 = vdwg.mxu0
    %v3145 = vadd.f32 %v3069, %v3142
    %v3146 = vxor.u32 %v3145, 2147483648
    %v3147 = vmul.f32 %v3146, 1.442695
    %v3148 = vpow.pop %v3147
    %v3149 = vadd.f32 %v3148, 1.0
    %v3150 = vrcp.pop %v3149
    %v3151 = vmul.f32 1.0, %v3150
    %v3152 = vtanh.pop %v3145
    %v3153 = vmul.f32 %v3151, %v3061
    %3155 = vrot.lane.b32.xlu0 %v3152, 64
    %v3156 = vpop.permute.xlu0 %3155
    %v3158 = vmul.f32 %v3151, %v3156
    %3160 = vrot.lane.b32.xlu0 %v3158, 32
    %v3161 = vpop.permute.xlu0 %3160
    %v3163 = vadd.f32 %v3153, %v3161
    %v3164 = vtanh.pop %v3163
    %3166 = vrot.lane.b32.xlu0 %v3164, 64
    %v3167 = vpop.permute.xlu0 %3166
    %v3169 = vmul.f32 %v3151, %v3167
    %s3170 = scalar_lea.vmem [#allocation4], 96
    %v3171 = vld [vmem:[%s3170] sm:$0xff]
    %3173 = vrot.lane.b32.xlu0 %v3169, 32
    %v3174 = vpop.permute.xlu0 %3173
    %v3175 = vsel %vm2562, %v3174, 0
    %3177 = vmatprep.subr.mxu0 0.0
    %3178 = vmatpush1.msra.mxu0 %v2558
    %3179 = vmatprep.subr.mxu0 0.0
    %3180 = vmatpush1.msra.mxu0 %v2559
    %3181 = vmatprep.subr.mxu0 0.0
    %3182 = vmatpush1.msra.mxu0 %v2560
    %3183 = vmatprep.subr.mxu0 0.0
    %3184 = vmatpush1.msra.mxu0 %v2561
    %3185 = vmatprep.subr.mxu0 0.0
    %3186 = vmatpush1.msra.mxu0 0.0
    %3187 = vmatprep.subr.mxu0 0.0
    %3188 = vmatpush1.msra.mxu0 0.0
    %3189 = vmatprep.subr.mxu0 0.0
    %3190 = vmatpush1.msra.mxu0 0.0
    %3191 = vmatprep.subr.mxu0 0.0
    %3192 = vmatpush1.msra.mxu0 0.0
    %3193 = vmatprep.subr.mxu0 0.0
    %3194 = vmatpush1.msra.mxu0 0.0
    %3195 = vmatprep.subr.mxu0 0.0
    %3196 = vmatpush1.msra.mxu0 0.0
    %3197 = vmatprep.subr.mxu0 0.0
    %3198 = vmatpush1.msra.mxu0 0.0
    %3199 = vmatprep.subr.mxu0 0.0
    %3200 = vmatpush1.msra.mxu0 0.0
    %3201 = vmatprep.subr.mxu0 0.0
    %3202 = vmatpush1.msra.mxu0 0.0
    %3203 = vmatprep.subr.mxu0 0.0
    %3204 = vmatpush1.msra.mxu0 0.0
    %3205 = vmatprep.subr.mxu0 0.0
    %3206 = vmatpush1.msra.mxu0 0.0
    %3207 = vmatprep.subr.mxu0 0.0
    %3208 = vmatpush1.msra.mxu0 0.0
    %3209 = vmatprep.subr.mxu0 0.0
    %3210 = vmatpush1.msra.mxu0 0.0
    %3211 = vmatprep.subr.mxu0 0.0
    %3212 = vmatpush1.msra.mxu0 0.0
    %3213 = vmatprep.subr.mxu0 0.0
    %3214 = vmatpush1.msra.mxu0 0.0
    %3215 = vmatprep.subr.mxu0 0.0
    %3216 = vmatpush1.msra.mxu0 0.0
    %3217 = vmatprep.subr.mxu0 0.0
    %3218 = vmatpush1.msra.mxu0 0.0
    %3219 = vmatprep.subr.mxu0 0.0
    %3220 = vmatpush1.msra.mxu0 0.0
    %3221 = vmatprep.subr.mxu0 0.0
    %3222 = vmatpush1.msra.mxu0 0.0
    %3223 = vmatprep.subr.mxu0 0.0
    %3224 = vmatpush1.msra.mxu0 0.0
    %3225 = vmatprep.subr.mxu0 0.0
    %3226 = vmatpush1.msra.mxu0 0.0
    %3227 = vmatprep.subr.mxu0 0.0
    %3228 = vmatpush1.msra.mxu0 0.0
    %3229 = vmatprep.subr.mxu0 0.0
    %3230 = vmatpush1.msra.mxu0 0.0
    %3231 = vmatprep.subr.mxu0 0.0
    %3232 = vmatpush1.msra.mxu0 0.0
    %3233 = vmatprep.subr.mxu0 0.0
    %3234 = vmatpush1.msra.mxu0 0.0
    %3235 = vmatprep.subr.mxu0 0.0
    %3236 = vmatpush1.msra.mxu0 0.0
    %3237 = vmatprep.subr.mxu0 0.0
    %3238 = vmatpush1.msra.mxu0 0.0
    %3239 = vmatprep.subr.mxu0 0.0
    %3240 = vmatpush1.msra.mxu0 0.0
    %3241 = vmatprep.mubr.f32.mxu0 0.0
    %3242 = vmatmul.mubr.f32.gmra.mrb[0].mxu0 %v3175
    %v3243 = vpop.f32.mrb[0].mxu0
    %v3244 = vadd.f32 0.0, %v3243
    %v3245 = vpop.f32.mrb[0].mxu0
    %3246 = vdwg.mxu0
    %v3247 = vadd.f32 %v3171, %v3244
    %v3248 = vxor.u32 %v3247, 2147483648
    %v3249 = vmul.f32 %v3248, 1.442695
    %v3250 = vpow.pop %v3249
    %v3251 = vadd.f32 %v3250, 1.0
    %v3252 = vrcp.pop %v3251
    %v3253 = vmul.f32 1.0, %v3252
    %v3254 = vtanh.pop %v3247
    %v3255 = vmul.f32 %v3253, %v3163
    %3257 = vrot.lane.b32.xlu0 %v3254, 64
    %v3258 = vpop.permute.xlu0 %3257
    %v3260 = vmul.f32 %v3253, %v3258
    %3262 = vrot.lane.b32.xlu0 %v3260, 32
    %v3263 = vpop.permute.xlu0 %3262
    %v3265 = vadd.f32 %v3255, %v3263
    %v3266 = vtanh.pop %v3265
    %3268 = vrot.lane.b32.xlu0 %v3266, 64
    %v3269 = vpop.permute.xlu0 %3268
    %v3271 = vmul.f32 %v3253, %v3269
    %s3272 = scalar_lea.vmem [#allocation4], 112
    %v3273 = vld [vmem:[%s3272] sm:$0xff]
    %3275 = vrot.lane.b32.xlu0 %v3271, 32
    %v3276 = vpop.permute.xlu0 %3275
    %v3277 = vsel %vm2562, %v3276, 0
    %3279 = vmatprep.subr.mxu0 0.0
    %3280 = vmatpush1.msra.mxu0 %v2558
    %3281 = vmatprep.subr.mxu0 0.0
    %3282 = vmatpush1.msra.mxu0 %v2559
    %3283 = vmatprep.subr.mxu0 0.0
    %3284 = vmatpush1.msra.mxu0 %v2560
    %3285 = vmatprep.subr.mxu0 0.0
    %3286 = vmatpush1.msra.mxu0 %v2561
    %3287 = vmatprep.subr.mxu0 0.0
    %3288 = vmatpush1.msra.mxu0 0.0
    %3289 = vmatprep.subr.mxu0 0.0
    %3290 = vmatpush1.msra.mxu0 0.0
    %3291 = vmatprep.subr.mxu0 0.0
    %3292 = vmatpush1.msra.mxu0 0.0
    %3293 = vmatprep.subr.mxu0 0.0
    %3294 = vmatpush1.msra.mxu0 0.0
    %3295 = vmatprep.subr.mxu0 0.0
    %3296 = vmatpush1.msra.mxu0 0.0
    %3297 = vmatprep.subr.mxu0 0.0
    %3298 = vmatpush1.msra.mxu0 0.0
    %3299 = vmatprep.subr.mxu0 0.0
    %3300 = vmatpush1.msra.mxu0 0.0
    %3301 = vmatprep.subr.mxu0 0.0
    %3302 = vmatpush1.msra.mxu0 0.0
    %3303 = vmatprep.subr.mxu0 0.0
    %3304 = vmatpush1.msra.mxu0 0.0
    %3305 = vmatprep.subr.mxu0 0.0
    %3306 = vmatpush1.msra.mxu0 0.0
    %3307 = vmatprep.subr.mxu0 0.0
    %3308 = vmatpush1.msra.mxu0 0.0
    %3309 = vmatprep.subr.mxu0 0.0
    %3310 = vmatpush1.msra.mxu0 0.0
    %3311 = vmatprep.subr.mxu0 0.0
    %3312 = vmatpush1.msra.mxu0 0.0
    %3313 = vmatprep.subr.mxu0 0.0
    %3314 = vmatpush1.msra.mxu0 0.0
    %3315 = vmatprep.subr.mxu0 0.0
    %3316 = vmatpush1.msra.mxu0 0.0
    %3317 = vmatprep.subr.mxu0 0.0
    %3318 = vmatpush1.msra.mxu0 0.0
    %3319 = vmatprep.subr.mxu0 0.0
    %3320 = vmatpush1.msra.mxu0 0.0
    %3321 = vmatprep.subr.mxu0 0.0
    %3322 = vmatpush1.msra.mxu0 0.0
    %3323 = vmatprep.subr.mxu0 0.0
    %3324 = vmatpush1.msra.mxu0 0.0
    %3325 = vmatprep.subr.mxu0 0.0
    %3326 = vmatpush1.msra.mxu0 0.0
    %3327 = vmatprep.subr.mxu0 0.0
    %3328 = vmatpush1.msra.mxu0 0.0
    %3329 = vmatprep.subr.mxu0 0.0
    %3330 = vmatpush1.msra.mxu0 0.0
    %3331 = vmatprep.subr.mxu0 0.0
    %3332 = vmatpush1.msra.mxu0 0.0
    %3333 = vmatprep.subr.mxu0 0.0
    %3334 = vmatpush1.msra.mxu0 0.0
    %3335 = vmatprep.subr.mxu0 0.0
    %3336 = vmatpush1.msra.mxu0 0.0
    %3337 = vmatprep.subr.mxu0 0.0
    %3338 = vmatpush1.msra.mxu0 0.0
    %3339 = vmatprep.subr.mxu0 0.0
    %3340 = vmatpush1.msra.mxu0 0.0
    %3341 = vmatprep.subr.mxu0 0.0
    %3342 = vmatpush1.msra.mxu0 0.0
    %3343 = vmatprep.mubr.f32.mxu0 0.0
    %3344 = vmatmul.mubr.f32.gmra.mrb[0].mxu0 %v3277
    %v3345 = vpop.f32.mrb[0].mxu0
    %v3346 = vadd.f32 0.0, %v3345
    %v3347 = vpop.f32.mrb[0].mxu0
    %3348 = vdwg.mxu0
    %v3349 = vadd.f32 %v3273, %v3346
    %v3350 = vxor.u32 %v3349, 2147483648
    %v3351 = vmul.f32 %v3350, 1.442695
    %v3352 = vpow.pop %v3351
    %v3353 = vadd.f32 %v3352, 1.0
    %v3354 = vrcp.pop %v3353
    %v3355 = vmul.f32 1.0, %v3354
    %v3356 = vtanh.pop %v3349
    %v3357 = vmul.f32 %v3355, %v3265
    %3359 = vrot.lane.b32.xlu0 %v3356, 64
    %v3360 = vpop.permute.xlu0 %3359
    %v3362 = vmul.f32 %v3355, %v3360
    %3364 = vrot.lane.b32.xlu0 %v3362, 32
    %v3365 = vpop.permute.xlu0 %3364
    %v3367 = vadd.f32 %v3357, %v3365
    %v3368 = vtanh.pop %v3367
    %3370 = vrot.lane.b32.xlu0 %v3368, 64
    %v3371 = vpop.permute.xlu0 %3370
    %v3373 = vmul.f32 %v3355, %v3371
    %v3374 = vld [vmem:[%s3272 + $0x8] sm:$0xff]
    %v3375 = vxor.u32 %v3374, 2147483648
    %v3376 = vmul.f32 %v3375, 1.442695
    %v3377 = vpow.pop %v3376
    %v3378 = vadd.f32 %v3377, 1.0
    %v3379 = vrcp.pop %v3378
    %v3380 = vmul.f32 1.0, %v3379
    %v3381 = vtanh.pop %v3374
    %v3382 = vmul.f32 %v3380, 0.0
    %3384 = vrot.lane.b32.xlu0 %v3381, 64
    %v3385 = vpop.permute.xlu0 %3384
    %v3387 = vmul.f32 %v3380, %v3385
    %3389 = vrot.lane.b32.xlu0 %v3387, 32
    %v3390 = vpop.permute.xlu0 %3389
    %v3392 = vadd.f32 %v3382, %v3390
    %v3393 = vtanh.pop %v3392
    %3395 = vrot.lane.b32.xlu0 %v3393, 64
    %v3396 = vpop.permute.xlu0 %3395
    %v3398 = vmul.f32 %v3380, %v3396
    %v3399 = vld [vmem:[#allocation15] sm:$0xff]
    %v3400 = vld [vmem:[#allocation15 + $0x8] sm:$0xff]
    %v3401 = vld [vmem:[#allocation15 + $0x10] sm:$0xff]
    %v3402 = vld [vmem:[#allocation15 + $0x18] sm:$0xff]
    %v3403 = vld [vmem:[#allocation15 + $0x20] sm:$0xff]
    %v3404 = vld [vmem:[#allocation15 + $0x28] sm:$0xff]
    %v3405 = vld [vmem:[#allocation15 + $0x30] sm:$0xff]
    %v3406 = vld [vmem:[#allocation15 + $0x38] sm:$0xff]
    %3408 = vrot.lane.b32.xlu0 %v3398, 32
    %v3409 = vpop.permute.xlu0 %3408
    %v3410 = vsel %vm2562, %v3409, 0
    %3412 = vmatprep.subr.mxu0 0.0
    %3413 = vmatpush1.msra.mxu0 %v3403
    %3414 = vmatprep.subr.mxu0 0.0
    %3415 = vmatpush1.msra.mxu0 %v3404
    %3416 = vmatprep.subr.mxu0 0.0
    %3417 = vmatpush1.msra.mxu0 %v3405
    %3418 = vmatprep.subr.mxu0 0.0
    %3419 = vmatpush1.msra.mxu0 %v3406
    %3420 = vmatprep.subr.mxu0 0.0
    %3421 = vmatpush1.msra.mxu0 0.0
    %3422 = vmatprep.subr.mxu0 0.0
    %3423 = vmatpush1.msra.mxu0 0.0
    %3424 = vmatprep.subr.mxu0 0.0
    %3425 = vmatpush1.msra.mxu0 0.0
    %3426 = vmatprep.subr.mxu0 0.0
    %3427 = vmatpush1.msra.mxu0 0.0
    %3428 = vmatprep.subr.mxu0 0.0
    %3429 = vmatpush1.msra.mxu0 0.0
    %3430 = vmatprep.subr.mxu0 0.0
    %3431 = vmatpush1.msra.mxu0 0.0
    %3432 = vmatprep.subr.mxu0 0.0
    %3433 = vmatpush1.msra.mxu0 0.0
    %3434 = vmatprep.subr.mxu0 0.0
    %3435 = vmatpush1.msra.mxu0 0.0
    %3436 = vmatprep.subr.mxu0 0.0
    %3437 = vmatpush1.msra.mxu0 0.0
    %3438 = vmatprep.subr.mxu0 0.0
    %3439 = vmatpush1.msra.mxu0 0.0
    %3440 = vmatprep.subr.mxu0 0.0
    %3441 = vmatpush1.msra.mxu0 0.0
    %3442 = vmatprep.subr.mxu0 0.0
    %3443 = vmatpush1.msra.mxu0 0.0
    %3444 = vmatprep.subr.mxu0 0.0
    %3445 = vmatpush1.msra.mxu0 0.0
    %3446 = vmatprep.subr.mxu0 0.0
    %3447 = vmatpush1.msra.mxu0 0.0
    %3448 = vmatprep.subr.mxu0 0.0
    %3449 = vmatpush1.msra.mxu0 0.0
    %3450 = vmatprep.subr.mxu0 0.0
    %3451 = vmatpush1.msra.mxu0 0.0
    %3452 = vmatprep.subr.mxu0 0.0
    %3453 = vmatpush1.msra.mxu0 0.0
    %3454 = vmatprep.subr.mxu0 0.0
    %3455 = vmatpush1.msra.mxu0 0.0
    %3456 = vmatprep.subr.mxu0 0.0
    %3457 = vmatpush1.msra.mxu0 0.0
    %3458 = vmatprep.subr.mxu0 0.0
    %3459 = vmatpush1.msra.mxu0 0.0
    %3460 = vmatprep.subr.mxu0 0.0
    %3461 = vmatpush1.msra.mxu0 0.0
    %3462 = vmatprep.subr.mxu0 0.0
    %3463 = vmatpush1.msra.mxu0 0.0
    %3464 = vmatprep.subr.mxu0 0.0
    %3465 = vmatpush1.msra.mxu0 0.0
    %3466 = vmatprep.subr.mxu0 0.0
    %3467 = vmatpush1.msra.mxu0 0.0
    %3468 = vmatprep.subr.mxu0 0.0
    %3469 = vmatpush1.msra.mxu0 0.0
    %3470 = vmatprep.subr.mxu0 0.0
    %3471 = vmatpush1.msra.mxu0 0.0
    %3472 = vmatprep.subr.mxu0 0.0
    %3473 = vmatpush1.msra.mxu0 0.0
    %3474 = vmatprep.subr.mxu0 0.0
    %3475 = vmatpush1.msra.mxu0 0.0
    %3476 = vmatprep.mubr.f32.mxu0 0.0
    %3477 = vmatmul.mubr.f32.gmra.mrb[0].mxu0 %v3410
    %v3478 = vpop.f32.mrb[0].mxu0
    %v3479 = vadd.f32 0.0, %v3478
    %v3480 = vpop.f32.mrb[0].mxu0
    %3481 = vdwg.mxu0
    %3483 = vrot.lane.b32.xlu0 %v3373, 32
    %v3484 = vpop.permute.xlu0 %3483
    %v3485 = vsel %vm2562, %v3484, 0
    %3487 = vmatprep.subr.mxu0 0.0
    %3488 = vmatpush1.msra.mxu0 %v3399
    %3489 = vmatprep.subr.mxu0 0.0
    %3490 = vmatpush1.msra.mxu0 %v3400
    %3491 = vmatprep.subr.mxu0 0.0
    %3492 = vmatpush1.msra.mxu0 %v3401
    %3493 = vmatprep.subr.mxu0 0.0
    %3494 = vmatpush1.msra.mxu0 %v3402
    %3495 = vmatprep.subr.mxu0 0.0
    %3496 = vmatpush1.msra.mxu0 0.0
    %3497 = vmatprep.subr.mxu0 0.0
    %3498 = vmatpush1.msra.mxu0 0.0
    %3499 = vmatprep.subr.mxu0 0.0
    %3500 = vmatpush1.msra.mxu0 0.0
    %3501 = vmatprep.subr.mxu0 0.0
    %3502 = vmatpush1.msra.mxu0 0.0
    %3503 = vmatprep.subr.mxu0 0.0
    %3504 = vmatpush1.msra.mxu0 0.0
    %3505 = vmatprep.subr.mxu0 0.0
    %3506 = vmatpush1.msra.mxu0 0.0
    %3507 = vmatprep.subr.mxu0 0.0
    %3508 = vmatpush1.msra.mxu0 0.0
    %3509 = vmatprep.subr.mxu0 0.0
    %3510 = vmatpush1.msra.mxu0 0.0
    %3511 = vmatprep.subr.mxu0 0.0
    %3512 = vmatpush1.msra.mxu0 0.0
    %3513 = vmatprep.subr.mxu0 0.0
    %3514 = vmatpush1.msra.mxu0 0.0
    %3515 = vmatprep.subr.mxu0 0.0
    %3516 = vmatpush1.msra.mxu0 0.0
    %3517 = vmatprep.subr.mxu0 0.0
    %3518 = vmatpush1.msra.mxu0 0.0
    %3519 = vmatprep.subr.mxu0 0.0
    %3520 = vmatpush1.msra.mxu0 0.0
    %3521 = vmatprep.subr.mxu0 0.0
    %3522 = vmatpush1.msra.mxu0 0.0
    %3523 = vmatprep.subr.mxu0 0.0
    %3524 = vmatpush1.msra.mxu0 0.0
    %3525 = vmatprep.subr.mxu0 0.0
    %3526 = vmatpush1.msra.mxu0 0.0
    %3527 = vmatprep.subr.mxu0 0.0
    %3528 = vmatpush1.msra.mxu0 0.0
    %3529 = vmatprep.subr.mxu0 0.0
    %3530 = vmatpush1.msra.mxu0 0.0
    %3531 = vmatprep.subr.mxu0 0.0
    %3532 = vmatpush1.msra.mxu0 0.0
    %3533 = vmatprep.subr.mxu0 0.0
    %3534 = vmatpush1.msra.mxu0 0.0
    %3535 = vmatprep.subr.mxu0 0.0
    %3536 = vmatpush1.msra.mxu0 0.0
    %3537 = vmatprep.subr.mxu0 0.0
    %3538 = vmatpush1.msra.mxu0 0.0
    %3539 = vmatprep.subr.mxu0 0.0
    %3540 = vmatpush1.msra.mxu0 0.0
    %3541 = vmatprep.subr.mxu0 0.0
    %3542 = vmatpush1.msra.mxu0 0.0
    %3543 = vmatprep.subr.mxu0 0.0
    %3544 = vmatpush1.msra.mxu0 0.0
    %3545 = vmatprep.subr.mxu0 0.0
    %3546 = vmatpush1.msra.mxu0 0.0
    %3547 = vmatprep.subr.mxu0 0.0
    %3548 = vmatpush1.msra.mxu0 0.0
    %3549 = vmatprep.subr.mxu0 0.0
    %3550 = vmatpush1.msra.mxu0 0.0
    %3551 = vmatprep.mubr.f32.mxu0 0.0
    %3552 = vmatmul.mubr.f32.gmra.mrb[0].mxu0 %v3485
    %v3553 = vpop.f32.mrb[0].mxu0
    %v3554 = vadd.f32 %v3479, %v3553
    %v3555 = vpop.f32.mrb[0].mxu0
    %3556 = vdwg.mxu0
    %v3557 = vld [vmem:[%s10] sm:$0x1]
    %v3559 = vlaneseq
    %v3560 = vshrl.u32 %v3559, 7
    %v3561 = vsub.s32 0, %v3560
    %v3562 = vrot.slane %v3557, %v3561
    %v3564 = vadd.f32 %v3554, %v3562
    %3565 = vst [vmem:[%s11] sm:$0xff] %v3564
    // Predicated region
    $region74: #{action_recognition_forward.1} parent=1 // pred_check
      _
    $region75: #{action_recognition_forward.1} parent=1 // pred_check_branch
      %3567 = sbr.rel (0) target = $region77
    $region76: #{action_recognition_forward.1} parent=1 // pred_region
      _
    $region77: #{action_recognition_forward.1} parent=1 // pred_fallthru
      _
    // Predicated region
    $region78: #{action_recognition_forward.1} parent=1 // pred_check
      _
    $region79: #{action_recognition_forward.1} parent=1 // pred_check_branch
      %3569 = sbr.rel (0) target = $region81
    $region80: #{action_recognition_forward.1} parent=1 // pred_region
      _
    $region81: #{action_recognition_forward.1} parent=1 // pred_fallthru
      _
    %3570 = vsyncpa [#allocation6], 1
    %3571 = vsyncpa [#allocation8], 1
    %3572 = vsyncpa [#allocation11], 1
    %3573 = vsyncpa [#allocation14], 1

</llo_original>
